<compile_context>
chip_gen: v7x
topology: tpu7x:2x2x1
jax: 0.10.0
libtpu: 0.0.40
codegen_flags: <defaults>
</compile_context>

<pallas_src>
import functools
import math

import jax
import jax.numpy as jnp
from jax.experimental import pallas as pl
from jax.experimental.pallas import tpu as pltpu

MESH_RADIUS = 1.5


def _rendernet_g_kernel(pff_ref, crd_ref, vd_ref, rr_ref,
                        w1p_ref, w1c_ref, w1v_ref, w1r_ref,
                        w23_ref, b123_ref, wd_ref, bd_ref, wn_ref, bn_ref,
                        d_ref, n_ref, *, d_length):
    f32 = jnp.float32

    # conv_z_1 split by input stream: sum of per-stream matmuls == conv over the
    # concatenated channels.  coords scaling (1/mesh_radius) is folded into w1c.
    acc = jnp.dot(w1p_ref[...], pff_ref[0], preferred_element_type=f32)
    acc = acc + jnp.dot(w1c_ref[...], crd_ref[0], preferred_element_type=f32)
    acc = acc + jnp.dot(w1v_ref[...], vd_ref[0], preferred_element_type=f32)
    # K=1 relative-resolution contribution: rank-1 outer product on the VPU
    # (cheaper than a degenerate K=1 MXU matmul).
    acc = acc + w1r_ref[...].astype(f32) * rr_ref[0].astype(f32)

    h = jnp.sin(acc + b123_ref[0])
    h = jnp.sin(jnp.dot(w23_ref[0], h, preferred_element_type=f32) + b123_ref[1])
    h = jnp.sin(jnp.dot(w23_ref[1], h, preferred_element_type=f32) + b123_ref[2])

    # heads: both outputs are lane-dense (last dim = TM)
    d_ref[0] = d_length * jnp.sin(
        jnp.dot(wd_ref[...], h, preferred_element_type=f32) + bd_ref[...])
    n_ref[0] = 0.5 * jnp.sin(
        jnp.dot(wn_ref[...], h, preferred_element_type=f32) + bn_ref[...])


def make_params(key, z_length_d, dl, use_relative_resolution=True):
    """Synthetic weights matching the PyTorch init stds.

    Conv3d 1x1x1 weights stored as (Cout, Cin) matrices, biases as (Cout,)."""
    cin = z_length_d + 2 * 3 + (1 if use_relative_resolution else 0)
    std = math.sqrt(6.0 / dl)
    ks = jax.random.split(key, 10)

    def nrm(k, shape, s):
        return (s * jax.random.normal(k, shape)).astype(jnp.float32)

    return dict(
        w1=nrm(ks[0], (dl, cin), std), b1=nrm(ks[1], (dl,), std),
        w2=nrm(ks[2], (dl, dl), std),  b2=nrm(ks[3], (dl,), std),
        w3=nrm(ks[4], (dl, dl), std),  b3=nrm(ks[5], (dl,), std),
        w4=nrm(ks[6], (1, dl), 0.001), b4=nrm(ks[7], (1,), 0.001),
        wn=nrm(ks[8], (3, dl), 0.001), bn=nrm(ks[9], (3,), 0.001),
    )


def rendernet_g_forward(params, pixel_face_features, coords, view_direction,
                        relative_resolution, *, d_length,
                        mesh_radius=MESH_RADIUS, tm_max=2048):
    p = params
    N, Cz, Dd, H, W = pixel_face_features.shape
    dl = p["w2"].shape[0]
    S = Dd * H * W

    # Spatial tile: multiple of 128 (dense stores), as large as tm_max allows.
    tm_max = max(128, (int(tm_max) // 128) * 128)
    s128 = pl.cdiv(S, 128) * 128
    tm = min(tm_max, s128)
    grid_s = pl.cdiv(s128, tm)
    s_pad = grid_s * tm          # padded spatial extent covered by the grid

    def prep(x):
        # (N, C, D, H, W) -> (N, C, S_pad) in bf16; reshape is a free view,
        # no channel concat and no NCDHW->NDHWC transpose ever touches HBM.
        x = x.reshape(N, x.shape[1], S)
        if s_pad != S:
            x = jnp.pad(x, ((0, 0), (0, 0), (0, s_pad - S)))
        return x.astype(jnp.bfloat16)

    x_pff = prep(pixel_face_features)
    x_crd = prep(coords)
    x_vd = prep(view_direction)
    x_rr = prep(relative_resolution)

    # conv_z_1 weight split by input stream (bf16), coords scale folded in.
    w1 = p["w1"]
    w1p = w1[:, :Cz].astype(jnp.bfloat16)
    w1c = (w1[:, Cz:Cz + 3] / mesh_radius).astype(jnp.bfloat16)
    w1v = w1[:, Cz + 3:Cz + 6].astype(jnp.bfloat16)
    w1r = w1[:, Cz + 6:Cz + 7].astype(jnp.bfloat16)
    # consolidated f32 weights / biases
    w23 = jnp.stack([p["w2"], p["w3"]]).astype(jnp.float32)            # (2, dl, dl)
    b123 = jnp.stack([p["b1"], p["b2"], p["b3"]])[:, :, None]          # (3, dl, 1)
    wd = p["w4"].astype(jnp.float32)                                   # (1, dl)
    bd = p["b4"][:, None].astype(jnp.float32)                          # (1, 1)
    wn = p["wn"].astype(jnp.float32)                                   # (3, dl)
    bn = p["bn"][:, None].astype(jnp.float32)                          # (3, 1)
    weights = (w1p, w1c, w1v, w1r, w23, b123, wd, bd, wn, bn)

    row = lambda c: pl.BlockSpec((1, c, tm), lambda b, i: (b, 0, i))
    full = lambda a: pl.BlockSpec(a.shape, lambda b, i, _nd=a.ndim: (0,) * _nd)

    in_specs = [row(Cz), row(3), row(3), row(1)] + [full(a) for a in weights]
    out_shape = (jax.ShapeDtypeStruct((N, 1, s_pad), jnp.float32),
                 jax.ShapeDtypeStruct((N, 3, s_pad), jnp.float32))
    out_specs = (row(1), row(3))

    kernel = functools.partial(_rendernet_g_kernel, d_length=float(d_length))
    d_flat, n_flat = pl.pallas_call(
        kernel,
        grid=(N, grid_s),
        in_specs=in_specs,
        out_specs=out_specs,
        out_shape=out_shape,
        compiler_params=pltpu.CompilerParams(
            dimension_semantics=("parallel", "parallel")),
    )(x_pff, x_crd, x_vd, x_rr, *weights)

    d_out = d_flat[:, :, :S].reshape(N, 1, Dd, H, W)
    n_out = n_flat[:, :, :S].reshape(N, 3, Dd, H, W)
    # forward() returns D; n is stored on the module (self.n) — returned here too.
    return d_out, n_out


def reference_forward(params, pff, coords, view, rr, d_length,
                      mesh_radius=MESH_RADIUS):
    """Pure-JAX f32 reference matching the PyTorch forward semantics."""
    p = params
    z = jnp.concatenate([pff, coords / mesh_radius, view, rr], axis=1)

    def conv1(x, w, b):  # w: (Cout, Cin), b: (Cout,)
        return (jnp.einsum('ncdhw,oc->nodhw', x, w)
                + b[None, :, None, None, None])

    h = jnp.sin(conv1(z, p["w1"], p["b1"]))
    h = jnp.sin(conv1(h, p["w2"], p["b2"]))
    h = jnp.sin(conv1(h, p["w3"], p["b3"]))
    d = d_length * jnp.sin(conv1(h, p["w4"], p["b4"]))
    n = 0.5 * jnp.sin(conv1(h, p["wn"], p["bn"]))
    return d, n


if __name__ == "__main__":
    key = jax.random.PRNGKey(0)
    N, Dd, H, W = 2, 4, 8, 16
    z_length_d, descriptor_length = 12, 32
    d_length = 2.0

    ks = jax.random.split(key, 5)
    pff = jax.random.normal(ks[0], (N, z_length_d, Dd, H, W), jnp.float32)
    coords = jax.random.normal(ks[1], (N, 3, Dd, H, W), jnp.float32)
    view = jax.random.normal(ks[2], (N, 3, Dd, H, W), jnp.float32)
    rr = jax.random.normal(ks[3], (N, 1, Dd, H, W), jnp.float32)
    params = make_params(ks[4], z_length_d, descriptor_length)

    # small tile here so the demo exercises a multi-step (2,2) grid
    d_out, n_out = rendernet_g_forward(params, pff, coords, view, rr,
                                       d_length=d_length, tm_max=256)
    jax.block_until_ready((d_out, n_out))
    d_ref, n_ref = reference_forward(params, pff, coords, view, rr, d_length)

    assert d_out.shape == (N, 1, Dd, H, W)
    assert n_out.shape == (N, 3, Dd, H, W)
    assert jnp.allclose(d_out, d_ref, atol=2e-2, rtol=2e-2)
    assert jnp.allclose(n_out, n_ref, atol=2e-2, rtol=2e-2)

    # ragged spatial extent (S = 4*7*16 = 448) exercises the padding path
    H2 = 7
    pff2 = jax.random.normal(ks[0], (N, z_length_d, Dd, H2, W), jnp.float32)
    coords2 = jax.random.normal(ks[1], (N, 3, Dd, H2, W), jnp.float32)
    view2 = jax.random.normal(ks[2], (N, 3, Dd, H2, W), jnp.float32)
    rr2 = jax.random.normal(ks[3], (N, 1, Dd, H2, W), jnp.float32)
    d2, n2 = rendernet_g_forward(params, pff2, coords2, view2, rr2,
                                 d_length=d_length, tm_max=256)
    jax.block_until_ready((d2, n2))
    d2_ref, n2_ref = reference_forward(params, pff2, coords2, view2, rr2, d_length)
    assert d2.shape == (N, 1, Dd, H2, W)
    assert n2.shape == (N, 3, Dd, H2, W)
    assert jnp.allclose(d2, d2_ref, atol=2e-2, rtol=2e-2)
    assert jnp.allclose(n2, n2_ref, atol=2e-2, rtol=2e-2)

    print("KERNEL_OK")
</pallas_src>

<mosaic_0001>
module attributes {stable_mosaic.version = 11 : i64} {
  func.func @_rendernet_g_kernel(%arg0: i32, %arg1: i32, %arg2: memref<1x12x256xbf16, #tpu.memory_space<vmem>>, %arg3: memref<1x3x256xbf16, #tpu.memory_space<vmem>>, %arg4: memref<1x3x256xbf16, #tpu.memory_space<vmem>>, %arg5: memref<1x1x256xbf16, #tpu.memory_space<vmem>>, %arg6: memref<32x12xbf16, #tpu.memory_space<vmem>>, %arg7: memref<32x3xbf16, #tpu.memory_space<vmem>>, %arg8: memref<32x3xbf16, #tpu.memory_space<vmem>>, %arg9: memref<32x1xbf16, #tpu.memory_space<vmem>>, %arg10: memref<2x32x32xf32, #tpu.memory_space<vmem>>, %arg11: memref<3x32x1xf32, #tpu.memory_space<vmem>>, %arg12: memref<1x32xf32, #tpu.memory_space<vmem>>, %arg13: memref<1x1xf32, #tpu.memory_space<vmem>>, %arg14: memref<3x32xf32, #tpu.memory_space<vmem>>, %arg15: memref<3x1xf32, #tpu.memory_space<vmem>>, %arg16: memref<1x1x256xf32, #tpu.memory_space<vmem>>, %arg17: memref<1x3x256xf32, #tpu.memory_space<vmem>>) attributes {dimension_semantics = [#tpu.dimension_semantics<parallel>, #tpu.dimension_semantics<parallel>], iteration_bounds = array<i64: 2, 2>, scalar_prefetch = 0 : i64, scratch_operands = 0 : i64, tpu.core_type = #tpu.core_type<tc>, window_params = [{transform_indices = @transform_0, window_bounds = array<i64: 1, 12, 256>}, {transform_indices = @transform_1, window_bounds = array<i64: 1, 3, 256>}, {transform_indices = @transform_2, window_bounds = array<i64: 1, 3, 256>}, {transform_indices = @transform_3, window_bounds = array<i64: 1, 1, 256>}, {pipeline_mode = #tpu.pipeline_mode<synchronous>, transform_indices = @transform_4, window_bounds = array<i64: 32, 12>}, {pipeline_mode = #tpu.pipeline_mode<synchronous>, transform_indices = @transform_5, window_bounds = array<i64: 32, 3>}, {pipeline_mode = #tpu.pipeline_mode<synchronous>, transform_indices = @transform_6, window_bounds = array<i64: 32, 3>}, {pipeline_mode = #tpu.pipeline_mode<synchronous>, transform_indices = @transform_7, window_bounds = array<i64: 32, 1>}, {pipeline_mode = #tpu.pipeline_mode<synchronous>, transform_indices = @transform_8, window_bounds = array<i64: 2, 32, 32>}, {pipeline_mode = #tpu.pipeline_mode<synchronous>, transform_indices = @transform_9, window_bounds = array<i64: 3, 32, 1>}, {pipeline_mode = #tpu.pipeline_mode<synchronous>, transform_indices = @transform_10, window_bounds = array<i64: 1, 32>}, {pipeline_mode = #tpu.pipeline_mode<synchronous>, transform_indices = @transform_11, window_bounds = array<i64: 1, 1>}, {pipeline_mode = #tpu.pipeline_mode<synchronous>, transform_indices = @transform_12, window_bounds = array<i64: 3, 32>}, {pipeline_mode = #tpu.pipeline_mode<synchronous>, transform_indices = @transform_13, window_bounds = array<i64: 3, 1>}, {transform_indices = @transform_14, window_bounds = array<i64: 1, 1, 256>}, {transform_indices = @transform_15, window_bounds = array<i64: 1, 3, 256>}]} {
    %c0 = arith.constant 0 : index
    %c0_0 = arith.constant 0 : index
    %0 = vector.load %arg6[%c0, %c0_0] : memref<32x12xbf16, #tpu.memory_space<vmem>>, vector<32x12xbf16>
    %c0_1 = arith.constant 0 : index
    %c0_2 = arith.constant 0 : index
    %c0_3 = arith.constant 0 : index
    %1 = vector.load %arg2[%c0_1, %c0_2, %c0_3] : memref<1x12x256xbf16, #tpu.memory_space<vmem>>, vector<1x12x256xbf16>
    %2 = vector.shape_cast %1 : vector<1x12x256xbf16> to vector<12x256xbf16>
    %cst = arith.constant dense<0.000000e+00> : vector<32x256xf32>
    %3 = tpu.matmul %0, %2, %cst {dimension_numbers = #tpu.dot_dimension_numbers<[1], [0], [0], [1], [0, 0, 1, 1], [], []>} : vector<32x12xbf16>, vector<12x256xbf16>, vector<32x256xf32> -> vector<32x256xf32>
    %c0_4 = arith.constant 0 : index
    %c0_5 = arith.constant 0 : index
    %4 = vector.load %arg7[%c0_4, %c0_5] : memref<32x3xbf16, #tpu.memory_space<vmem>>, vector<32x3xbf16>
    %c0_6 = arith.constant 0 : index
    %c0_7 = arith.constant 0 : index
    %c0_8 = arith.constant 0 : index
    %5 = vector.load %arg3[%c0_6, %c0_7, %c0_8] : memref<1x3x256xbf16, #tpu.memory_space<vmem>>, vector<1x3x256xbf16>
    %6 = vector.shape_cast %5 : vector<1x3x256xbf16> to vector<3x256xbf16>
    %cst_9 = arith.constant dense<0.000000e+00> : vector<32x256xf32>
    %7 = tpu.matmul %4, %6, %cst_9 {dimension_numbers = #tpu.dot_dimension_numbers<[1], [0], [0], [1], [0, 0, 1, 1], [], []>} : vector<32x3xbf16>, vector<3x256xbf16>, vector<32x256xf32> -> vector<32x256xf32>
    %8 = arith.addf %3, %7 : vector<32x256xf32>
    %c0_10 = arith.constant 0 : index
    %c0_11 = arith.constant 0 : index
    %9 = vector.load %arg8[%c0_10, %c0_11] : memref<32x3xbf16, #tpu.memory_space<vmem>>, vector<32x3xbf16>
    %c0_12 = arith.constant 0 : index
    %c0_13 = arith.constant 0 : index
    %c0_14 = arith.constant 0 : index
    %10 = vector.load %arg4[%c0_12, %c0_13, %c0_14] : memref<1x3x256xbf16, #tpu.memory_space<vmem>>, vector<1x3x256xbf16>
    %11 = vector.shape_cast %10 : vector<1x3x256xbf16> to vector<3x256xbf16>
    %cst_15 = arith.constant dense<0.000000e+00> : vector<32x256xf32>
    %12 = tpu.matmul %9, %11, %cst_15 {dimension_numbers = #tpu.dot_dimension_numbers<[1], [0], [0], [1], [0, 0, 1, 1], [], []>} : vector<32x3xbf16>, vector<3x256xbf16>, vector<32x256xf32> -> vector<32x256xf32>
    %13 = arith.addf %8, %12 : vector<32x256xf32>
    %c0_16 = arith.constant 0 : index
    %c0_17 = arith.constant 0 : index
    %14 = vector.load %arg9[%c0_16, %c0_17] : memref<32x1xbf16, #tpu.memory_space<vmem>>, vector<32x1xbf16>
    %15 = arith.extf %14 : vector<32x1xbf16> to vector<32x1xf32>
    %c0_18 = arith.constant 0 : index
    %c0_19 = arith.constant 0 : index
    %c0_20 = arith.constant 0 : index
    %16 = vector.load %arg5[%c0_18, %c0_19, %c0_20] : memref<1x1x256xbf16, #tpu.memory_space<vmem>>, vector<1x1x256xbf16>
    %17 = vector.shape_cast %16 : vector<1x1x256xbf16> to vector<1x256xbf16>
    %18 = arith.extf %17 : vector<1x256xbf16> to vector<1x256xf32>
    %19 = vector.broadcast %15 : vector<32x1xf32> to vector<32x256xf32>
    %20 = vector.broadcast %18 : vector<1x256xf32> to vector<32x256xf32>
    %21 = arith.mulf %19, %20 : vector<32x256xf32>
    %22 = arith.addf %13, %21 : vector<32x256xf32>
    %c0_21 = arith.constant 0 : index
    %c0_22 = arith.constant 0 : index
    %c0_23 = arith.constant 0 : index
    %23 = vector.load %arg11[%c0_21, %c0_22, %c0_23] : memref<3x32x1xf32, #tpu.memory_space<vmem>>, vector<1x32x1xf32>
    %24 = vector.shape_cast %23 : vector<1x32x1xf32> to vector<32x1xf32>
    %25 = vector.broadcast %24 : vector<32x1xf32> to vector<32x256xf32>
    %26 = arith.addf %22, %25 : vector<32x256xf32>
    %27 = math.sin %26 : vector<32x256xf32>
    %c0_24 = arith.constant 0 : index
    %c0_25 = arith.constant 0 : index
    %c0_26 = arith.constant 0 : index
    %28 = vector.load %arg10[%c0_24, %c0_25, %c0_26] : memref<2x32x32xf32, #tpu.memory_space<vmem>>, vector<1x32x32xf32>
    %29 = vector.shape_cast %28 : vector<1x32x32xf32> to vector<32x32xf32>
    %cst_27 = arith.constant dense<0.000000e+00> : vector<32x256xf32>
    %30 = tpu.matmul %29, %27, %cst_27 {dimension_numbers = #tpu.dot_dimension_numbers<[1], [0], [0], [1], [0, 0, 1, 1], [], []>} : vector<32x32xf32>, vector<32x256xf32>, vector<32x256xf32> -> vector<32x256xf32>
    %c1 = arith.constant 1 : index
    %c0_28 = arith.constant 0 : index
    %c0_29 = arith.constant 0 : index
    %31 = vector.load %arg11[%c1, %c0_28, %c0_29] : memref<3x32x1xf32, #tpu.memory_space<vmem>>, vector<1x32x1xf32>
    %32 = vector.shape_cast %31 : vector<1x32x1xf32> to vector<32x1xf32>
    %33 = vector.broadcast %32 : vector<32x1xf32> to vector<32x256xf32>
    %34 = arith.addf %30, %33 : vector<32x256xf32>
    %35 = math.sin %34 : vector<32x256xf32>
    %c1_30 = arith.constant 1 : index
    %c0_31 = arith.constant 0 : index
    %c0_32 = arith.constant 0 : index
    %36 = vector.load %arg10[%c1_30, %c0_31, %c0_32] : memref<2x32x32xf32, #tpu.memory_space<vmem>>, vector<1x32x32xf32>
    %37 = vector.shape_cast %36 : vector<1x32x32xf32> to vector<32x32xf32>
    %cst_33 = arith.constant dense<0.000000e+00> : vector<32x256xf32>
    %38 = tpu.matmul %37, %35, %cst_33 {dimension_numbers = #tpu.dot_dimension_numbers<[1], [0], [0], [1], [0, 0, 1, 1], [], []>} : vector<32x32xf32>, vector<32x256xf32>, vector<32x256xf32> -> vector<32x256xf32>
    %c2 = arith.constant 2 : index
    %c0_34 = arith.constant 0 : index
    %c0_35 = arith.constant 0 : index
    %39 = vector.load %arg11[%c2, %c0_34, %c0_35] : memref<3x32x1xf32, #tpu.memory_space<vmem>>, vector<1x32x1xf32>
    %40 = vector.shape_cast %39 : vector<1x32x1xf32> to vector<32x1xf32>
    %41 = vector.broadcast %40 : vector<32x1xf32> to vector<32x256xf32>
    %42 = arith.addf %38, %41 : vector<32x256xf32>
    %43 = math.sin %42 : vector<32x256xf32>
    %c0_36 = arith.constant 0 : index
    %c0_37 = arith.constant 0 : index
    %44 = vector.load %arg12[%c0_36, %c0_37] : memref<1x32xf32, #tpu.memory_space<vmem>>, vector<1x32xf32>
    %cst_38 = arith.constant dense<0.000000e+00> : vector<1x256xf32>
    %45 = tpu.matmul %44, %43, %cst_38 {dimension_numbers = #tpu.dot_dimension_numbers<[1], [0], [0], [1], [0, 0, 1, 1], [], []>} : vector<1x32xf32>, vector<32x256xf32>, vector<1x256xf32> -> vector<1x256xf32>
    %c0_39 = arith.constant 0 : index
    %c0_40 = arith.constant 0 : index
    %46 = vector.load %arg13[%c0_39, %c0_40] : memref<1x1xf32, #tpu.memory_space<vmem>>, vector<1x1xf32>
    %47 = vector.broadcast %46 : vector<1x1xf32> to vector<1x256xf32>
    %48 = arith.addf %45, %47 : vector<1x256xf32>
    %49 = math.sin %48 : vector<1x256xf32>
    %cst_41 = arith.constant 2.000000e+00 : f32
    %50 = vector.broadcast %cst_41 : f32 to vector<1x256xf32>
    %51 = arith.mulf %50, %49 : vector<1x256xf32>
    %c0_42 = arith.constant 0 : index
    %c0_43 = arith.constant 0 : index
    %c0_44 = arith.constant 0 : index
    %52 = vector.load %arg16[%c0_42, %c0_43, %c0_44] : memref<1x1x256xf32, #tpu.memory_space<vmem>>, vector<1x1x256xf32>
    %53 = vector.shape_cast %52 : vector<1x1x256xf32> to vector<1x256xf32>
    %54 = vector.shape_cast %51 : vector<1x256xf32> to vector<1x1x256xf32>
    tpu.vector_store %arg16[%c0_42, %c0_43, %c0_44], %54 {strides = array<i32>} : memref<1x1x256xf32, #tpu.memory_space<vmem>>, vector<1x1x256xf32>,
    %c0_45 = arith.constant 0 : index
    %c0_46 = arith.constant 0 : index
    %55 = vector.load %arg14[%c0_45, %c0_46] : memref<3x32xf32, #tpu.memory_space<vmem>>, vector<3x32xf32>
    %cst_47 = arith.constant dense<0.000000e+00> : vector<3x256xf32>
    %56 = tpu.matmul %55, %43, %cst_47 {dimension_numbers = #tpu.dot_dimension_numbers<[1], [0], [0], [1], [0, 0, 1, 1], [], []>} : vector<3x32xf32>, vector<32x256xf32>, vector<3x256xf32> -> vector<3x256xf32>
    %c0_48 = arith.constant 0 : index
    %c0_49 = arith.constant 0 : index
    %57 = vector.load %arg15[%c0_48, %c0_49] : memref<3x1xf32, #tpu.memory_space<vmem>>, vector<3x1xf32>
    %58 = vector.broadcast %57 : vector<3x1xf32> to vector<3x256xf32>
    %59 = arith.addf %56, %58 : vector<3x256xf32>
    %60 = math.sin %59 : vector<3x256xf32>
    %cst_50 = arith.constant 5.000000e-01 : f32
    %61 = vector.broadcast %cst_50 : f32 to vector<3x256xf32>
    %62 = arith.mulf %61, %60 : vector<3x256xf32>
    %c0_51 = arith.constant 0 : index
    %c0_52 = arith.constant 0 : index
    %c0_53 = arith.constant 0 : index
    %63 = vector.load %arg17[%c0_51, %c0_52, %c0_53] : memref<1x3x256xf32, #tpu.memory_space<vmem>>, vector<1x3x256xf32>
    %64 = vector.shape_cast %63 : vector<1x3x256xf32> to vector<3x256xf32>
    %65 = vector.shape_cast %62 : vector<3x256xf32> to vector<1x3x256xf32>
    tpu.vector_store %arg17[%c0_51, %c0_52, %c0_53], %65 {strides = array<i32>} : memref<1x3x256xf32, #tpu.memory_space<vmem>>, vector<1x3x256xf32>,
    return
  }
  func.func @transform_0(%arg0: i32, %arg1: i32) -> (i32, i32, i32) {
    %c0_i32 = arith.constant 0 : i32
    %c0_i32_0 = arith.constant 0 : i32
    return %arg0, %c0_i32, %arg1 : i32, i32, i32
  }
  func.func @transform_1(%arg0: i32, %arg1: i32) -> (i32, i32, i32) {
    %c0_i32 = arith.constant 0 : i32
    %c0_i32_0 = arith.constant 0 : i32
    return %arg0, %c0_i32, %arg1 : i32, i32, i32
  }
  func.func @transform_2(%arg0: i32, %arg1: i32) -> (i32, i32, i32) {
    %c0_i32 = arith.constant 0 : i32
    %c0_i32_0 = arith.constant 0 : i32
    return %arg0, %c0_i32, %arg1 : i32, i32, i32
  }
  func.func @transform_3(%arg0: i32, %arg1: i32) -> (i32, i32, i32) {
    %c0_i32 = arith.constant 0 : i32
    %c0_i32_0 = arith.constant 0 : i32
    return %arg0, %c0_i32, %arg1 : i32, i32, i32
  }
  func.func @transform_4(%arg0: i32, %arg1: i32) -> (i32, i32) {
    %c0_i32 = arith.constant 0 : i32
    %c0_i32_0 = arith.constant 0 : i32
    %c0_i32_1 = arith.constant 0 : i32
    return %c0_i32, %c0_i32_0 : i32, i32
  }
  func.func @transform_5(%arg0: i32, %arg1: i32) -> (i32, i32) {
    %c0_i32 = arith.constant 0 : i32
    %c0_i32_0 = arith.constant 0 : i32
    %c0_i32_1 = arith.constant 0 : i32
    return %c0_i32, %c0_i32_0 : i32, i32
  }
  func.func @transform_6(%arg0: i32, %arg1: i32) -> (i32, i32) {
    %c0_i32 = arith.constant 0 : i32
    %c0_i32_0 = arith.constant 0 : i32
    %c0_i32_1 = arith.constant 0 : i32
    return %c0_i32, %c0_i32_0 : i32, i32
  }
  func.func @transform_7(%arg0: i32, %arg1: i32) -> (i32, i32) {
    %c0_i32 = arith.constant 0 : i32
    %c0_i32_0 = arith.constant 0 : i32
    %c0_i32_1 = arith.constant 0 : i32
    return %c0_i32, %c0_i32_0 : i32, i32
  }
  func.func @transform_8(%arg0: i32, %arg1: i32) -> (i32, i32, i32) {
    %c0_i32 = arith.constant 0 : i32
    %c0_i32_0 = arith.constant 0 : i32
    %c0_i32_1 = arith.constant 0 : i32
    %c0_i32_2 = arith.constant 0 : i32
    return %c0_i32, %c0_i32_0, %c0_i32_1 : i32, i32, i32
  }
  func.func @transform_9(%arg0: i32, %arg1: i32) -> (i32, i32, i32) {
    %c0_i32 = arith.constant 0 : i32
    %c0_i32_0 = arith.constant 0 : i32
    %c0_i32_1 = arith.constant 0 : i32
    %c0_i32_2 = arith.constant 0 : i32
    return %c0_i32, %c0_i32_0, %c0_i32_1 : i32, i32, i32
  }
  func.func @transform_10(%arg0: i32, %arg1: i32) -> (i32, i32) {
    %c0_i32 = arith.constant 0 : i32
    %c0_i32_0 = arith.constant 0 : i32
    %c0_i32_1 = arith.constant 0 : i32
    return %c0_i32, %c0_i32_0 : i32, i32
  }
  func.func @transform_11(%arg0: i32, %arg1: i32) -> (i32, i32) {
    %c0_i32 = arith.constant 0 : i32
    %c0_i32_0 = arith.constant 0 : i32
    %c0_i32_1 = arith.constant 0 : i32
    return %c0_i32, %c0_i32_0 : i32, i32
  }
  func.func @transform_12(%arg0: i32, %arg1: i32) -> (i32, i32) {
    %c0_i32 = arith.constant 0 : i32
    %c0_i32_0 = arith.constant 0 : i32
    %c0_i32_1 = arith.constant 0 : i32
    return %c0_i32, %c0_i32_0 : i32, i32
  }
  func.func @transform_13(%arg0: i32, %arg1: i32) -> (i32, i32) {
    %c0_i32 = arith.constant 0 : i32
    %c0_i32_0 = arith.constant 0 : i32
    %c0_i32_1 = arith.constant 0 : i32
    return %c0_i32, %c0_i32_0 : i32, i32
  }
  func.func @transform_14(%arg0: i32, %arg1: i32) -> (i32, i32, i32) {
    %c0_i32 = arith.constant 0 : i32
    %c0_i32_0 = arith.constant 0 : i32
    return %arg0, %c0_i32, %arg1 : i32, i32, i32
  }
  func.func @transform_15(%arg0: i32, %arg1: i32) -> (i32, i32, i32) {
    %c0_i32 = arith.constant 0 : i32
    %c0_i32_0 = arith.constant 0 : i32
    return %arg0, %c0_i32, %arg1 : i32, i32, i32
  }
}

</mosaic_0001>

<llo_original>
// kernel: tpu_custom_call.1
$region0: #{tpu_custom_call.1}
  #allocation0 [shape = 'u32[]', space=smem, size = 0x4, offset = 0x4, fixed_abs, tag = 'smem constant byte address 0x4 - core index']
  #allocation1 [shape = 'u32[144,128]{1,0:T(1,128)}', space=vmem, size = 0x12000, scoped, tag = 'internal scratch']
  #allocation2 [shape = 'f32[1,1]{1,0:T(1,128)S(1)}', space=vmem, size = 0x200, scoped, tag = 'scoped memory for tpu_custom_call.1']
  %s0 = inlined_call_operand.vmem [shape: bf16[2,12,512], index: 0, kind: input, shape index: {}]
  %s1 = inlined_call_operand.vmem [shape: bf16[2,3,512], index: 1, kind: input, shape index: {}]
  %s2 = inlined_call_operand.vmem [shape: bf16[2,3,512], index: 2, kind: input, shape index: {}]
  %s3 = inlined_call_operand.vmem [shape: bf16[2,1,512], index: 3, kind: input, shape index: {}]
  %s4 = inlined_call_operand.vmem [shape: bf16[32,12], index: 4, kind: input, shape index: {}]
  %s5 = inlined_call_operand.vmem [shape: bf16[32,3], index: 5, kind: input, shape index: {}]
  %s6 = inlined_call_operand.vmem [shape: bf16[32,3], index: 6, kind: input, shape index: {}]
  %s7 = inlined_call_operand.vmem [shape: bf16[32,1], index: 7, kind: input, shape index: {}]
  %s8 = inlined_call_operand.vmem [shape: f32[2,32,32], index: 8, kind: input, shape index: {}]
  %s9 = inlined_call_operand.vmem [shape: f32[3,32,1], index: 9, kind: input, shape index: {}]
  %s10 = inlined_call_operand.vmem [shape: f32[1,32], index: 10, kind: input, shape index: {}]
  %s11 = inlined_call_operand.<no memory space> [shape: f32[1,1], index: 11, kind: input, shape index: {}]
  %s12 = inlined_call_operand.vmem [shape: f32[3,32], index: 12, kind: input, shape index: {}]
  %s13 = inlined_call_operand.vmem [shape: f32[3,1], index: 13, kind: input, shape index: {}]
  %s14 = inlined_call_operand.hbm [shape: f32[2,1,512], index: 14, kind: output, shape index: {0}]
  %s15 = inlined_call_operand.vmem [shape: f32[2,3,512], index: 15, kind: output, shape index: {1}]
  %16 = xla_tuple %s14, %s15
  %s17 = sld [smem:[#allocation0]]
  $region135: #{tpu_custom_call.1} parent=0
    _
  %s19 = ssub.s32 1, %s17
  %s20 = scalar_select 0, %s19, %s17
  %v21 = vstv %s11
  %22 = vst [vmem:[#allocation2] sm:$0x1] %v21
  $region1: #{tpu_custom_call.1} parent=0
    #allocation3 [shape = 'u8[16384]{0}', space=vmem, size = 0x4000, scoped, tag = 'input window, operand 0']
    #allocation4 [shape = 'u8[2048]{0}', space=vmem, size = 0x800, scoped, tag = 'output window, operand 0']
    #allocation5 [shape = 's32[2]{0}', space=sflag, size = 0x8, scoped, tag = 'scoped memory for tpu_custom_call.1']
    %23 = vsyncpa [#allocation5], 0
    %s24 = scalar_lea.sflag [#allocation5], 1
    %25 = vsyncpa %s24, 0
    loop: start=0, step=1, limit=6
    $region2: #{tpu_custom_call.1} parent=1 // loop_pre_header
      _
    $region3: #{tpu_custom_call.1} parent=1 // loop_header
      %s27 = sphi 0, %s31
      %p28 = scmp.ge.s32.totalorder %s27, 6
      %s34 = sphi 0, %s46
      %s35 = sphi 0, %s42
      %s36 = sphi 0, %s34
      %s37 = sphi 0, %s35
      %s38 = sphi 0, %s36
      %s39 = sphi 0, %s37
      %s51 = sphi 0, %s53
      %s54 = sphi 0, %s51
      %s55 = sphi 0, %s54
      %s71 = sphi 0, %s55
      %s79 = sphi 0, %s81
      %s82 = sphi 0, %s79
      %s83 = sphi 0, %s82
      %s99 = sphi 0, %s83
      %s107 = sphi 0, %s109
      %s110 = sphi 0, %s107
      %s111 = sphi 0, %s110
      %s127 = sphi 0, %s111
      %s135 = sphi 0, %s137
      %s138 = sphi 0, %s135
      %s139 = sphi 0, %s138
      %s155 = sphi 0, %s139
      %s159 = sphi 0, %s159
      %s161 = sphi 0, %s159
      %s162 = sphi 0, %s161
      %s176 = sphi 0, %s162
      %s180 = sphi 0, %s180
      %s182 = sphi 0, %s180
      %s183 = sphi 0, %s182
      %s197 = sphi 0, %s183
      %s201 = sphi 0, %s201
      %s203 = sphi 0, %s201
      %s204 = sphi 0, %s203
      %s218 = sphi 0, %s204
      %s222 = sphi 0, %s222
      %s224 = sphi 0, %s222
      %s225 = sphi 0, %s224
      %s239 = sphi 0, %s225
      %s243 = sphi 0, %s243
      %s245 = sphi 0, %s243
      %s246 = sphi 0, %s245
      %s260 = sphi 0, %s246
      %s264 = sphi 0, %s264
      %s266 = sphi 0, %s264
      %s267 = sphi 0, %s266
      %s281 = sphi 0, %s267
      %s285 = sphi 0, %s285
      %s287 = sphi 0, %s285
      %s288 = sphi 0, %s287
      %s302 = sphi 0, %s288
      %s306 = sphi 0, %s306
      %s308 = sphi 0, %s306
      %s309 = sphi 0, %s308
      %s323 = sphi 0, %s309
      %s327 = sphi 0, %s327
      %s329 = sphi 0, %s327
      %s330 = sphi 0, %s329
      %s344 = sphi 0, %s330
      %s348 = sphi 0, %s348
      %s350 = sphi 0, %s348
      %s351 = sphi 0, %s350
      %s365 = sphi 0, %s351
      %s373 = sphi 0, %s375
      %s376 = sphi 0, %s373
      %s377 = sphi 0, %s376
      %s393 = sphi 0, %s377
      %s401 = sphi 0, %s403
      %s404 = sphi 0, %s401
      %s405 = sphi 0, %s404
      %s421 = sphi 0, %s405
    $region4: #{tpu_custom_call.1} parent=1 // loop_header_branch
      %30 = sbr.rel (%p28) target = $region8
    $region5: #{tpu_custom_call.1} parent=1 // loop_body
      %s32 = ssub.s32 %s27, 1
      %s33 = ssub.s32 %s27, 2
      %s40 = sadd.s32 1, %s35
      %p41 = scmp.ge.s32.totalorder %s40, 2
      %s42 = scalar_select %p41, 0, %s40
      %s43 = sadd.s32 1, %s34
      %s44 = scalar_select %p41, %s43, %s34
      %p45 = scmp.ge.s32.totalorder %s44, 2
      %s46 = scalar_select %p45, 0, %s44
      %s47 = ssub.s32 %s34, %s46
      %s48 = ssub.s32 %s35, %s42
      %s49 = sor.u32 %s47, %s48
      %p50 = scmp.eq.s32.totalorder %s49, 0
      %s52 = sadd.s32 %s51, 1
      %s53 = scalar_select %p50, %s51, %s52
      %p56 = pneg %p50
      %p57 = scmp.eq.s32.totalorder %s27, 3
      %p58 = por %p56, %p57
      %p59 = scmp.ne.s32.totalorder %s51, %s54
      %p60 = scmp.eq.s32.totalorder %s27, 0
      %p61 = por %p59, %p60
      %p62 = scmp.ne.s32.totalorder %s51, %s54
      %p63 = scmp.eq.s32.totalorder %s32, 3
      %p64 = por %p62, %p63
      %p65 = scmp.ne.s32.totalorder %s54, %s55
      %p66 = scmp.eq.s32.totalorder %s32, 0
      %p67 = por %p65, %p66
      %p68 = scmp.ne.s32.totalorder %s54, %s55
      %p69 = scmp.eq.s32.totalorder %s33, 3
      %p70 = por %p68, %p69
      %p72 = scmp.ne.s32.totalorder %s55, %s71
      %p73 = scmp.eq.s32.totalorder %s33, 0
      %p74 = por %p72, %p73
      %s75 = ssub.s32 %s34, %s46
      %s76 = ssub.s32 %s35, %s42
      %s77 = sor.u32 %s75, %s76
      %p78 = scmp.eq.s32.totalorder %s77, 0
      %s80 = sadd.s32 %s79, 1
      %s81 = scalar_select %p78, %s79, %s80
      %p84 = pneg %p78
      %p85 = scmp.eq.s32.totalorder %s27, 3
      %p86 = por %p84, %p85
      %p87 = scmp.ne.s32.totalorder %s79, %s82
      %p88 = scmp.eq.s32.totalorder %s27, 0
      %p89 = por %p87, %p88
      %p90 = scmp.ne.s32.totalorder %s79, %s82
      %p91 = scmp.eq.s32.totalorder %s32, 3
      %p92 = por %p90, %p91
      %p93 = scmp.ne.s32.totalorder %s82, %s83
      %p94 = scmp.eq.s32.totalorder %s32, 0
      %p95 = por %p93, %p94
      %p96 = scmp.ne.s32.totalorder %s82, %s83
      %p97 = scmp.eq.s32.totalorder %s33, 3
      %p98 = por %p96, %p97
      %p100 = scmp.ne.s32.totalorder %s83, %s99
      %p101 = scmp.eq.s32.totalorder %s33, 0
      %p102 = por %p100, %p101
      %s103 = ssub.s32 %s34, %s46
      %s104 = ssub.s32 %s35, %s42
      %s105 = sor.u32 %s103, %s104
      %p106 = scmp.eq.s32.totalorder %s105, 0
      %s108 = sadd.s32 %s107, 1
      %s109 = scalar_select %p106, %s107, %s108
      %p112 = pneg %p106
      %p113 = scmp.eq.s32.totalorder %s27, 3
      %p114 = por %p112, %p113
      %p115 = scmp.ne.s32.totalorder %s107, %s110
      %p116 = scmp.eq.s32.totalorder %s27, 0
      %p117 = por %p115, %p116
      %p118 = scmp.ne.s32.totalorder %s107, %s110
      %p119 = scmp.eq.s32.totalorder %s32, 3
      %p120 = por %p118, %p119
      %p121 = scmp.ne.s32.totalorder %s110, %s111
      %p122 = scmp.eq.s32.totalorder %s32, 0
      %p123 = por %p121, %p122
      %p124 = scmp.ne.s32.totalorder %s110, %s111
      %p125 = scmp.eq.s32.totalorder %s33, 3
      %p126 = por %p124, %p125
      %p128 = scmp.ne.s32.totalorder %s111, %s127
      %p129 = scmp.eq.s32.totalorder %s33, 0
      %p130 = por %p128, %p129
      %s131 = ssub.s32 %s34, %s46
      %s132 = ssub.s32 %s35, %s42
      %s133 = sor.u32 %s131, %s132
      %p134 = scmp.eq.s32.totalorder %s133, 0
      %s136 = sadd.s32 %s135, 1
      %s137 = scalar_select %p134, %s135, %s136
      %p140 = pneg %p134
      %p141 = scmp.eq.s32.totalorder %s27, 3
      %p142 = por %p140, %p141
      %p143 = scmp.ne.s32.totalorder %s135, %s138
      %p144 = scmp.eq.s32.totalorder %s27, 0
      %p145 = por %p143, %p144
      %p146 = scmp.ne.s32.totalorder %s135, %s138
      %p147 = scmp.eq.s32.totalorder %s32, 3
      %p148 = por %p146, %p147
      %p149 = scmp.ne.s32.totalorder %s138, %s139
      %p150 = scmp.eq.s32.totalorder %s32, 0
      %p151 = por %p149, %p150
      %p152 = scmp.ne.s32.totalorder %s138, %s139
      %p153 = scmp.eq.s32.totalorder %s33, 3
      %p154 = por %p152, %p153
      %p156 = scmp.ne.s32.totalorder %s139, %s155
      %p157 = scmp.eq.s32.totalorder %s33, 0
      %p158 = por %p156, %p157
      %s160 = sadd.s32 %s159, 1
      %p163 = scmp.eq.s32.totalorder %s27, 3
      %p164 = scmp.ne.s32.totalorder %s159, %s161
      %p165 = scmp.eq.s32.totalorder %s27, 0
      %p166 = por %p164, %p165
      %p167 = scmp.ne.s32.totalorder %s159, %s161
      %p168 = scmp.eq.s32.totalorder %s32, 3
      %p169 = por %p167, %p168
      %p170 = scmp.ne.s32.totalorder %s161, %s162
      %p171 = scmp.eq.s32.totalorder %s32, 0
      %p172 = por %p170, %p171
      %p173 = scmp.ne.s32.totalorder %s161, %s162
      %p174 = scmp.eq.s32.totalorder %s33, 3
      %p175 = por %p173, %p174
      %p177 = scmp.ne.s32.totalorder %s162, %s176
      %p178 = scmp.eq.s32.totalorder %s33, 0
      %p179 = por %p177, %p178
      %s181 = sadd.s32 %s180, 1
      %p184 = scmp.eq.s32.totalorder %s27, 3
      %p185 = scmp.ne.s32.totalorder %s180, %s182
      %p186 = scmp.eq.s32.totalorder %s27, 0
      %p187 = por %p185, %p186
      %p188 = scmp.ne.s32.totalorder %s180, %s182
      %p189 = scmp.eq.s32.totalorder %s32, 3
      %p190 = por %p188, %p189
      %p191 = scmp.ne.s32.totalorder %s182, %s183
      %p192 = scmp.eq.s32.totalorder %s32, 0
      %p193 = por %p191, %p192
      %p194 = scmp.ne.s32.totalorder %s182, %s183
      %p195 = scmp.eq.s32.totalorder %s33, 3
      %p196 = por %p194, %p195
      %p198 = scmp.ne.s32.totalorder %s183, %s197
      %p199 = scmp.eq.s32.totalorder %s33, 0
      %p200 = por %p198, %p199
      %s202 = sadd.s32 %s201, 1
      %p205 = scmp.eq.s32.totalorder %s27, 3
      %p206 = scmp.ne.s32.totalorder %s201, %s203
      %p207 = scmp.eq.s32.totalorder %s27, 0
      %p208 = por %p206, %p207
      %p209 = scmp.ne.s32.totalorder %s201, %s203
      %p210 = scmp.eq.s32.totalorder %s32, 3
      %p211 = por %p209, %p210
      %p212 = scmp.ne.s32.totalorder %s203, %s204
      %p213 = scmp.eq.s32.totalorder %s32, 0
      %p214 = por %p212, %p213
      %p215 = scmp.ne.s32.totalorder %s203, %s204
      %p216 = scmp.eq.s32.totalorder %s33, 3
      %p217 = por %p215, %p216
      %p219 = scmp.ne.s32.totalorder %s204, %s218
      %p220 = scmp.eq.s32.totalorder %s33, 0
      %p221 = por %p219, %p220
      %s223 = sadd.s32 %s222, 1
      %p226 = scmp.eq.s32.totalorder %s27, 3
      %p227 = scmp.ne.s32.totalorder %s222, %s224
      %p228 = scmp.eq.s32.totalorder %s27, 0
      %p229 = por %p227, %p228
      %p230 = scmp.ne.s32.totalorder %s222, %s224
      %p231 = scmp.eq.s32.totalorder %s32, 3
      %p232 = por %p230, %p231
      %p233 = scmp.ne.s32.totalorder %s224, %s225
      %p234 = scmp.eq.s32.totalorder %s32, 0
      %p235 = por %p233, %p234
      %p236 = scmp.ne.s32.totalorder %s224, %s225
      %p237 = scmp.eq.s32.totalorder %s33, 3
      %p238 = por %p236, %p237
      %p240 = scmp.ne.s32.totalorder %s225, %s239
      %p241 = scmp.eq.s32.totalorder %s33, 0
      %p242 = por %p240, %p241
      %s244 = sadd.s32 %s243, 1
      %p247 = scmp.eq.s32.totalorder %s27, 3
      %p248 = scmp.ne.s32.totalorder %s243, %s245
      %p249 = scmp.eq.s32.totalorder %s27, 0
      %p250 = por %p248, %p249
      %p251 = scmp.ne.s32.totalorder %s243, %s245
      %p252 = scmp.eq.s32.totalorder %s32, 3
      %p253 = por %p251, %p252
      %p254 = scmp.ne.s32.totalorder %s245, %s246
      %p255 = scmp.eq.s32.totalorder %s32, 0
      %p256 = por %p254, %p255
      %p257 = scmp.ne.s32.totalorder %s245, %s246
      %p258 = scmp.eq.s32.totalorder %s33, 3
      %p259 = por %p257, %p258
      %p261 = scmp.ne.s32.totalorder %s246, %s260
      %p262 = scmp.eq.s32.totalorder %s33, 0
      %p263 = por %p261, %p262
      %s265 = sadd.s32 %s264, 1
      %p268 = scmp.eq.s32.totalorder %s27, 3
      %p269 = scmp.ne.s32.totalorder %s264, %s266
      %p270 = scmp.eq.s32.totalorder %s27, 0
      %p271 = por %p269, %p270
      %p272 = scmp.ne.s32.totalorder %s264, %s266
      %p273 = scmp.eq.s32.totalorder %s32, 3
      %p274 = por %p272, %p273
      %p275 = scmp.ne.s32.totalorder %s266, %s267
      %p276 = scmp.eq.s32.totalorder %s32, 0
      %p277 = por %p275, %p276
      %p278 = scmp.ne.s32.totalorder %s266, %s267
      %p279 = scmp.eq.s32.totalorder %s33, 3
      %p280 = por %p278, %p279
      %p282 = scmp.ne.s32.totalorder %s267, %s281
      %p283 = scmp.eq.s32.totalorder %s33, 0
      %p284 = por %p282, %p283
      %s286 = sadd.s32 %s285, 1
      %p289 = scmp.eq.s32.totalorder %s27, 3
      %p290 = scmp.ne.s32.totalorder %s285, %s287
      %p291 = scmp.eq.s32.totalorder %s27, 0
      %p292 = por %p290, %p291
      %p293 = scmp.ne.s32.totalorder %s285, %s287
      %p294 = scmp.eq.s32.totalorder %s32, 3
      %p295 = por %p293, %p294
      %p296 = scmp.ne.s32.totalorder %s287, %s288
      %p297 = scmp.eq.s32.totalorder %s32, 0
      %p298 = por %p296, %p297
      %p299 = scmp.ne.s32.totalorder %s287, %s288
      %p300 = scmp.eq.s32.totalorder %s33, 3
      %p301 = por %p299, %p300
      %p303 = scmp.ne.s32.totalorder %s288, %s302
      %p304 = scmp.eq.s32.totalorder %s33, 0
      %p305 = por %p303, %p304
      %s307 = sadd.s32 %s306, 1
      %p310 = scmp.eq.s32.totalorder %s27, 3
      %p311 = scmp.ne.s32.totalorder %s306, %s308
      %p312 = scmp.eq.s32.totalorder %s27, 0
      %p313 = por %p311, %p312
      %p314 = scmp.ne.s32.totalorder %s306, %s308
      %p315 = scmp.eq.s32.totalorder %s32, 3
      %p316 = por %p314, %p315
      %p317 = scmp.ne.s32.totalorder %s308, %s309
      %p318 = scmp.eq.s32.totalorder %s32, 0
      %p319 = por %p317, %p318
      %p320 = scmp.ne.s32.totalorder %s308, %s309
      %p321 = scmp.eq.s32.totalorder %s33, 3
      %p322 = por %p320, %p321
      %p324 = scmp.ne.s32.totalorder %s309, %s323
      %p325 = scmp.eq.s32.totalorder %s33, 0
      %p326 = por %p324, %p325
      %s328 = sadd.s32 %s327, 1
      %p331 = scmp.eq.s32.totalorder %s27, 3
      %p332 = scmp.ne.s32.totalorder %s327, %s329
      %p333 = scmp.eq.s32.totalorder %s27, 0
      %p334 = por %p332, %p333
      %p335 = scmp.ne.s32.totalorder %s327, %s329
      %p336 = scmp.eq.s32.totalorder %s32, 3
      %p337 = por %p335, %p336
      %p338 = scmp.ne.s32.totalorder %s329, %s330
      %p339 = scmp.eq.s32.totalorder %s32, 0
      %p340 = por %p338, %p339
      %p341 = scmp.ne.s32.totalorder %s329, %s330
      %p342 = scmp.eq.s32.totalorder %s33, 3
      %p343 = por %p341, %p342
      %p345 = scmp.ne.s32.totalorder %s330, %s344
      %p346 = scmp.eq.s32.totalorder %s33, 0
      %p347 = por %p345, %p346
      %s349 = sadd.s32 %s348, 1
      %p352 = scmp.eq.s32.totalorder %s27, 3
      %p353 = scmp.ne.s32.totalorder %s348, %s350
      %p354 = scmp.eq.s32.totalorder %s27, 0
      %p355 = por %p353, %p354
      %p356 = scmp.ne.s32.totalorder %s348, %s350
      %p357 = scmp.eq.s32.totalorder %s32, 3
      %p358 = por %p356, %p357
      %p359 = scmp.ne.s32.totalorder %s350, %s351
      %p360 = scmp.eq.s32.totalorder %s32, 0
      %p361 = por %p359, %p360
      %p362 = scmp.ne.s32.totalorder %s350, %s351
      %p363 = scmp.eq.s32.totalorder %s33, 3
      %p364 = por %p362, %p363
      %p366 = scmp.ne.s32.totalorder %s351, %s365
      %p367 = scmp.eq.s32.totalorder %s33, 0
      %p368 = por %p366, %p367
      %s369 = ssub.s32 %s34, %s46
      %s370 = ssub.s32 %s35, %s42
      %s371 = sor.u32 %s369, %s370
      %p372 = scmp.eq.s32.totalorder %s371, 0
      %s374 = sadd.s32 %s373, 1
      %s375 = scalar_select %p372, %s373, %s374
      %p378 = pneg %p372
      %p379 = scmp.eq.s32.totalorder %s27, 3
      %p380 = por %p378, %p379
      %p381 = scmp.ne.s32.totalorder %s373, %s376
      %p382 = scmp.eq.s32.totalorder %s27, 0
      %p383 = por %p381, %p382
      %p384 = scmp.ne.s32.totalorder %s373, %s376
      %p385 = scmp.eq.s32.totalorder %s32, 3
      %p386 = por %p384, %p385
      %p387 = scmp.ne.s32.totalorder %s376, %s377
      %p388 = scmp.eq.s32.totalorder %s32, 0
      %p389 = por %p387, %p388
      %p390 = scmp.ne.s32.totalorder %s376, %s377
      %p391 = scmp.eq.s32.totalorder %s33, 3
      %p392 = por %p390, %p391
      %p394 = scmp.ne.s32.totalorder %s377, %s393
      %p395 = scmp.eq.s32.totalorder %s33, 0
      %p396 = por %p394, %p395
      %s397 = ssub.s32 %s34, %s46
      %s398 = ssub.s32 %s35, %s42
      %s399 = sor.u32 %s397, %s398
      %p400 = scmp.eq.s32.totalorder %s399, 0
      %s402 = sadd.s32 %s401, 1
      %s403 = scalar_select %p400, %s401, %s402
      %p406 = pneg %p400
      %p407 = scmp.eq.s32.totalorder %s27, 3
      %p408 = por %p406, %p407
      %p409 = scmp.ne.s32.totalorder %s401, %s404
      %p410 = scmp.eq.s32.totalorder %s27, 0
      %p411 = por %p409, %p410
      %p412 = scmp.ne.s32.totalorder %s401, %s404
      %p413 = scmp.eq.s32.totalorder %s32, 3
      %p414 = por %p412, %p413
      %p415 = scmp.ne.s32.totalorder %s404, %s405
      %p416 = scmp.eq.s32.totalorder %s32, 0
      %p417 = por %p415, %p416
      %p418 = scmp.ne.s32.totalorder %s404, %s405
      %p419 = scmp.eq.s32.totalorder %s33, 3
      %p420 = por %p418, %p419
      %p422 = scmp.ne.s32.totalorder %s405, %s421
      %p423 = scmp.eq.s32.totalorder %s33, 0
      %p424 = por %p422, %p423
      %p425 = scmp.le.s32.totalorder 1, %s27
      %p426 = scmp.lt.s32.totalorder %s27, 5
      %p427 = pnand %p425, %p426
      %p428 = pneg %p427
      // Predicated region
      $region9: #{tpu_custom_call.1} parent=5 // pred_check
        _
      $region10: #{tpu_custom_call.1} parent=5 // pred_check_branch
        %430 = sbr.rel (%p427) target = $region12
      $region11: #{tpu_custom_call.1} parent=5 // pred_region
        %s431 = ssub.s32 %s27, 1
        // Predicated region
        $region13: #{tpu_custom_call.1} parent=11 // pred_check
          %p432 = pneg %p172
        $region14: #{tpu_custom_call.1} parent=11 // pred_check_branch
          %434 = sbr.rel (%p432) target = $region16
        $region15: #{tpu_custom_call.1} parent=11 // pred_region
          _
        $region16: #{tpu_custom_call.1} parent=11 // pred_fallthru
          _
        // Predicated region
        $region17: #{tpu_custom_call.1} parent=11 // pred_check
          %p435 = pneg %p193
        $region18: #{tpu_custom_call.1} parent=11 // pred_check_branch
          %437 = sbr.rel (%p435) target = $region20
        $region19: #{tpu_custom_call.1} parent=11 // pred_region
          _
        $region20: #{tpu_custom_call.1} parent=11 // pred_fallthru
          _
        // Predicated region
        $region21: #{tpu_custom_call.1} parent=11 // pred_check
          %p438 = pneg %p214
        $region22: #{tpu_custom_call.1} parent=11 // pred_check_branch
          %440 = sbr.rel (%p438) target = $region24
        $region23: #{tpu_custom_call.1} parent=11 // pred_region
          _
        $region24: #{tpu_custom_call.1} parent=11 // pred_fallthru
          _
        // Predicated region
        $region25: #{tpu_custom_call.1} parent=11 // pred_check
          %p441 = pneg %p235
        $region26: #{tpu_custom_call.1} parent=11 // pred_check_branch
          %443 = sbr.rel (%p441) target = $region28
        $region27: #{tpu_custom_call.1} parent=11 // pred_region
          _
        $region28: #{tpu_custom_call.1} parent=11 // pred_fallthru
          _
        // Predicated region
        $region29: #{tpu_custom_call.1} parent=11 // pred_check
          %p444 = pneg %p256
        $region30: #{tpu_custom_call.1} parent=11 // pred_check_branch
          %446 = sbr.rel (%p444) target = $region32
        $region31: #{tpu_custom_call.1} parent=11 // pred_region
          _
        $region32: #{tpu_custom_call.1} parent=11 // pred_fallthru
          _
        // Predicated region
        $region33: #{tpu_custom_call.1} parent=11 // pred_check
          %p447 = pneg %p277
        $region34: #{tpu_custom_call.1} parent=11 // pred_check_branch
          %449 = sbr.rel (%p447) target = $region36
        $region35: #{tpu_custom_call.1} parent=11 // pred_region
          _
        $region36: #{tpu_custom_call.1} parent=11 // pred_fallthru
          _
        // Predicated region
        $region37: #{tpu_custom_call.1} parent=11 // pred_check
          %p450 = pneg %p298
        $region38: #{tpu_custom_call.1} parent=11 // pred_check_branch
          %452 = sbr.rel (%p450) target = $region40
        $region39: #{tpu_custom_call.1} parent=11 // pred_region
          _
        $region40: #{tpu_custom_call.1} parent=11 // pred_fallthru
          _
        // Predicated region
        $region41: #{tpu_custom_call.1} parent=11 // pred_check
          %p453 = pneg %p319
        $region42: #{tpu_custom_call.1} parent=11 // pred_check_branch
          %455 = sbr.rel (%p453) target = $region44
        $region43: #{tpu_custom_call.1} parent=11 // pred_region
          _
        $region44: #{tpu_custom_call.1} parent=11 // pred_fallthru
          _
        // Predicated region
        $region45: #{tpu_custom_call.1} parent=11 // pred_check
          %p456 = pneg %p340
        $region46: #{tpu_custom_call.1} parent=11 // pred_check_branch
          %458 = sbr.rel (%p456) target = $region48
        $region47: #{tpu_custom_call.1} parent=11 // pred_region
          _
        $region48: #{tpu_custom_call.1} parent=11 // pred_fallthru
          _
        // Predicated region
        $region49: #{tpu_custom_call.1} parent=11 // pred_check
          %p459 = pneg %p361
        $region50: #{tpu_custom_call.1} parent=11 // pred_check_branch
          %461 = sbr.rel (%p459) target = $region52
        $region51: #{tpu_custom_call.1} parent=11 // pred_region
          _
        $region52: #{tpu_custom_call.1} parent=11 // pred_fallthru
          _
      $region12: #{tpu_custom_call.1} parent=5 // pred_fallthru
        _
      %p462 = scmp.lt.s32.totalorder %s27, 4
      // Predicated region
      $region53: #{tpu_custom_call.1} parent=5 // pred_check
        %p463 = pneg %p462
      $region54: #{tpu_custom_call.1} parent=5 // pred_check_branch
        %465 = sbr.rel (%p463) target = $region56
      $region55: #{tpu_custom_call.1} parent=5 // pred_region
        // Predicated region
        $region57: #{tpu_custom_call.1} parent=55 // pred_check
          %p466 = pneg %p61
        $region58: #{tpu_custom_call.1} parent=55 // pred_check_branch
          %468 = sbr.rel (%p466) target = $region60
        $region59: #{tpu_custom_call.1} parent=55 // pred_region
          %s469 = sand.u32 %s51, 1
          %s470 = sand.u32 %s51, 1
          %s471 = smul.addr %s470, 16
          %s472 = scalar_lea.vmem [#allocation3], %s471
          %s473 = smul.u32 2, %s35
          %s474 = smul.addr %s34, 8
          %s475 = sadd.s32 %s473, %s474
          %s476 = smul.addr %s475, 4
          %s477 = scalar_lea.vmem %s0, %s476
          // Predicated region
          $region61: #{tpu_custom_call.1} parent=59 // pred_check
            _
          $region62: #{tpu_custom_call.1} parent=59 // pred_check_branch
            %479 = sbr.rel (0) target = $region64
          $region63: #{tpu_custom_call.1} parent=59 // pred_region
            // Predicated region
            $region65: #{tpu_custom_call.1} parent=63 // pred_check
              _
            $region66: #{tpu_custom_call.1} parent=63 // pred_check_branch
              %481 = sbr.rel (0) target = $region68
            $region67: #{tpu_custom_call.1} parent=63 // pred_region
              // Predicated region
              $region80: #{tpu_custom_call.1} parent=67 // pred_check
                _
              $region81: #{tpu_custom_call.1} parent=67 // pred_check_branch
                %498 = sbr.rel (0) target = $region83
              $region82: #{tpu_custom_call.1} parent=67 // pred_region
                loop: start=0, step=1, limit=1
                $region84: #{tpu_custom_call.1} parent=82 // loop_pre_header
                  _
                $region85: #{tpu_custom_call.1} parent=82 // loop_header
                  %s500 = sphi 0, %s504
                  %p501 = scmp.ge.s32.totalorder %s500, 1
                  %s505 = sphi %s477, %s477
                  %s506 = sphi %s472, %s472
                $region86: #{tpu_custom_call.1} parent=82 // loop_header_branch
                  %503 = sbr.rel (%p501) target = $region90
                $region87: #{tpu_custom_call.1} parent=82 // loop_body
                  %v507 = vld [vmem:[%s505] sm:$0xff]
                  %508 = vst [vmem:[%s506] sm:$0xff] %v507
                  %v509 = vld [vmem:[%s505 + $0x10] sm:$0xff]
                  %510 = vst [vmem:[%s506 + $0x8] sm:$0xff] %v509
                $region88: #{tpu_custom_call.1} parent=82 // loop_footer
                  %s504 = sadd.s32 1, %s500
                $region89: #{tpu_custom_call.1} parent=82 // loop_footer_branch
                  %499 = sbr.rel target = $region85
                $region90: #{tpu_custom_call.1} parent=82 // loop_exit
                  _
              $region83: #{tpu_custom_call.1} parent=67 // pred_fallthru
                _
              // Predicated region
              $region91: #{tpu_custom_call.1} parent=67 // pred_check
                _
              $region92: #{tpu_custom_call.1} parent=67 // pred_check_branch
                %512 = sbr.rel target = $region94
              $region93: #{tpu_custom_call.1} parent=67 // pred_region
                _
              $region94: #{tpu_custom_call.1} parent=67 // pred_fallthru
                _
            $region68: #{tpu_custom_call.1} parent=63 // pred_fallthru
              _
            // Predicated region
            $region69: #{tpu_custom_call.1} parent=63 // pred_check
              _
            $region70: #{tpu_custom_call.1} parent=63 // pred_check_branch
              %483 = sbr.rel target = $region72
            $region71: #{tpu_custom_call.1} parent=63 // pred_region
              loop: start=0, step=1, limit=1
              $region73: #{tpu_custom_call.1} parent=71 // loop_pre_header
                _
              $region74: #{tpu_custom_call.1} parent=71 // loop_header
                %s486 = sphi 0, %s490
                %p487 = scmp.ge.s32.totalorder %s486, 1
                %s491 = sphi %s477, %s477
                %s492 = sphi %s472, %s472
              $region75: #{tpu_custom_call.1} parent=71 // loop_header_branch
                %489 = sbr.rel (%p487) target = $region79
              $region76: #{tpu_custom_call.1} parent=71 // loop_body
                %v493 = vld [vmem:[%s491] sm:$0xff]
                %494 = vst [vmem:[%s492] sm:$0xff] %v493
                %v495 = vld [vmem:[%s491 + $0x10] sm:$0xff]
                %496 = vst [vmem:[%s492 + $0x8] sm:$0xff] %v495
              $region77: #{tpu_custom_call.1} parent=71 // loop_footer
                %s490 = sadd.s32 1, %s486
              $region78: #{tpu_custom_call.1} parent=71 // loop_footer_branch
                %485 = sbr.rel target = $region74
              $region79: #{tpu_custom_call.1} parent=71 // loop_exit
                _
            $region72: #{tpu_custom_call.1} parent=63 // pred_fallthru
              _
          $region64: #{tpu_custom_call.1} parent=59 // pred_fallthru
            _
          %513 = vnop
        $region60: #{tpu_custom_call.1} parent=55 // pred_fallthru
          _
        // Predicated region
        $region95: #{tpu_custom_call.1} parent=55 // pred_check
          %p514 = pneg %p89
        $region96: #{tpu_custom_call.1} parent=55 // pred_check_branch
          %516 = sbr.rel (%p514) target = $region98
        $region97: #{tpu_custom_call.1} parent=55 // pred_region
          %s517 = smul.u32 2, %s35
          %p518 = scmp.lt.s32.totalorder %s34, 1
          %s519 = scalar_select %p518, %s34, 1
          %p520 = scmp.lt.s32.totalorder %s517, 3
          %s521 = scalar_select %p520, %s517, 3
          %s522 = smul.addr %s519, 4
          %s523 = sadd.s32 %s521, %s522
          %s524 = smul.addr %s523, 2
          %s525 = scalar_lea.vmem %s1, %s524
          %s526 = smul.u32 2, %s35
        $region98: #{tpu_custom_call.1} parent=55 // pred_fallthru
          _
        // Predicated region
        $region99: #{tpu_custom_call.1} parent=55 // pred_check
          %p527 = pneg %p117
        $region100: #{tpu_custom_call.1} parent=55 // pred_check_branch
          %529 = sbr.rel (%p527) target = $region102
        $region101: #{tpu_custom_call.1} parent=55 // pred_region
          %s530 = smul.u32 2, %s35
          %p531 = scmp.lt.s32.totalorder %s34, 1
          %s532 = scalar_select %p531, %s34, 1
          %p533 = scmp.lt.s32.totalorder %s530, 3
          %s534 = scalar_select %p533, %s530, 3
          %s535 = smul.addr %s532, 4
          %s536 = sadd.s32 %s534, %s535
          %s537 = smul.addr %s536, 2
          %s538 = scalar_lea.vmem %s2, %s537
          %s539 = smul.u32 2, %s35
        $region102: #{tpu_custom_call.1} parent=55 // pred_fallthru
          _
        // Predicated region
        $region103: #{tpu_custom_call.1} parent=55 // pred_check
          %p540 = pneg %p145
        $region104: #{tpu_custom_call.1} parent=55 // pred_check_branch
          %542 = sbr.rel (%p540) target = $region106
        $region105: #{tpu_custom_call.1} parent=55 // pred_region
          %s543 = smul.u32 2, %s35
          %p544 = scmp.lt.s32.totalorder %s34, 1
          %s545 = scalar_select %p544, %s34, 1
          %p546 = scmp.lt.s32.totalorder %s543, 3
          %s547 = scalar_select %p546, %s543, 3
          %s548 = smul.addr %s545, 4
          %s549 = sadd.s32 %s547, %s548
          %s550 = scalar_lea.vmem %s3, %s549
          %s551 = smul.u32 2, %s35
        $region106: #{tpu_custom_call.1} parent=55 // pred_fallthru
          _
      $region56: #{tpu_custom_call.1} parent=5 // pred_fallthru
        _
      %p552 = scmp.le.s32.totalorder 1, %s27
      %p553 = scmp.lt.s32.totalorder %s27, 5
      %p554 = pnand %p552, %p553
      %p555 = pneg %p554
      // Predicated region
      $region107: #{tpu_custom_call.1} parent=5 // pred_check
        _
      $region108: #{tpu_custom_call.1} parent=5 // pred_check_branch
        %557 = sbr.rel (%p554) target = $region110
      $region109: #{tpu_custom_call.1} parent=5 // pred_region
        %s558 = ssub.s32 %s27, 1
        %s559 = sand.u32 %s54, 1
        %s560 = sand.u32 %s54, 1
        %s561 = smul.addr %s560, 16
        %s562 = scalar_lea.vmem [#allocation3], %s561
        // Predicated region
        $region111: #{tpu_custom_call.1} parent=109 // pred_check
          %p563 = pneg %p67
        $region112: #{tpu_custom_call.1} parent=109 // pred_check_branch
          %565 = sbr.rel (%p563) target = $region114
        $region113: #{tpu_custom_call.1} parent=109 // pred_region
          _
        $region114: #{tpu_custom_call.1} parent=109 // pred_fallthru
          _
        %s566 = sand.u32 %s54, 1
        %s567 = sand.u32 %s54, 1
        %s568 = smul.addr %s567, 16
        %s569 = scalar_lea.vmem [#allocation3], %s568
        %p570 = pneg %p67
        %p571 = pneg %p64
        %s572 = smul.u32 2, %s37
        %p573 = scmp.lt.s32.totalorder %s36, 1
        %s574 = scalar_select %p573, %s36, 1
        %p575 = scmp.lt.s32.totalorder %s572, 3
        %s576 = scalar_select %p575, %s572, 3
        %s577 = smul.addr %s574, 4
        %s578 = sadd.s32 %s576, %s577
        %s579 = smul.addr %s578, 2
        %s580 = scalar_lea.vmem %s1, %s579
        %p581 = pneg %p95
        %p582 = pneg %p92
        %s583 = smul.u32 2, %s37
        %p584 = scmp.lt.s32.totalorder %s36, 1
        %s585 = scalar_select %p584, %s36, 1
        %p586 = scmp.lt.s32.totalorder %s583, 3
        %s587 = scalar_select %p586, %s583, 3
        %s588 = smul.addr %s585, 4
        %s589 = sadd.s32 %s587, %s588
        %s590 = smul.addr %s589, 2
        %s591 = scalar_lea.vmem %s2, %s590
        %p592 = pneg %p123
        %p593 = pneg %p120
        %s594 = smul.u32 2, %s37
        %p595 = scmp.lt.s32.totalorder %s36, 1
        %s596 = scalar_select %p595, %s36, 1
        %p597 = scmp.lt.s32.totalorder %s594, 3
        %s598 = scalar_select %p597, %s594, 3
        %s599 = smul.addr %s596, 4
        %s600 = sadd.s32 %s598, %s599
        %s601 = scalar_lea.vmem %s3, %s600
        %p602 = pneg %p151
        %p603 = pneg %p148
        %p604 = pneg %p172
        %p605 = pneg %p169
        %p606 = pneg %p193
        %p607 = pneg %p190
        %p608 = pneg %p214
        %p609 = pneg %p211
        %p610 = pneg %p235
        %p611 = pneg %p232
        %p612 = pneg %p256
        %p613 = pneg %p253
        %p614 = pneg %p277
        %p615 = pneg %p274
        %p616 = pneg %p298
        %p617 = pneg %p295
        %p618 = pneg %p319
        %p619 = pneg %p316
        %p620 = pneg %p340
        %p621 = pneg %p337
        %p622 = pneg %p361
        %p623 = pneg %p358
        %p624 = pneg %p389
        %p625 = pneg %p386
        %s626 = sand.u32 %s376, 1
        %s627 = scalar_lea.sflag [#allocation5], %s626
        %s628 = sand.u32 %s376, 1
        %s629 = smul.addr %s628, 2
        %s630 = scalar_lea.vmem [#allocation4], %s629
        %p631 = pneg %p417
        %p632 = pneg %p414
        %s633 = smul.u32 2, %s37
        %p634 = scmp.lt.s32.totalorder %s36, 1
        %s635 = scalar_select %p634, %s36, 1
        %p636 = scmp.lt.s32.totalorder %s633, 3
        %s637 = scalar_select %p636, %s633, 3
        %s638 = smul.addr %s635, 4
        %s639 = sadd.s32 %s637, %s638
        %s640 = smul.addr %s639, 4
        %s641 = scalar_lea.vmem %s15, %s640
        %s642 = smul.u32 2, %s37
        %s643 = smul.u32 2, %s37
        %p644 = scmp.lt.s32.totalorder %s36, 1
        %s645 = scalar_select %p644, %s36, 1
        %p646 = scmp.lt.s32.totalorder %s643, 3
        %s647 = scalar_select %p646, %s643, 3
        %s648 = smul.addr %s645, 4
        %s649 = sadd.s32 %s647, %s648
        %s650 = smul.addr %s649, 2
        %s651 = scalar_lea.vmem %s1, %s650
        %s652 = smul.u32 2, %s37
        %s653 = smul.u32 2, %s37
        %p654 = scmp.lt.s32.totalorder %s36, 1
        %s655 = scalar_select %p654, %s36, 1
        %p656 = scmp.lt.s32.totalorder %s653, 3
        %s657 = scalar_select %p656, %s653, 3
        %s658 = smul.addr %s655, 4
        %s659 = sadd.s32 %s657, %s658
        %s660 = smul.addr %s659, 2
        %s661 = scalar_lea.vmem %s2, %s660
        %s662 = smul.u32 2, %s37
        %s663 = smul.u32 2, %s37
        %p664 = scmp.lt.s32.totalorder %s36, 1
        %s665 = scalar_select %p664, %s36, 1
        %p666 = scmp.lt.s32.totalorder %s663, 3
        %s667 = scalar_select %p666, %s663, 3
        %s668 = smul.addr %s665, 4
        %s669 = sadd.s32 %s667, %s668
        %s670 = scalar_lea.vmem %s3, %s669
        %s671 = smul.u32 2, %s37
        %s672 = smul.u32 2, %s37
        %s673 = smul.u32 2, %s37
        %p674 = scmp.lt.s32.totalorder %s36, 1
        %s675 = scalar_select %p674, %s36, 1
        %p676 = scmp.lt.s32.totalorder %s673, 3
        %s677 = scalar_select %p676, %s673, 3
        %s678 = smul.addr %s675, 4
        %s679 = sadd.s32 %s677, %s678
        %s680 = smul.addr %s679, 4
        %s681 = scalar_lea.vmem %s15, %s680
        %s682 = smul.u32 2, %s37
        %v684 = vld [vmem:[%s4] sm:$0xf]
        %v685 = vld [vmem:[%s4 + $0x4] sm:$0xf]
        %v686 = vld [vmem:[%s4 + $0x8] sm:$0xf]
        %v687 = vld [vmem:[%s4 + $0xc] sm:$0xf]
        %v688 = vld [vmem:[%s562] sm:$0xff]
        %v689 = vld [vmem:[%s562 + $0x8] sm:$0x33]
        %v690 = vld [vmem:[%s5] sm:$0xf]
        %v691 = vld [vmem:[%s5 + $0x4] sm:$0xf]
        %v692 = vld [vmem:[%s5 + $0x8] sm:$0xf]
        %v693 = vld [vmem:[%s5 + $0xc] sm:$0xf]
        %v694 = vld [vmem:[%s651] sm:$0xf]
        %v699 = vunpack.c.l.b16 %v690
        %v700 = vunpack.c.l.b16 %v691
        %v701 = vunpack.c.l.b16 %v692
        %v702 = vunpack.c.l.b16 %v693
        %v703 = vpack.c.b16 %v700, %v699
        %v704 = vpack.c.b16 %v702, %v701
        %v707 = vunpack.c.l.s4 1983009808
        %v708 = vunpack.c.0.s8 %v707
        %v709 = vlaneseq
        %v710 = vshrl.u32 %v709, 7
        %v711 = vsub.s32 %v708, %v710
        %v712 = vrot.slane %v694, %v711
        %v713 = vcombine.high %v712, %v712
        %vm714 = vcmask 23552
        %v716 = vsel %vm714, %v703, 0
        %v719 = vsel %vm714, %v704, 0
        %vm721 = vcmask 1040384
        %vm722 = vcmask 1041408
        %v723 = vsel %vm721, 4294967295, 65535
        %v724 = vsel %vm722, %v723, 0
        %v726 = vand.u32 %v712, %v724
        %v729 = vand.u32 %v713, %v724
        %731 = vmatprep.subr.bf16.mxu0 %v729
        %732 = vmatpush1.bf16.msra.mxu0 %v726
        %733 = vmatprep.subr.bf16.mxu0 0
        %734 = vmatpush1.bf16.msra.mxu0 0
        %735 = vmatprep.subr.bf16.mxu0 0
        %736 = vmatpush1.bf16.msra.mxu0 0
        %737 = vmatprep.subr.bf16.mxu0 0
        %738 = vmatpush1.bf16.msra.mxu0 0
        %739 = vmatprep.subr.bf16.mxu0 0
        %740 = vmatpush1.bf16.msra.mxu0 0
        %741 = vmatprep.subr.bf16.mxu0 0
        %742 = vmatpush1.bf16.msra.mxu0 0
        %743 = vmatprep.subr.bf16.mxu0 0
        %744 = vmatpush1.bf16.msra.mxu0 0
        %745 = vmatprep.subr.bf16.mxu0 0
        %746 = vmatpush1.bf16.msra.mxu0 0
        %747 = vmatprep.subr.bf16.mxu0 0
        %748 = vmatpush1.bf16.msra.mxu0 0
        %749 = vmatprep.subr.bf16.mxu0 0
        %750 = vmatpush1.bf16.msra.mxu0 0
        %751 = vmatprep.subr.bf16.mxu0 0
        %752 = vmatpush1.bf16.msra.mxu0 0
        %753 = vmatprep.subr.bf16.mxu0 0
        %754 = vmatpush1.bf16.msra.mxu0 0
        %755 = vmatprep.subr.bf16.mxu0 0
        %756 = vmatpush1.bf16.msra.mxu0 0
        %757 = vmatprep.subr.bf16.mxu0 0
        %758 = vmatpush1.bf16.msra.mxu0 0
        %759 = vmatprep.subr.bf16.mxu0 0
        %760 = vmatpush1.bf16.msra.mxu0 0
        %761 = vmatprep.subr.bf16.mxu0 0
        %762 = vmatpush1.bf16.msra.mxu0 0
        %763 = vmatprep.mubr.bf16.mxu0 0
        %764 = vmatmul.mubr.bf16.gmra.mrb[0].mxu0 %v716
        %v765 = vpop.f32.mrb[0].mxu0
        %v766 = vadd.f32 0.0, %v765
        %v767 = vpop.f32.mrb[0].mxu0
        %v768 = vadd.f32 0.0, %v767
        %v769 = vpop.f32.mrb[0].mxu0
        %v770 = vadd.f32 0.0, %v769
        %v771 = vpop.f32.mrb[0].mxu0
        %v772 = vadd.f32 0.0, %v771
        %773 = vmatprep.mubr.bf16.mxu0 0
        %774 = vmatmul.mubr.bf16.gmra.mrb[0].mxu0 %v719
        %v775 = vpop.f32.mrb[0].mxu0
        %v776 = vadd.f32 0.0, %v775
        %v777 = vpop.f32.mrb[0].mxu0
        %v778 = vadd.f32 0.0, %v777
        %v779 = vpop.f32.mrb[0].mxu0
        %v780 = vadd.f32 0.0, %v779
        %v781 = vpop.f32.mrb[0].mxu0
        %v782 = vadd.f32 0.0, %v781
        %783 = vdwg.mxu0
        %v788 = vunpack.c.l.b16 %v684
        %v789 = vunpack.c.l.b16 %v685
        %v790 = vunpack.c.l.b16 %v686
        %v791 = vunpack.c.l.b16 %v687
        %v792 = vpack.c.b16 %v789, %v788
        %v793 = vpack.c.b16 %v791, %v790
        %v796 = vunpack.c.l.b16 %v688
        %v797 = vunpack.c.h.b16 %v688
        %v798 = vunpack.c.l.b16 %v689
        %v799 = vunpack.c.h.b16 %v689
        %v800 = vpack.c.b16 %v798, %v796
        %v801 = vpack.c.b16 %v799, %v797
        %vm802 = vcmask 97280
        %v804 = vsel %vm802, %v792, 0
        %v807 = vsel %vm802, %v793, 0
        %vm809 = vcmask 1045504
        %v811 = vsel %vm809, %v800, 0
        %v814 = vsel %vm809, %v801, 0
        %816 = vmatprep.subr.bf16.mxu0 %v814
        %817 = vmatpush1.bf16.msra.mxu0 %v811
        %818 = vmatprep.subr.bf16.mxu0 0
        %819 = vmatpush1.bf16.msra.mxu0 0
        %820 = vmatprep.subr.bf16.mxu0 0
        %821 = vmatpush1.bf16.msra.mxu0 0
        %822 = vmatprep.subr.bf16.mxu0 0
        %823 = vmatpush1.bf16.msra.mxu0 0
        %824 = vmatprep.subr.bf16.mxu0 0
        %825 = vmatpush1.bf16.msra.mxu0 0
        %826 = vmatprep.subr.bf16.mxu0 0
        %827 = vmatpush1.bf16.msra.mxu0 0
        %828 = vmatprep.subr.bf16.mxu0 0
        %829 = vmatpush1.bf16.msra.mxu0 0
        %830 = vmatprep.subr.bf16.mxu0 0
        %831 = vmatpush1.bf16.msra.mxu0 0
        %832 = vmatprep.subr.bf16.mxu0 0
        %833 = vmatpush1.bf16.msra.mxu0 0
        %834 = vmatprep.subr.bf16.mxu0 0
        %835 = vmatpush1.bf16.msra.mxu0 0
        %836 = vmatprep.subr.bf16.mxu0 0
        %837 = vmatpush1.bf16.msra.mxu0 0
        %838 = vmatprep.subr.bf16.mxu0 0
        %839 = vmatpush1.bf16.msra.mxu0 0
        %840 = vmatprep.subr.bf16.mxu0 0
        %841 = vmatpush1.bf16.msra.mxu0 0
        %842 = vmatprep.subr.bf16.mxu0 0
        %843 = vmatpush1.bf16.msra.mxu0 0
        %844 = vmatprep.subr.bf16.mxu0 0
        %845 = vmatpush1.bf16.msra.mxu0 0
        %846 = vmatprep.subr.bf16.mxu0 0
        %847 = vmatpush1.bf16.msra.mxu0 0
        %848 = vmatprep.mubr.bf16.mxu0 0
        %849 = vmatmul.mubr.bf16.gmra.mrb[0].mxu0 %v804
        %v850 = vpop.f32.mrb[0].mxu0
        %v851 = vadd.f32 %v766, %v850
        %v852 = vpop.f32.mrb[0].mxu0
        %v853 = vadd.f32 %v768, %v852
        %v854 = vpop.f32.mrb[0].mxu0
        %v855 = vadd.f32 %v770, %v854
        %v856 = vpop.f32.mrb[0].mxu0
        %v857 = vadd.f32 %v772, %v856
        %858 = vmatprep.mubr.bf16.mxu0 0
        %859 = vmatmul.mubr.bf16.gmra.mrb[0].mxu0 %v807
        %v860 = vpop.f32.mrb[0].mxu0
        %v861 = vadd.f32 %v776, %v860
        %v862 = vpop.f32.mrb[0].mxu0
        %v863 = vadd.f32 %v778, %v862
        %v864 = vpop.f32.mrb[0].mxu0
        %v865 = vadd.f32 %v780, %v864
        %v866 = vpop.f32.mrb[0].mxu0
        %v867 = vadd.f32 %v782, %v866
        %868 = vdwg.mxu0
        %v869 = vld [vmem:[%s6] sm:$0xf]
        %v870 = vld [vmem:[%s6 + $0x4] sm:$0xf]
        %v871 = vld [vmem:[%s6 + $0x8] sm:$0xf]
        %v872 = vld [vmem:[%s6 + $0xc] sm:$0xf]
        %v873 = vld [vmem:[%s661] sm:$0xf]
        %v878 = vunpack.c.l.b16 %v869
        %v879 = vunpack.c.l.b16 %v870
        %v880 = vunpack.c.l.b16 %v871
        %v881 = vunpack.c.l.b16 %v872
        %v882 = vpack.c.b16 %v879, %v878
        %v883 = vpack.c.b16 %v881, %v880
        %v886 = vunpack.c.l.s4 1983009808
        %v887 = vunpack.c.0.s8 %v886
        %v888 = vlaneseq
        %v889 = vshrl.u32 %v888, 7
        %v890 = vsub.s32 %v887, %v889
        %v891 = vrot.slane %v873, %v890
        %v892 = vcombine.high %v891, %v891
        %v894 = vsel %vm714, %v882, 0
        %v897 = vsel %vm714, %v883, 0
        %v900 = vand.u32 %v891, %v724
        %v903 = vand.u32 %v892, %v724
        %905 = vmatprep.subr.bf16.mxu0 %v903
        %906 = vmatpush1.bf16.msra.mxu0 %v900
        %907 = vmatprep.subr.bf16.mxu0 0
        %908 = vmatpush1.bf16.msra.mxu0 0
        %909 = vmatprep.subr.bf16.mxu0 0
        %910 = vmatpush1.bf16.msra.mxu0 0
        %911 = vmatprep.subr.bf16.mxu0 0
        %912 = vmatpush1.bf16.msra.mxu0 0
        %913 = vmatprep.subr.bf16.mxu0 0
        %914 = vmatpush1.bf16.msra.mxu0 0
        %915 = vmatprep.subr.bf16.mxu0 0
        %916 = vmatpush1.bf16.msra.mxu0 0
        %917 = vmatprep.subr.bf16.mxu0 0
        %918 = vmatpush1.bf16.msra.mxu0 0
        %919 = vmatprep.subr.bf16.mxu0 0
        %920 = vmatpush1.bf16.msra.mxu0 0
        %921 = vmatprep.subr.bf16.mxu0 0
        %922 = vmatpush1.bf16.msra.mxu0 0
        %923 = vmatprep.subr.bf16.mxu0 0
        %924 = vmatpush1.bf16.msra.mxu0 0
        %925 = vmatprep.subr.bf16.mxu0 0
        %926 = vmatpush1.bf16.msra.mxu0 0
        %927 = vmatprep.subr.bf16.mxu0 0
        %928 = vmatpush1.bf16.msra.mxu0 0
        %929 = vmatprep.subr.bf16.mxu0 0
        %930 = vmatpush1.bf16.msra.mxu0 0
        %931 = vmatprep.subr.bf16.mxu0 0
        %932 = vmatpush1.bf16.msra.mxu0 0
        %933 = vmatprep.subr.bf16.mxu0 0
        %934 = vmatpush1.bf16.msra.mxu0 0
        %935 = vmatprep.subr.bf16.mxu0 0
        %936 = vmatpush1.bf16.msra.mxu0 0
        %937 = vmatprep.mubr.bf16.mxu0 0
        %938 = vmatmul.mubr.bf16.gmra.mrb[0].mxu0 %v894
        %v939 = vpop.f32.mrb[0].mxu0
        %v940 = vadd.f32 0.0, %v939
        %v941 = vpop.f32.mrb[0].mxu0
        %v942 = vadd.f32 0.0, %v941
        %v943 = vpop.f32.mrb[0].mxu0
        %v944 = vadd.f32 0.0, %v943
        %v945 = vpop.f32.mrb[0].mxu0
        %v946 = vadd.f32 0.0, %v945
        %947 = vmatprep.mubr.bf16.mxu0 0
        %948 = vmatmul.mubr.bf16.gmra.mrb[0].mxu0 %v897
        %v949 = vpop.f32.mrb[0].mxu0
        %v950 = vadd.f32 0.0, %v949
        %v951 = vpop.f32.mrb[0].mxu0
        %v952 = vadd.f32 0.0, %v951
        %v953 = vpop.f32.mrb[0].mxu0
        %v954 = vadd.f32 0.0, %v953
        %v955 = vpop.f32.mrb[0].mxu0
        %v956 = vadd.f32 0.0, %v955
        %957 = vdwg.mxu0
        %v958 = vadd.f32 %v851, %v940
        %v959 = vadd.f32 %v853, %v942
        %v960 = vadd.f32 %v855, %v944
        %v961 = vadd.f32 %v857, %v946
        %v962 = vadd.f32 %v861, %v950
        %v963 = vadd.f32 %v863, %v952
        %v964 = vadd.f32 %v865, %v954
        %v965 = vadd.f32 %v867, %v956
        %v966 = vld [vmem:[%s7] sm:$0xf]
        %v967 = vld [vmem:[%s7 + $0x4] sm:$0xf]
        %v968 = vld [vmem:[%s7 + $0x8] sm:$0xf]
        %v969 = vld [vmem:[%s7 + $0xc] sm:$0xf]
        %v970 = vunpack.c.l.bf16 %v966
        %v971 = vunpack.c.l.bf16 %v967
        %v972 = vunpack.c.l.bf16 %v968
        %v973 = vunpack.c.l.bf16 %v969
        %v974 = vld [vmem:[%s670] sm:$0x3]
        %v975 = vunpack.c.l.bf16 %v974
        %977 = vset.pattern.permute.xlu0 0
        %978 = vperm.xlu0 %977, %v970
        %v979 = vpop.permute.xlu0 %978
        %982 = vset.pattern.permute.xlu0 0
        %983 = vperm.xlu0 %982, %v971
        %v984 = vpop.permute.xlu0 %983
        %987 = vset.pattern.permute.xlu0 0
        %988 = vperm.xlu0 %987, %v972
        %v989 = vpop.permute.xlu0 %988
        %992 = vset.pattern.permute.xlu0 0
        %993 = vperm.xlu0 %992, %v973
        %v994 = vpop.permute.xlu0 %993
        %v997 = vlaneseq
        %v998 = vshrl.u32 %v997, 7
        %v999 = vsub.s32 0, %v998
        %v1000 = vrot.slane %v975, %v999
        %v1001 = vlaneseq
        %v1002 = vshrl.u32 %v1001, 7
        %v1003 = vsub.s32 2, %v1002
        %v1004 = vrot.slane %v975, %v1003
        %v1007 = vlaneseq
        %v1008 = vshrl.u32 %v1007, 7
        %v1009 = vsub.s32 0, %v1008
        %v1010 = vrot.slane %v1000, %v1009
        %v1011 = vlaneseq
        %v1012 = vshrl.u32 %v1011, 7
        %v1013 = vsub.s32 0, %v1012
        %v1014 = vrot.slane %v1004, %v1013
        %v1015 = vmul.f32 %v979, %v1010
        %v1016 = vmul.f32 %v979, %v1014
        %v1017 = vmul.f32 %v984, %v1010
        %v1018 = vmul.f32 %v984, %v1014
        %v1019 = vmul.f32 %v989, %v1010
        %v1020 = vmul.f32 %v989, %v1014
        %v1021 = vmul.f32 %v994, %v1010
        %v1022 = vmul.f32 %v994, %v1014
        %v1023 = vadd.f32 %v958, %v1015
        %v1024 = vadd.f32 %v959, %v1016
        %v1025 = vadd.f32 %v960, %v1017
        %v1026 = vadd.f32 %v961, %v1018
        %v1027 = vadd.f32 %v962, %v1019
        %v1028 = vadd.f32 %v963, %v1020
        %v1029 = vadd.f32 %v964, %v1021
        %v1030 = vadd.f32 %v965, %v1022
        %v1031 = vld [vmem:[%s9] sm:$0xff]
        %v1032 = vld [vmem:[%s9 + $0x8] sm:$0xff]
        %v1033 = vld [vmem:[%s9 + $0x10] sm:$0xff]
        %v1034 = vld [vmem:[%s9 + $0x18] sm:$0xff]
        %1036 = vset.pattern.permute.xlu0 0
        %1037 = vperm.xlu0 %1036, %v1031
        %v1038 = vpop.permute.xlu0 %1037
        %1041 = vset.pattern.permute.xlu0 0
        %1042 = vperm.xlu0 %1041, %v1032
        %v1043 = vpop.permute.xlu0 %1042
        %1046 = vset.pattern.permute.xlu0 0
        %1047 = vperm.xlu0 %1046, %v1033
        %v1048 = vpop.permute.xlu0 %1047
        %1051 = vset.pattern.permute.xlu0 0
        %1052 = vperm.xlu0 %1051, %v1034
        %v1053 = vpop.permute.xlu0 %1052
        %v1055 = vadd.f32 %v1023, %v1038
        %v1056 = vadd.f32 %v1024, %v1038
        %v1057 = vadd.f32 %v1025, %v1043
        %v1058 = vadd.f32 %v1026, %v1043
        %v1059 = vadd.f32 %v1027, %v1048
        %v1060 = vadd.f32 %v1028, %v1048
        %v1061 = vadd.f32 %v1029, %v1053
        %v1062 = vadd.f32 %v1030, %v1053
        %v1063 = vand.u32 2147483647, %v1055
        %vm1064 = vcmp.le.f32.partialorder %v1063, 0.7853982
        %vm1065 = vcmp.lt.s32.totalorder %v1055, 0
        %v1066 = vand.u32 %v1055, 2139095040
        %v1067 = vshrl.u32 %v1066, 23
        %v1068 = vsub.s32 %v1067, 127
        %v1069 = vand.u32 2147483647, %v1055
        %v1070 = vand.u32 %v1069, 8388607
        %v1071 = vor.u32 %v1070, 8388608
        %v1072 = vsub.s32 0, %v1071
        %v1073 = vadd.s32 %v1068, 1
        %vm1074 = vcmp.gt.s32.totalorder %v1073, 0
        %v1075 = vsel %vm1074, %v1073, 0
        %v1076 = vshrl.u32 %v1075, 5
        %v1077 = vand.u32 %v1075, 31
        %v1078 = vsub.s32 32, %v1077
        %v1079 = vshrl.u32 683565275, %v1078
        %v1080 = vshll.u32 683565275, %v1077
        %v1081 = vshrl.u32 2475754826, %v1078
        %v1082 = vor.u32 %v1080, %v1081
        %v1083 = vshll.u32 2475754826, %v1077
        %v1084 = vshrl.u32 2131351028, %v1078
        %v1085 = vor.u32 %v1083, %v1084
        %v1086 = vshll.u32 2131351028, %v1077
        %v1087 = vshrl.u32 2102212464, %v1078
        %v1088 = vor.u32 %v1086, %v1087
        %v1089 = vshll.u32 2102212464, %v1077
        %v1090 = vshrl.u32 920167782, %v1078
        %v1091 = vor.u32 %v1089, %v1090
        %v1092 = vshll.u32 920167782, %v1077
        %v1093 = vshrl.u32 1326507024, %v1078
        %v1094 = vor.u32 %v1092, %v1093
        %vm1095 = vcmp.lt.s32.totalorder %v1076, 1
        %vm1096 = vcmp.lt.s32.totalorder %v1076, 2
        %vm1097 = vcmp.lt.s32.totalorder %v1076, 3
        %vm1098 = vcmp.lt.s32.totalorder %v1076, 4
        %v1099 = vsel %vm1095, %v1079, %v1082
        %v1100 = vsel %vm1098, %v1088, 2102212464
        %v1101 = vsel %vm1097, %v1085, %v1100
        %v1102 = vsel %vm1096, %v1099, %v1101
        %v1103 = vsel %vm1095, %v1082, %v1085
        %v1104 = vsel %vm1098, %v1091, 920167782
        %v1105 = vsel %vm1097, %v1088, %v1104
        %v1106 = vsel %vm1096, %v1103, %v1105
        %v1107 = vsel %vm1095, %v1085, %v1088
        %v1108 = vsel %vm1098, %v1094, 1326507024
        %v1109 = vsel %vm1097, %v1091, %v1108
        %v1110 = vsel %vm1096, %v1107, %v1109
        %v1111 = vshll.u32 %v1071, 8
        %v1112 = vmul.u32.u64.compose %v1111, %v1110
        %v1113 = vextract.low.u32 %v1112
        %v1114 = vextract.high.u32 %v1112
        %v1115 = vmul.u32.u64.compose %v1111, %v1106
        %v1116 = vextract.low.u32 %v1115
        %v1117 = vextract.high.u32 %v1115
        %v1118 = vmul.u32 %v1111, %v1102
        %v1119 = vadd.s32 %v1114, %v1116
        %vm1120 = vc.u32 %v1114, %v1116
        %v1121 = vadd.s32 %v1117, 1
        %v1122 = vsel %vm1120, %v1121, %v1117
        %v1123 = vadd.s32 %v1118, %v1122
        %v1124 = vadd.s32 %v1123, 536870912
        %v1125 = vshrl.u32 %v1124, 30
        %v1126 = vshll.u32 %v1125, 30
        %v1127 = vsub.s32 %v1123, %v1126
        %vm1128 = vcmp.lt.s32.totalorder %v1127, 0
        %v1129 = vsub.s32 0, %v1127
        %v1130 = vsel %vm1128, %v1129, %v1127
        %v1131 = vclz %v1130
        %v1132 = vsub.s32 %v1131, 2
        %vm1133 = vcmp.gt.s32.totalorder 0, %v1132
        %v1134 = vsel %vm1133, 0, %v1132
        %v1135 = vsub.s32 32, %v1134
        %v1136 = vshll.u32 %v1127, %v1134
        %v1137 = vshrl.u32 %v1119, %v1135
        %v1138 = vor.u32 %v1136, %v1137
        %v1139 = vsub.s32 4294967266, %v1134
        %v1140 = vadd.s32 %v1139, 127
        %v1141 = vshll.u32 %v1140, 23
        %v1142 = vor.u32 4788187, %v1141
        %v1143 = vand.u32 2147483647, %v1142
        %v1145 = vcvt.s32.f32 %v1138
        %v1146 = vmul.f32 %v1145, %v1143
        %v1147 = vxor.u32 %v1146, 2147483648
        %v1148 = vsel %vm1065, %v1147, %v1146
        %v1149 = vsub.s32 4, %v1125
        %v1150 = vsel %vm1065, %v1149, %v1125
        %v1151 = vsel %vm1064, %v1055, %v1148
        %v1152 = vsel %vm1064, 0, %v1150
        %v1153 = vcosq.f32.pop %v1151
        %v1154 = vsinq.f32.pop %v1151
        %vm1155 = vweird.f32 %v1055
        %v1156 = vadd.s32 %v1152, 3
        %v1157 = vand.u32 %v1156, 3
        %vm1158 = vcmp.lt.s32.totalorder %v1157, 2
        %vm1159 = vcmp.eq.s32.totalorder %v1157, 0
        %v1160 = vxor.u32 %v1154, 2147483648
        %v1161 = vsel %vm1159, %v1153, %v1160
        %vm1162 = vcmp.eq.s32.totalorder %v1157, 2
        %v1163 = vxor.u32 %v1153, 2147483648
        %v1164 = vsel %vm1162, %v1163, %v1154
        %v1165 = vsel %vm1158, %v1161, %v1164
        %v1166 = vsel %vm1155, nan, %v1165
        %v1167 = vand.u32 2147483647, %v1056
        %vm1168 = vcmp.le.f32.partialorder %v1167, 0.7853982
        %vm1169 = vcmp.lt.s32.totalorder %v1056, 0
        %v1170 = vand.u32 %v1056, 2139095040
        %v1171 = vshrl.u32 %v1170, 23
        %v1172 = vsub.s32 %v1171, 127
        %v1173 = vand.u32 2147483647, %v1056
        %v1174 = vand.u32 %v1173, 8388607
        %v1175 = vor.u32 %v1174, 8388608
        %v1176 = vsub.s32 0, %v1175
        %v1177 = vadd.s32 %v1172, 1
        %vm1178 = vcmp.gt.s32.totalorder %v1177, 0
        %v1179 = vsel %vm1178, %v1177, 0
        %v1180 = vshrl.u32 %v1179, 5
        %v1181 = vand.u32 %v1179, 31
        %v1182 = vsub.s32 32, %v1181
        %v1183 = vshrl.u32 683565275, %v1182
        %v1184 = vshll.u32 683565275, %v1181
        %v1185 = vshrl.u32 2475754826, %v1182
        %v1186 = vor.u32 %v1184, %v1185
        %v1187 = vshll.u32 2475754826, %v1181
        %v1188 = vshrl.u32 2131351028, %v1182
        %v1189 = vor.u32 %v1187, %v1188
        %v1190 = vshll.u32 2131351028, %v1181
        %v1191 = vshrl.u32 2102212464, %v1182
        %v1192 = vor.u32 %v1190, %v1191
        %v1193 = vshll.u32 2102212464, %v1181
        %v1194 = vshrl.u32 920167782, %v1182
        %v1195 = vor.u32 %v1193, %v1194
        %v1196 = vshll.u32 920167782, %v1181
        %v1197 = vshrl.u32 1326507024, %v1182
        %v1198 = vor.u32 %v1196, %v1197
        %vm1199 = vcmp.lt.s32.totalorder %v1180, 1
        %vm1200 = vcmp.lt.s32.totalorder %v1180, 2
        %vm1201 = vcmp.lt.s32.totalorder %v1180, 3
        %vm1202 = vcmp.lt.s32.totalorder %v1180, 4
        %v1203 = vsel %vm1199, %v1183, %v1186
        %v1204 = vsel %vm1202, %v1192, 2102212464
        %v1205 = vsel %vm1201, %v1189, %v1204
        %v1206 = vsel %vm1200, %v1203, %v1205
        %v1207 = vsel %vm1199, %v1186, %v1189
        %v1208 = vsel %vm1202, %v1195, 920167782
        %v1209 = vsel %vm1201, %v1192, %v1208
        %v1210 = vsel %vm1200, %v1207, %v1209
        %v1211 = vsel %vm1199, %v1189, %v1192
        %v1212 = vsel %vm1202, %v1198, 1326507024
        %v1213 = vsel %vm1201, %v1195, %v1212
        %v1214 = vsel %vm1200, %v1211, %v1213
        %v1215 = vshll.u32 %v1175, 8
        %v1216 = vmul.u32.u64.compose %v1215, %v1214
        %v1217 = vextract.low.u32 %v1216
        %v1218 = vextract.high.u32 %v1216
        %v1219 = vmul.u32.u64.compose %v1215, %v1210
        %v1220 = vextract.low.u32 %v1219
        %v1221 = vextract.high.u32 %v1219
        %v1222 = vmul.u32 %v1215, %v1206
        %v1223 = vadd.s32 %v1218, %v1220
        %vm1224 = vc.u32 %v1218, %v1220
        %v1225 = vadd.s32 %v1221, 1
        %v1226 = vsel %vm1224, %v1225, %v1221
        %v1227 = vadd.s32 %v1222, %v1226
        %v1228 = vadd.s32 %v1227, 536870912
        %v1229 = vshrl.u32 %v1228, 30
        %v1230 = vshll.u32 %v1229, 30
        %v1231 = vsub.s32 %v1227, %v1230
        %vm1232 = vcmp.lt.s32.totalorder %v1231, 0
        %v1233 = vsub.s32 0, %v1231
        %v1234 = vsel %vm1232, %v1233, %v1231
        %v1235 = vclz %v1234
        %v1236 = vsub.s32 %v1235, 2
        %vm1237 = vcmp.gt.s32.totalorder 0, %v1236
        %v1238 = vsel %vm1237, 0, %v1236
        %v1239 = vsub.s32 32, %v1238
        %v1240 = vshll.u32 %v1231, %v1238
        %v1241 = vshrl.u32 %v1223, %v1239
        %v1242 = vor.u32 %v1240, %v1241
        %v1243 = vsub.s32 4294967266, %v1238
        %v1244 = vadd.s32 %v1243, 127
        %v1245 = vshll.u32 %v1244, 23
        %v1246 = vor.u32 4788187, %v1245
        %v1247 = vand.u32 2147483647, %v1246
        %v1249 = vcvt.s32.f32 %v1242
        %v1250 = vmul.f32 %v1249, %v1247
        %v1251 = vxor.u32 %v1250, 2147483648
        %v1252 = vsel %vm1169, %v1251, %v1250
        %v1253 = vsub.s32 4, %v1229
        %v1254 = vsel %vm1169, %v1253, %v1229
        %v1255 = vsel %vm1168, %v1056, %v1252
        %v1256 = vsel %vm1168, 0, %v1254
        %v1257 = vcosq.f32.pop %v1255
        %v1258 = vsinq.f32.pop %v1255
        %vm1259 = vweird.f32 %v1056
        %v1260 = vadd.s32 %v1256, 3
        %v1261 = vand.u32 %v1260, 3
        %vm1262 = vcmp.lt.s32.totalorder %v1261, 2
        %vm1263 = vcmp.eq.s32.totalorder %v1261, 0
        %v1264 = vxor.u32 %v1258, 2147483648
        %v1265 = vsel %vm1263, %v1257, %v1264
        %vm1266 = vcmp.eq.s32.totalorder %v1261, 2
        %v1267 = vxor.u32 %v1257, 2147483648
        %v1268 = vsel %vm1266, %v1267, %v1258
        %v1269 = vsel %vm1262, %v1265, %v1268
        %v1270 = vsel %vm1259, nan, %v1269
        %v1271 = vand.u32 2147483647, %v1057
        %vm1272 = vcmp.le.f32.partialorder %v1271, 0.7853982
        %vm1273 = vcmp.lt.s32.totalorder %v1057, 0
        %v1274 = vand.u32 %v1057, 2139095040
        %v1275 = vshrl.u32 %v1274, 23
        %v1276 = vsub.s32 %v1275, 127
        %v1277 = vand.u32 2147483647, %v1057
        %v1278 = vand.u32 %v1277, 8388607
        %v1279 = vor.u32 %v1278, 8388608
        %v1280 = vsub.s32 0, %v1279
        %v1281 = vadd.s32 %v1276, 1
        %vm1282 = vcmp.gt.s32.totalorder %v1281, 0
        %v1283 = vsel %vm1282, %v1281, 0
        %v1284 = vshrl.u32 %v1283, 5
        %v1285 = vand.u32 %v1283, 31
        %v1286 = vsub.s32 32, %v1285
        %v1287 = vshrl.u32 683565275, %v1286
        %v1288 = vshll.u32 683565275, %v1285
        %v1289 = vshrl.u32 2475754826, %v1286
        %v1290 = vor.u32 %v1288, %v1289
        %v1291 = vshll.u32 2475754826, %v1285
        %v1292 = vshrl.u32 2131351028, %v1286
        %v1293 = vor.u32 %v1291, %v1292
        %v1294 = vshll.u32 2131351028, %v1285
        %v1295 = vshrl.u32 2102212464, %v1286
        %v1296 = vor.u32 %v1294, %v1295
        %v1297 = vshll.u32 2102212464, %v1285
        %v1298 = vshrl.u32 920167782, %v1286
        %v1299 = vor.u32 %v1297, %v1298
        %v1300 = vshll.u32 920167782, %v1285
        %v1301 = vshrl.u32 1326507024, %v1286
        %v1302 = vor.u32 %v1300, %v1301
        %vm1303 = vcmp.lt.s32.totalorder %v1284, 1
        %vm1304 = vcmp.lt.s32.totalorder %v1284, 2
        %vm1305 = vcmp.lt.s32.totalorder %v1284, 3
        %vm1306 = vcmp.lt.s32.totalorder %v1284, 4
        %v1307 = vsel %vm1303, %v1287, %v1290
        %v1308 = vsel %vm1306, %v1296, 2102212464
        %v1309 = vsel %vm1305, %v1293, %v1308
        %v1310 = vsel %vm1304, %v1307, %v1309
        %v1311 = vsel %vm1303, %v1290, %v1293
        %v1312 = vsel %vm1306, %v1299, 920167782
        %v1313 = vsel %vm1305, %v1296, %v1312
        %v1314 = vsel %vm1304, %v1311, %v1313
        %v1315 = vsel %vm1303, %v1293, %v1296
        %v1316 = vsel %vm1306, %v1302, 1326507024
        %v1317 = vsel %vm1305, %v1299, %v1316
        %v1318 = vsel %vm1304, %v1315, %v1317
        %v1319 = vshll.u32 %v1279, 8
        %v1320 = vmul.u32.u64.compose %v1319, %v1318
        %v1321 = vextract.low.u32 %v1320
        %v1322 = vextract.high.u32 %v1320
        %v1323 = vmul.u32.u64.compose %v1319, %v1314
        %v1324 = vextract.low.u32 %v1323
        %v1325 = vextract.high.u32 %v1323
        %v1326 = vmul.u32 %v1319, %v1310
        %v1327 = vadd.s32 %v1322, %v1324
        %vm1328 = vc.u32 %v1322, %v1324
        %v1329 = vadd.s32 %v1325, 1
        %v1330 = vsel %vm1328, %v1329, %v1325
        %v1331 = vadd.s32 %v1326, %v1330
        %v1332 = vadd.s32 %v1331, 536870912
        %v1333 = vshrl.u32 %v1332, 30
        %v1334 = vshll.u32 %v1333, 30
        %v1335 = vsub.s32 %v1331, %v1334
        %vm1336 = vcmp.lt.s32.totalorder %v1335, 0
        %v1337 = vsub.s32 0, %v1335
        %v1338 = vsel %vm1336, %v1337, %v1335
        %v1339 = vclz %v1338
        %v1340 = vsub.s32 %v1339, 2
        %vm1341 = vcmp.gt.s32.totalorder 0, %v1340
        %v1342 = vsel %vm1341, 0, %v1340
        %v1343 = vsub.s32 32, %v1342
        %v1344 = vshll.u32 %v1335, %v1342
        %v1345 = vshrl.u32 %v1327, %v1343
        %v1346 = vor.u32 %v1344, %v1345
        %v1347 = vsub.s32 4294967266, %v1342
        %v1348 = vadd.s32 %v1347, 127
        %v1349 = vshll.u32 %v1348, 23
        %v1350 = vor.u32 4788187, %v1349
        %v1351 = vand.u32 2147483647, %v1350
        %v1353 = vcvt.s32.f32 %v1346
        %v1354 = vmul.f32 %v1353, %v1351
        %v1355 = vxor.u32 %v1354, 2147483648
        %v1356 = vsel %vm1273, %v1355, %v1354
        %v1357 = vsub.s32 4, %v1333
        %v1358 = vsel %vm1273, %v1357, %v1333
        %v1359 = vsel %vm1272, %v1057, %v1356
        %v1360 = vsel %vm1272, 0, %v1358
        %v1361 = vcosq.f32.pop %v1359
        %v1362 = vsinq.f32.pop %v1359
        %vm1363 = vweird.f32 %v1057
        %v1364 = vadd.s32 %v1360, 3
        %v1365 = vand.u32 %v1364, 3
        %vm1366 = vcmp.lt.s32.totalorder %v1365, 2
        %vm1367 = vcmp.eq.s32.totalorder %v1365, 0
        %v1368 = vxor.u32 %v1362, 2147483648
        %v1369 = vsel %vm1367, %v1361, %v1368
        %vm1370 = vcmp.eq.s32.totalorder %v1365, 2
        %v1371 = vxor.u32 %v1361, 2147483648
        %v1372 = vsel %vm1370, %v1371, %v1362
        %v1373 = vsel %vm1366, %v1369, %v1372
        %v1374 = vsel %vm1363, nan, %v1373
        %v1375 = vand.u32 2147483647, %v1058
        %vm1376 = vcmp.le.f32.partialorder %v1375, 0.7853982
        %vm1377 = vcmp.lt.s32.totalorder %v1058, 0
        %v1378 = vand.u32 %v1058, 2139095040
        %v1379 = vshrl.u32 %v1378, 23
        %v1380 = vsub.s32 %v1379, 127
        %v1381 = vand.u32 2147483647, %v1058
        %v1382 = vand.u32 %v1381, 8388607
        %v1383 = vor.u32 %v1382, 8388608
        %v1384 = vsub.s32 0, %v1383
        %v1385 = vadd.s32 %v1380, 1
        %vm1386 = vcmp.gt.s32.totalorder %v1385, 0
        %v1387 = vsel %vm1386, %v1385, 0
        %v1388 = vshrl.u32 %v1387, 5
        %v1389 = vand.u32 %v1387, 31
        %v1390 = vsub.s32 32, %v1389
        %v1391 = vshrl.u32 683565275, %v1390
        %v1392 = vshll.u32 683565275, %v1389
        %v1393 = vshrl.u32 2475754826, %v1390
        %v1394 = vor.u32 %v1392, %v1393
        %v1395 = vshll.u32 2475754826, %v1389
        %v1396 = vshrl.u32 2131351028, %v1390
        %v1397 = vor.u32 %v1395, %v1396
        %v1398 = vshll.u32 2131351028, %v1389
        %v1399 = vshrl.u32 2102212464, %v1390
        %v1400 = vor.u32 %v1398, %v1399
        %v1401 = vshll.u32 2102212464, %v1389
        %v1402 = vshrl.u32 920167782, %v1390
        %v1403 = vor.u32 %v1401, %v1402
        %v1404 = vshll.u32 920167782, %v1389
        %v1405 = vshrl.u32 1326507024, %v1390
        %v1406 = vor.u32 %v1404, %v1405
        %vm1407 = vcmp.lt.s32.totalorder %v1388, 1
        %vm1408 = vcmp.lt.s32.totalorder %v1388, 2
        %vm1409 = vcmp.lt.s32.totalorder %v1388, 3
        %vm1410 = vcmp.lt.s32.totalorder %v1388, 4
        %v1411 = vsel %vm1407, %v1391, %v1394
        %v1412 = vsel %vm1410, %v1400, 2102212464
        %v1413 = vsel %vm1409, %v1397, %v1412
        %v1414 = vsel %vm1408, %v1411, %v1413
        %v1415 = vsel %vm1407, %v1394, %v1397
        %v1416 = vsel %vm1410, %v1403, 920167782
        %v1417 = vsel %vm1409, %v1400, %v1416
        %v1418 = vsel %vm1408, %v1415, %v1417
        %v1419 = vsel %vm1407, %v1397, %v1400
        %v1420 = vsel %vm1410, %v1406, 1326507024
        %v1421 = vsel %vm1409, %v1403, %v1420
        %v1422 = vsel %vm1408, %v1419, %v1421
        %v1423 = vshll.u32 %v1383, 8
        %v1424 = vmul.u32.u64.compose %v1423, %v1422
        %v1425 = vextract.low.u32 %v1424
        %v1426 = vextract.high.u32 %v1424
        %v1427 = vmul.u32.u64.compose %v1423, %v1418
        %v1428 = vextract.low.u32 %v1427
        %v1429 = vextract.high.u32 %v1427
        %v1430 = vmul.u32 %v1423, %v1414
        %v1431 = vadd.s32 %v1426, %v1428
        %vm1432 = vc.u32 %v1426, %v1428
        %v1433 = vadd.s32 %v1429, 1
        %v1434 = vsel %vm1432, %v1433, %v1429
        %v1435 = vadd.s32 %v1430, %v1434
        %v1436 = vadd.s32 %v1435, 536870912
        %v1437 = vshrl.u32 %v1436, 30
        %v1438 = vshll.u32 %v1437, 30
        %v1439 = vsub.s32 %v1435, %v1438
        %vm1440 = vcmp.lt.s32.totalorder %v1439, 0
        %v1441 = vsub.s32 0, %v1439
        %v1442 = vsel %vm1440, %v1441, %v1439
        %v1443 = vclz %v1442
        %v1444 = vsub.s32 %v1443, 2
        %vm1445 = vcmp.gt.s32.totalorder 0, %v1444
        %v1446 = vsel %vm1445, 0, %v1444
        %v1447 = vsub.s32 32, %v1446
        %v1448 = vshll.u32 %v1439, %v1446
        %v1449 = vshrl.u32 %v1431, %v1447
        %v1450 = vor.u32 %v1448, %v1449
        %v1451 = vsub.s32 4294967266, %v1446
        %v1452 = vadd.s32 %v1451, 127
        %v1453 = vshll.u32 %v1452, 23
        %v1454 = vor.u32 4788187, %v1453
        %v1455 = vand.u32 2147483647, %v1454
        %v1457 = vcvt.s32.f32 %v1450
        %v1458 = vmul.f32 %v1457, %v1455
        %v1459 = vxor.u32 %v1458, 2147483648
        %v1460 = vsel %vm1377, %v1459, %v1458
        %v1461 = vsub.s32 4, %v1437
        %v1462 = vsel %vm1377, %v1461, %v1437
        %v1463 = vsel %vm1376, %v1058, %v1460
        %v1464 = vsel %vm1376, 0, %v1462
        %v1465 = vcosq.f32.pop %v1463
        %v1466 = vsinq.f32.pop %v1463
        %vm1467 = vweird.f32 %v1058
        %v1468 = vadd.s32 %v1464, 3
        %v1469 = vand.u32 %v1468, 3
        %vm1470 = vcmp.lt.s32.totalorder %v1469, 2
        %vm1471 = vcmp.eq.s32.totalorder %v1469, 0
        %v1472 = vxor.u32 %v1466, 2147483648
        %v1473 = vsel %vm1471, %v1465, %v1472
        %vm1474 = vcmp.eq.s32.totalorder %v1469, 2
        %v1475 = vxor.u32 %v1465, 2147483648
        %v1476 = vsel %vm1474, %v1475, %v1466
        %v1477 = vsel %vm1470, %v1473, %v1476
        %v1478 = vsel %vm1467, nan, %v1477
        %v1479 = vand.u32 2147483647, %v1059
        %vm1480 = vcmp.le.f32.partialorder %v1479, 0.7853982
        %vm1481 = vcmp.lt.s32.totalorder %v1059, 0
        %v1482 = vand.u32 %v1059, 2139095040
        %v1483 = vshrl.u32 %v1482, 23
        %v1484 = vsub.s32 %v1483, 127
        %v1485 = vand.u32 2147483647, %v1059
        %v1486 = vand.u32 %v1485, 8388607
        %v1487 = vor.u32 %v1486, 8388608
        %v1488 = vsub.s32 0, %v1487
        %v1489 = vadd.s32 %v1484, 1
        %vm1490 = vcmp.gt.s32.totalorder %v1489, 0
        %v1491 = vsel %vm1490, %v1489, 0
        %v1492 = vshrl.u32 %v1491, 5
        %v1493 = vand.u32 %v1491, 31
        %v1494 = vsub.s32 32, %v1493
        %v1495 = vshrl.u32 683565275, %v1494
        %v1496 = vshll.u32 683565275, %v1493
        %v1497 = vshrl.u32 2475754826, %v1494
        %v1498 = vor.u32 %v1496, %v1497
        %v1499 = vshll.u32 2475754826, %v1493
        %v1500 = vshrl.u32 2131351028, %v1494
        %v1501 = vor.u32 %v1499, %v1500
        %v1502 = vshll.u32 2131351028, %v1493
        %v1503 = vshrl.u32 2102212464, %v1494
        %v1504 = vor.u32 %v1502, %v1503
        %v1505 = vshll.u32 2102212464, %v1493
        %v1506 = vshrl.u32 920167782, %v1494
        %v1507 = vor.u32 %v1505, %v1506
        %v1508 = vshll.u32 920167782, %v1493
        %v1509 = vshrl.u32 1326507024, %v1494
        %v1510 = vor.u32 %v1508, %v1509
        %vm1511 = vcmp.lt.s32.totalorder %v1492, 1
        %vm1512 = vcmp.lt.s32.totalorder %v1492, 2
        %vm1513 = vcmp.lt.s32.totalorder %v1492, 3
        %vm1514 = vcmp.lt.s32.totalorder %v1492, 4
        %v1515 = vsel %vm1511, %v1495, %v1498
        %v1516 = vsel %vm1514, %v1504, 2102212464
        %v1517 = vsel %vm1513, %v1501, %v1516
        %v1518 = vsel %vm1512, %v1515, %v1517
        %v1519 = vsel %vm1511, %v1498, %v1501
        %v1520 = vsel %vm1514, %v1507, 920167782
        %v1521 = vsel %vm1513, %v1504, %v1520
        %v1522 = vsel %vm1512, %v1519, %v1521
        %v1523 = vsel %vm1511, %v1501, %v1504
        %v1524 = vsel %vm1514, %v1510, 1326507024
        %v1525 = vsel %vm1513, %v1507, %v1524
        %v1526 = vsel %vm1512, %v1523, %v1525
        %v1527 = vshll.u32 %v1487, 8
        %v1528 = vmul.u32.u64.compose %v1527, %v1526
        %v1529 = vextract.low.u32 %v1528
        %v1530 = vextract.high.u32 %v1528
        %v1531 = vmul.u32.u64.compose %v1527, %v1522
        %v1532 = vextract.low.u32 %v1531
        %v1533 = vextract.high.u32 %v1531
        %v1534 = vmul.u32 %v1527, %v1518
        %v1535 = vadd.s32 %v1530, %v1532
        %vm1536 = vc.u32 %v1530, %v1532
        %v1537 = vadd.s32 %v1533, 1
        %v1538 = vsel %vm1536, %v1537, %v1533
        %v1539 = vadd.s32 %v1534, %v1538
        %v1540 = vadd.s32 %v1539, 536870912
        %v1541 = vshrl.u32 %v1540, 30
        %v1542 = vshll.u32 %v1541, 30
        %v1543 = vsub.s32 %v1539, %v1542
        %vm1544 = vcmp.lt.s32.totalorder %v1543, 0
        %v1545 = vsub.s32 0, %v1543
        %v1546 = vsel %vm1544, %v1545, %v1543
        %v1547 = vclz %v1546
        %v1548 = vsub.s32 %v1547, 2
        %vm1549 = vcmp.gt.s32.totalorder 0, %v1548
        %v1550 = vsel %vm1549, 0, %v1548
        %v1551 = vsub.s32 32, %v1550
        %v1552 = vshll.u32 %v1543, %v1550
        %v1553 = vshrl.u32 %v1535, %v1551
        %v1554 = vor.u32 %v1552, %v1553
        %v1555 = vsub.s32 4294967266, %v1550
        %v1556 = vadd.s32 %v1555, 127
        %v1557 = vshll.u32 %v1556, 23
        %v1558 = vor.u32 4788187, %v1557
        %v1559 = vand.u32 2147483647, %v1558
        %v1561 = vcvt.s32.f32 %v1554
        %v1562 = vmul.f32 %v1561, %v1559
        %v1563 = vxor.u32 %v1562, 2147483648
        %v1564 = vsel %vm1481, %v1563, %v1562
        %v1565 = vsub.s32 4, %v1541
        %v1566 = vsel %vm1481, %v1565, %v1541
        %v1567 = vsel %vm1480, %v1059, %v1564
        %v1568 = vsel %vm1480, 0, %v1566
        %v1569 = vcosq.f32.pop %v1567
        %v1570 = vsinq.f32.pop %v1567
        %vm1571 = vweird.f32 %v1059
        %v1572 = vadd.s32 %v1568, 3
        %v1573 = vand.u32 %v1572, 3
        %vm1574 = vcmp.lt.s32.totalorder %v1573, 2
        %vm1575 = vcmp.eq.s32.totalorder %v1573, 0
        %v1576 = vxor.u32 %v1570, 2147483648
        %v1577 = vsel %vm1575, %v1569, %v1576
        %vm1578 = vcmp.eq.s32.totalorder %v1573, 2
        %v1579 = vxor.u32 %v1569, 2147483648
        %v1580 = vsel %vm1578, %v1579, %v1570
        %v1581 = vsel %vm1574, %v1577, %v1580
        %v1582 = vsel %vm1571, nan, %v1581
        %v1583 = vand.u32 2147483647, %v1060
        %vm1584 = vcmp.le.f32.partialorder %v1583, 0.7853982
        %vm1585 = vcmp.lt.s32.totalorder %v1060, 0
        %v1586 = vand.u32 %v1060, 2139095040
        %v1587 = vshrl.u32 %v1586, 23
        %v1588 = vsub.s32 %v1587, 127
        %v1589 = vand.u32 2147483647, %v1060
        %v1590 = vand.u32 %v1589, 8388607
        %v1591 = vor.u32 %v1590, 8388608
        %v1592 = vsub.s32 0, %v1591
        %v1593 = vadd.s32 %v1588, 1
        %vm1594 = vcmp.gt.s32.totalorder %v1593, 0
        %v1595 = vsel %vm1594, %v1593, 0
        %v1596 = vshrl.u32 %v1595, 5
        %v1597 = vand.u32 %v1595, 31
        %v1598 = vsub.s32 32, %v1597
        %v1599 = vshrl.u32 683565275, %v1598
        %v1600 = vshll.u32 683565275, %v1597
        %v1601 = vshrl.u32 2475754826, %v1598
        %v1602 = vor.u32 %v1600, %v1601
        %v1603 = vshll.u32 2475754826, %v1597
        %v1604 = vshrl.u32 2131351028, %v1598
        %v1605 = vor.u32 %v1603, %v1604
        %v1606 = vshll.u32 2131351028, %v1597
        %v1607 = vshrl.u32 2102212464, %v1598
        %v1608 = vor.u32 %v1606, %v1607
        %v1609 = vshll.u32 2102212464, %v1597
        %v1610 = vshrl.u32 920167782, %v1598
        %v1611 = vor.u32 %v1609, %v1610
        %v1612 = vshll.u32 920167782, %v1597
        %v1613 = vshrl.u32 1326507024, %v1598
        %v1614 = vor.u32 %v1612, %v1613
        %vm1615 = vcmp.lt.s32.totalorder %v1596, 1
        %vm1616 = vcmp.lt.s32.totalorder %v1596, 2
        %vm1617 = vcmp.lt.s32.totalorder %v1596, 3
        %vm1618 = vcmp.lt.s32.totalorder %v1596, 4
        %v1619 = vsel %vm1615, %v1599, %v1602
        %v1620 = vsel %vm1618, %v1608, 2102212464
        %v1621 = vsel %vm1617, %v1605, %v1620
        %v1622 = vsel %vm1616, %v1619, %v1621
        %v1623 = vsel %vm1615, %v1602, %v1605
        %v1624 = vsel %vm1618, %v1611, 920167782
        %v1625 = vsel %vm1617, %v1608, %v1624
        %v1626 = vsel %vm1616, %v1623, %v1625
        %v1627 = vsel %vm1615, %v1605, %v1608
        %v1628 = vsel %vm1618, %v1614, 1326507024
        %v1629 = vsel %vm1617, %v1611, %v1628
        %v1630 = vsel %vm1616, %v1627, %v1629
        %v1631 = vshll.u32 %v1591, 8
        %v1632 = vmul.u32.u64.compose %v1631, %v1630
        %v1633 = vextract.low.u32 %v1632
        %v1634 = vextract.high.u32 %v1632
        %v1635 = vmul.u32.u64.compose %v1631, %v1626
        %v1636 = vextract.low.u32 %v1635
        %v1637 = vextract.high.u32 %v1635
        %v1638 = vmul.u32 %v1631, %v1622
        %v1639 = vadd.s32 %v1634, %v1636
        %vm1640 = vc.u32 %v1634, %v1636
        %v1641 = vadd.s32 %v1637, 1
        %v1642 = vsel %vm1640, %v1641, %v1637
        %v1643 = vadd.s32 %v1638, %v1642
        %v1644 = vadd.s32 %v1643, 536870912
        %v1645 = vshrl.u32 %v1644, 30
        %v1646 = vshll.u32 %v1645, 30
        %v1647 = vsub.s32 %v1643, %v1646
        %vm1648 = vcmp.lt.s32.totalorder %v1647, 0
        %v1649 = vsub.s32 0, %v1647
        %v1650 = vsel %vm1648, %v1649, %v1647
        %v1651 = vclz %v1650
        %v1652 = vsub.s32 %v1651, 2
        %vm1653 = vcmp.gt.s32.totalorder 0, %v1652
        %v1654 = vsel %vm1653, 0, %v1652
        %v1655 = vsub.s32 32, %v1654
        %v1656 = vshll.u32 %v1647, %v1654
        %v1657 = vshrl.u32 %v1639, %v1655
        %v1658 = vor.u32 %v1656, %v1657
        %v1659 = vsub.s32 4294967266, %v1654
        %v1660 = vadd.s32 %v1659, 127
        %v1661 = vshll.u32 %v1660, 23
        %v1662 = vor.u32 4788187, %v1661
        %v1663 = vand.u32 2147483647, %v1662
        %v1665 = vcvt.s32.f32 %v1658
        %v1666 = vmul.f32 %v1665, %v1663
        %v1667 = vxor.u32 %v1666, 2147483648
        %v1668 = vsel %vm1585, %v1667, %v1666
        %v1669 = vsub.s32 4, %v1645
        %v1670 = vsel %vm1585, %v1669, %v1645
        %v1671 = vsel %vm1584, %v1060, %v1668
        %v1672 = vsel %vm1584, 0, %v1670
        %v1673 = vcosq.f32.pop %v1671
        %v1674 = vsinq.f32.pop %v1671
        %vm1675 = vweird.f32 %v1060
        %v1676 = vadd.s32 %v1672, 3
        %v1677 = vand.u32 %v1676, 3
        %vm1678 = vcmp.lt.s32.totalorder %v1677, 2
        %vm1679 = vcmp.eq.s32.totalorder %v1677, 0
        %v1680 = vxor.u32 %v1674, 2147483648
        %v1681 = vsel %vm1679, %v1673, %v1680
        %vm1682 = vcmp.eq.s32.totalorder %v1677, 2
        %v1683 = vxor.u32 %v1673, 2147483648
        %v1684 = vsel %vm1682, %v1683, %v1674
        %v1685 = vsel %vm1678, %v1681, %v1684
        %v1686 = vsel %vm1675, nan, %v1685
        %v1687 = vand.u32 2147483647, %v1061
        %vm1688 = vcmp.le.f32.partialorder %v1687, 0.7853982
        %vm1689 = vcmp.lt.s32.totalorder %v1061, 0
        %v1690 = vand.u32 %v1061, 2139095040
        %v1691 = vshrl.u32 %v1690, 23
        %v1692 = vsub.s32 %v1691, 127
        %v1693 = vand.u32 2147483647, %v1061
        %v1694 = vand.u32 %v1693, 8388607
        %v1695 = vor.u32 %v1694, 8388608
        %v1696 = vsub.s32 0, %v1695
        %v1697 = vadd.s32 %v1692, 1
        %vm1698 = vcmp.gt.s32.totalorder %v1697, 0
        %v1699 = vsel %vm1698, %v1697, 0
        %v1700 = vshrl.u32 %v1699, 5
        %v1701 = vand.u32 %v1699, 31
        %v1702 = vsub.s32 32, %v1701
        %v1703 = vshrl.u32 683565275, %v1702
        %v1704 = vshll.u32 683565275, %v1701
        %v1705 = vshrl.u32 2475754826, %v1702
        %v1706 = vor.u32 %v1704, %v1705
        %v1707 = vshll.u32 2475754826, %v1701
        %v1708 = vshrl.u32 2131351028, %v1702
        %v1709 = vor.u32 %v1707, %v1708
        %v1710 = vshll.u32 2131351028, %v1701
        %v1711 = vshrl.u32 2102212464, %v1702
        %v1712 = vor.u32 %v1710, %v1711
        %v1713 = vshll.u32 2102212464, %v1701
        %v1714 = vshrl.u32 920167782, %v1702
        %v1715 = vor.u32 %v1713, %v1714
        %v1716 = vshll.u32 920167782, %v1701
        %v1717 = vshrl.u32 1326507024, %v1702
        %v1718 = vor.u32 %v1716, %v1717
        %vm1719 = vcmp.lt.s32.totalorder %v1700, 1
        %vm1720 = vcmp.lt.s32.totalorder %v1700, 2
        %vm1721 = vcmp.lt.s32.totalorder %v1700, 3
        %vm1722 = vcmp.lt.s32.totalorder %v1700, 4
        %v1723 = vsel %vm1719, %v1703, %v1706
        %v1724 = vsel %vm1722, %v1712, 2102212464
        %v1725 = vsel %vm1721, %v1709, %v1724
        %v1726 = vsel %vm1720, %v1723, %v1725
        %v1727 = vsel %vm1719, %v1706, %v1709
        %v1728 = vsel %vm1722, %v1715, 920167782
        %v1729 = vsel %vm1721, %v1712, %v1728
        %v1730 = vsel %vm1720, %v1727, %v1729
        %v1731 = vsel %vm1719, %v1709, %v1712
        %v1732 = vsel %vm1722, %v1718, 1326507024
        %v1733 = vsel %vm1721, %v1715, %v1732
        %v1734 = vsel %vm1720, %v1731, %v1733
        %v1735 = vshll.u32 %v1695, 8
        %v1736 = vmul.u32.u64.compose %v1735, %v1734
        %v1737 = vextract.low.u32 %v1736
        %v1738 = vextract.high.u32 %v1736
        %v1739 = vmul.u32.u64.compose %v1735, %v1730
        %v1740 = vextract.low.u32 %v1739
        %v1741 = vextract.high.u32 %v1739
        %v1742 = vmul.u32 %v1735, %v1726
        %v1743 = vadd.s32 %v1738, %v1740
        %vm1744 = vc.u32 %v1738, %v1740
        %v1745 = vadd.s32 %v1741, 1
        %v1746 = vsel %vm1744, %v1745, %v1741
        %v1747 = vadd.s32 %v1742, %v1746
        %v1748 = vadd.s32 %v1747, 536870912
        %v1749 = vshrl.u32 %v1748, 30
        %v1750 = vshll.u32 %v1749, 30
        %v1751 = vsub.s32 %v1747, %v1750
        %vm1752 = vcmp.lt.s32.totalorder %v1751, 0
        %v1753 = vsub.s32 0, %v1751
        %v1754 = vsel %vm1752, %v1753, %v1751
        %v1755 = vclz %v1754
        %v1756 = vsub.s32 %v1755, 2
        %vm1757 = vcmp.gt.s32.totalorder 0, %v1756
        %v1758 = vsel %vm1757, 0, %v1756
        %v1759 = vsub.s32 32, %v1758
        %v1760 = vshll.u32 %v1751, %v1758
        %v1761 = vshrl.u32 %v1743, %v1759
        %v1762 = vor.u32 %v1760, %v1761
        %v1763 = vsub.s32 4294967266, %v1758
        %v1764 = vadd.s32 %v1763, 127
        %v1765 = vshll.u32 %v1764, 23
        %v1766 = vor.u32 4788187, %v1765
        %v1767 = vand.u32 2147483647, %v1766
        %v1769 = vcvt.s32.f32 %v1762
        %v1770 = vmul.f32 %v1769, %v1767
        %v1771 = vxor.u32 %v1770, 2147483648
        %v1772 = vsel %vm1689, %v1771, %v1770
        %v1773 = vsub.s32 4, %v1749
        %v1774 = vsel %vm1689, %v1773, %v1749
        %v1775 = vsel %vm1688, %v1061, %v1772
        %v1776 = vsel %vm1688, 0, %v1774
        %v1777 = vcosq.f32.pop %v1775
        %v1778 = vsinq.f32.pop %v1775
        %vm1779 = vweird.f32 %v1061
        %v1780 = vadd.s32 %v1776, 3
        %v1781 = vand.u32 %v1780, 3
        %vm1782 = vcmp.lt.s32.totalorder %v1781, 2
        %vm1783 = vcmp.eq.s32.totalorder %v1781, 0
        %v1784 = vxor.u32 %v1778, 2147483648
        %v1785 = vsel %vm1783, %v1777, %v1784
        %vm1786 = vcmp.eq.s32.totalorder %v1781, 2
        %v1787 = vxor.u32 %v1777, 2147483648
        %v1788 = vsel %vm1786, %v1787, %v1778
        %v1789 = vsel %vm1782, %v1785, %v1788
        %v1790 = vsel %vm1779, nan, %v1789
        %v1791 = vand.u32 2147483647, %v1062
        %vm1792 = vcmp.le.f32.partialorder %v1791, 0.7853982
        %vm1793 = vcmp.lt.s32.totalorder %v1062, 0
        %v1794 = vand.u32 %v1062, 2139095040
        %v1795 = vshrl.u32 %v1794, 23
        %v1796 = vsub.s32 %v1795, 127
        %v1797 = vand.u32 2147483647, %v1062
        %v1798 = vand.u32 %v1797, 8388607
        %v1799 = vor.u32 %v1798, 8388608
        %v1800 = vsub.s32 0, %v1799
        %v1801 = vadd.s32 %v1796, 1
        %vm1802 = vcmp.gt.s32.totalorder %v1801, 0
        %v1803 = vsel %vm1802, %v1801, 0
        %v1804 = vshrl.u32 %v1803, 5
        %v1805 = vand.u32 %v1803, 31
        %v1806 = vsub.s32 32, %v1805
        %v1807 = vshrl.u32 683565275, %v1806
        %v1808 = vshll.u32 683565275, %v1805
        %v1809 = vshrl.u32 2475754826, %v1806
        %v1810 = vor.u32 %v1808, %v1809
        %v1811 = vshll.u32 2475754826, %v1805
        %v1812 = vshrl.u32 2131351028, %v1806
        %v1813 = vor.u32 %v1811, %v1812
        %v1814 = vshll.u32 2131351028, %v1805
        %v1815 = vshrl.u32 2102212464, %v1806
        %v1816 = vor.u32 %v1814, %v1815
        %v1817 = vshll.u32 2102212464, %v1805
        %v1818 = vshrl.u32 920167782, %v1806
        %v1819 = vor.u32 %v1817, %v1818
        %v1820 = vshll.u32 920167782, %v1805
        %v1821 = vshrl.u32 1326507024, %v1806
        %v1822 = vor.u32 %v1820, %v1821
        %vm1823 = vcmp.lt.s32.totalorder %v1804, 1
        %vm1824 = vcmp.lt.s32.totalorder %v1804, 2
        %vm1825 = vcmp.lt.s32.totalorder %v1804, 3
        %vm1826 = vcmp.lt.s32.totalorder %v1804, 4
        %v1827 = vsel %vm1823, %v1807, %v1810
        %v1828 = vsel %vm1826, %v1816, 2102212464
        %v1829 = vsel %vm1825, %v1813, %v1828
        %v1830 = vsel %vm1824, %v1827, %v1829
        %v1831 = vsel %vm1823, %v1810, %v1813
        %v1832 = vsel %vm1826, %v1819, 920167782
        %v1833 = vsel %vm1825, %v1816, %v1832
        %v1834 = vsel %vm1824, %v1831, %v1833
        %v1835 = vsel %vm1823, %v1813, %v1816
        %v1836 = vsel %vm1826, %v1822, 1326507024
        %v1837 = vsel %vm1825, %v1819, %v1836
        %v1838 = vsel %vm1824, %v1835, %v1837
        %v1839 = vshll.u32 %v1799, 8
        %v1840 = vmul.u32.u64.compose %v1839, %v1838
        %v1841 = vextract.low.u32 %v1840
        %v1842 = vextract.high.u32 %v1840
        %v1843 = vmul.u32.u64.compose %v1839, %v1834
        %v1844 = vextract.low.u32 %v1843
        %v1845 = vextract.high.u32 %v1843
        %v1846 = vmul.u32 %v1839, %v1830
        %v1847 = vadd.s32 %v1842, %v1844
        %vm1848 = vc.u32 %v1842, %v1844
        %v1849 = vadd.s32 %v1845, 1
        %v1850 = vsel %vm1848, %v1849, %v1845
        %v1851 = vadd.s32 %v1846, %v1850
        %v1852 = vadd.s32 %v1851, 536870912
        %v1853 = vshrl.u32 %v1852, 30
        %v1854 = vshll.u32 %v1853, 30
        %v1855 = vsub.s32 %v1851, %v1854
        %vm1856 = vcmp.lt.s32.totalorder %v1855, 0
        %v1857 = vsub.s32 0, %v1855
        %v1858 = vsel %vm1856, %v1857, %v1855
        %v1859 = vclz %v1858
        %v1860 = vsub.s32 %v1859, 2
        %vm1861 = vcmp.gt.s32.totalorder 0, %v1860
        %v1862 = vsel %vm1861, 0, %v1860
        %v1863 = vsub.s32 32, %v1862
        %v1864 = vshll.u32 %v1855, %v1862
        %v1865 = vshrl.u32 %v1847, %v1863
        %v1866 = vor.u32 %v1864, %v1865
        %v1867 = vsub.s32 4294967266, %v1862
        %v1868 = vadd.s32 %v1867, 127
        %v1869 = vshll.u32 %v1868, 23
        %v1870 = vor.u32 4788187, %v1869
        %v1871 = vand.u32 2147483647, %v1870
        %v1873 = vcvt.s32.f32 %v1866
        %v1874 = vmul.f32 %v1873, %v1871
        %v1875 = vxor.u32 %v1874, 2147483648
        %v1876 = vsel %vm1793, %v1875, %v1874
        %v1877 = vsub.s32 4, %v1853
        %v1878 = vsel %vm1793, %v1877, %v1853
        %v1879 = vsel %vm1792, %v1062, %v1876
        %v1880 = vsel %vm1792, 0, %v1878
        %v1881 = vcosq.f32.pop %v1879
        %v1882 = vsinq.f32.pop %v1879
        %vm1883 = vweird.f32 %v1062
        %v1884 = vadd.s32 %v1880, 3
        %v1885 = vand.u32 %v1884, 3
        %vm1886 = vcmp.lt.s32.totalorder %v1885, 2
        %vm1887 = vcmp.eq.s32.totalorder %v1885, 0
        %v1888 = vxor.u32 %v1882, 2147483648
        %v1889 = vsel %vm1887, %v1881, %v1888
        %vm1890 = vcmp.eq.s32.totalorder %v1885, 2
        %v1891 = vxor.u32 %v1881, 2147483648
        %v1892 = vsel %vm1890, %v1891, %v1882
        %v1893 = vsel %vm1886, %v1889, %v1892
        %v1894 = vsel %vm1883, nan, %v1893
        %v1895 = vld [vmem:[%s8] sm:$0xff]
        %v1896 = vld [vmem:[%s8 + $0x8] sm:$0xff]
        %v1897 = vld [vmem:[%s8 + $0x10] sm:$0xff]
        %v1898 = vld [vmem:[%s8 + $0x18] sm:$0xff]
        %s1899 = scalar_lea.vmem %s9, 32
        %v1900 = vld [vmem:[%s1899] sm:$0xff]
        %v1901 = vld [vmem:[%s1899 + $0x8] sm:$0xff]
        %v1902 = vld [vmem:[%s1899 + $0x10] sm:$0xff]
        %v1903 = vld [vmem:[%s1899 + $0x18] sm:$0xff]
        %1905 = vset.pattern.permute.xlu0 0
        %1906 = vperm.xlu0 %1905, %v1900
        %v1907 = vpop.permute.xlu0 %1906
        %1910 = vset.pattern.permute.xlu0 0
        %1911 = vperm.xlu0 %1910, %v1901
        %v1912 = vpop.permute.xlu0 %1911
        %1915 = vset.pattern.permute.xlu0 0
        %1916 = vperm.xlu0 %1915, %v1902
        %v1917 = vpop.permute.xlu0 %1916
        %1920 = vset.pattern.permute.xlu0 0
        %1921 = vperm.xlu0 %1920, %v1903
        %v1922 = vpop.permute.xlu0 %1921
        %vm1924 = vcmask 261120
        %v1926 = vsel %vm1924, %v1895, 0
        %v1929 = vsel %vm1924, %v1896, 0
        %v1932 = vsel %vm1924, %v1897, 0
        %v1935 = vsel %vm1924, %v1898, 0
        %1937 = vmatprep.subr.mxu0 %v1270
        %1938 = vmatpush1.msra.mxu0 %v1166
        %1939 = vmatprep.subr.mxu0 %v1478
        %1940 = vmatpush1.msra.mxu0 %v1374
        %1941 = vmatprep.subr.mxu0 %v1686
        %1942 = vmatpush1.msra.mxu0 %v1582
        %1943 = vmatprep.subr.mxu0 %v1894
        %1944 = vmatpush1.msra.mxu0 %v1790
        %1945 = vmatprep.subr.mxu0 0.0
        %1946 = vmatpush1.msra.mxu0 0.0
        %1947 = vmatprep.subr.mxu0 0.0
        %1948 = vmatpush1.msra.mxu0 0.0
        %1949 = vmatprep.subr.mxu0 0.0
        %1950 = vmatpush1.msra.mxu0 0.0
        %1951 = vmatprep.subr.mxu0 0.0
        %1952 = vmatpush1.msra.mxu0 0.0
        %1953 = vmatprep.subr.mxu0 0.0
        %1954 = vmatpush1.msra.mxu0 0.0
        %1955 = vmatprep.subr.mxu0 0.0
        %1956 = vmatpush1.msra.mxu0 0.0
        %1957 = vmatprep.subr.mxu0 0.0
        %1958 = vmatpush1.msra.mxu0 0.0
        %1959 = vmatprep.subr.mxu0 0.0
        %1960 = vmatpush1.msra.mxu0 0.0
        %1961 = vmatprep.subr.mxu0 0.0
        %1962 = vmatpush1.msra.mxu0 0.0
        %1963 = vmatprep.subr.mxu0 0.0
        %1964 = vmatpush1.msra.mxu0 0.0
        %1965 = vmatprep.subr.mxu0 0.0
        %1966 = vmatpush1.msra.mxu0 0.0
        %1967 = vmatprep.subr.mxu0 0.0
        %1968 = vmatpush1.msra.mxu0 0.0
        %1969 = vmatprep.subr.mxu0 0.0
        %1970 = vmatpush1.msra.mxu0 0.0
        %1971 = vmatprep.subr.mxu0 0.0
        %1972 = vmatpush1.msra.mxu0 0.0
        %1973 = vmatprep.subr.mxu0 0.0
        %1974 = vmatpush1.msra.mxu0 0.0
        %1975 = vmatprep.subr.mxu0 0.0
        %1976 = vmatpush1.msra.mxu0 0.0
        %1977 = vmatprep.subr.mxu0 0.0
        %1978 = vmatpush1.msra.mxu0 0.0
        %1979 = vmatprep.subr.mxu0 0.0
        %1980 = vmatpush1.msra.mxu0 0.0
        %1981 = vmatprep.subr.mxu0 0.0
        %1982 = vmatpush1.msra.mxu0 0.0
        %1983 = vmatprep.subr.mxu0 0.0
        %1984 = vmatpush1.msra.mxu0 0.0
        %1985 = vmatprep.subr.mxu0 0.0
        %1986 = vmatpush1.msra.mxu0 0.0
        %1987 = vmatprep.subr.mxu0 0.0
        %1988 = vmatpush1.msra.mxu0 0.0
        %1989 = vmatprep.subr.mxu0 0.0
        %1990 = vmatpush1.msra.mxu0 0.0
        %1991 = vmatprep.subr.mxu0 0.0
        %1992 = vmatpush1.msra.mxu0 0.0
        %1993 = vmatprep.subr.mxu0 0.0
        %1994 = vmatpush1.msra.mxu0 0.0
        %1995 = vmatprep.subr.mxu0 0.0
        %1996 = vmatpush1.msra.mxu0 0.0
        %1997 = vmatprep.subr.mxu0 0.0
        %1998 = vmatpush1.msra.mxu0 0.0
        %1999 = vmatprep.subr.mxu0 0.0
        %2000 = vmatpush1.msra.mxu0 0.0
        %2001 = vmatprep.mubr.f32.mxu0 0.0
        %2002 = vmatmul.mubr.f32.gmra.mrb[0].mxu0 %v1926
        %v2003 = vpop.f32.mrb[0].mxu0
        %v2004 = vadd.f32 %v1907, %v2003
        %v2005 = vpop.f32.mrb[0].mxu0
        %v2006 = vadd.f32 %v1907, %v2005
        %2007 = vmatprep.mubr.f32.mxu0 0.0
        %2008 = vmatmul.mubr.f32.gmra.mrb[0].mxu0 %v1929
        %v2009 = vpop.f32.mrb[0].mxu0
        %v2010 = vadd.f32 %v1912, %v2009
        %v2011 = vpop.f32.mrb[0].mxu0
        %v2012 = vadd.f32 %v1912, %v2011
        %2013 = vmatprep.mubr.f32.mxu0 0.0
        %2014 = vmatmul.mubr.f32.gmra.mrb[0].mxu0 %v1932
        %v2015 = vpop.f32.mrb[0].mxu0
        %v2016 = vadd.f32 %v1917, %v2015
        %v2017 = vpop.f32.mrb[0].mxu0
        %v2018 = vadd.f32 %v1917, %v2017
        %2019 = vmatprep.mubr.f32.mxu0 0.0
        %2020 = vmatmul.mubr.f32.gmra.mrb[0].mxu0 %v1935
        %v2021 = vpop.f32.mrb[0].mxu0
        %v2022 = vadd.f32 %v1922, %v2021
        %v2023 = vpop.f32.mrb[0].mxu0
        %v2024 = vadd.f32 %v1922, %v2023
        %2025 = vdwg.mxu0
        %v2026 = vand.u32 2147483647, %v2004
        %vm2027 = vcmp.le.f32.partialorder %v2026, 0.7853982
        %vm2028 = vcmp.lt.s32.totalorder %v2004, 0
        %v2029 = vand.u32 %v2004, 2139095040
        %v2030 = vshrl.u32 %v2029, 23
        %v2031 = vsub.s32 %v2030, 127
        %v2032 = vand.u32 2147483647, %v2004
        %v2033 = vand.u32 %v2032, 8388607
        %v2034 = vor.u32 %v2033, 8388608
        %v2035 = vsub.s32 0, %v2034
        %v2036 = vadd.s32 %v2031, 1
        %vm2037 = vcmp.gt.s32.totalorder %v2036, 0
        %v2038 = vsel %vm2037, %v2036, 0
        %v2039 = vshrl.u32 %v2038, 5
        %v2040 = vand.u32 %v2038, 31
        %v2041 = vsub.s32 32, %v2040
        %v2042 = vshrl.u32 683565275, %v2041
        %v2043 = vshll.u32 683565275, %v2040
        %v2044 = vshrl.u32 2475754826, %v2041
        %v2045 = vor.u32 %v2043, %v2044
        %v2046 = vshll.u32 2475754826, %v2040
        %v2047 = vshrl.u32 2131351028, %v2041
        %v2048 = vor.u32 %v2046, %v2047
        %v2049 = vshll.u32 2131351028, %v2040
        %v2050 = vshrl.u32 2102212464, %v2041
        %v2051 = vor.u32 %v2049, %v2050
        %v2052 = vshll.u32 2102212464, %v2040
        %v2053 = vshrl.u32 920167782, %v2041
        %v2054 = vor.u32 %v2052, %v2053
        %v2055 = vshll.u32 920167782, %v2040
        %v2056 = vshrl.u32 1326507024, %v2041
        %v2057 = vor.u32 %v2055, %v2056
        %vm2058 = vcmp.lt.s32.totalorder %v2039, 1
        %vm2059 = vcmp.lt.s32.totalorder %v2039, 2
        %vm2060 = vcmp.lt.s32.totalorder %v2039, 3
        %vm2061 = vcmp.lt.s32.totalorder %v2039, 4
        %v2062 = vsel %vm2058, %v2042, %v2045
        %v2063 = vsel %vm2061, %v2051, 2102212464
        %v2064 = vsel %vm2060, %v2048, %v2063
        %v2065 = vsel %vm2059, %v2062, %v2064
        %v2066 = vsel %vm2058, %v2045, %v2048
        %v2067 = vsel %vm2061, %v2054, 920167782
        %v2068 = vsel %vm2060, %v2051, %v2067
        %v2069 = vsel %vm2059, %v2066, %v2068
        %v2070 = vsel %vm2058, %v2048, %v2051
        %v2071 = vsel %vm2061, %v2057, 1326507024
        %v2072 = vsel %vm2060, %v2054, %v2071
        %v2073 = vsel %vm2059, %v2070, %v2072
        %v2074 = vshll.u32 %v2034, 8
        %v2075 = vmul.u32.u64.compose %v2074, %v2073
        %v2076 = vextract.low.u32 %v2075
        %v2077 = vextract.high.u32 %v2075
        %v2078 = vmul.u32.u64.compose %v2074, %v2069
        %v2079 = vextract.low.u32 %v2078
        %v2080 = vextract.high.u32 %v2078
        %v2081 = vmul.u32 %v2074, %v2065
        %v2082 = vadd.s32 %v2077, %v2079
        %vm2083 = vc.u32 %v2077, %v2079
        %v2084 = vadd.s32 %v2080, 1
        %v2085 = vsel %vm2083, %v2084, %v2080
        %v2086 = vadd.s32 %v2081, %v2085
        %v2087 = vadd.s32 %v2086, 536870912
        %v2088 = vshrl.u32 %v2087, 30
        %v2089 = vshll.u32 %v2088, 30
        %v2090 = vsub.s32 %v2086, %v2089
        %vm2091 = vcmp.lt.s32.totalorder %v2090, 0
        %v2092 = vsub.s32 0, %v2090
        %v2093 = vsel %vm2091, %v2092, %v2090
        %v2094 = vclz %v2093
        %v2095 = vsub.s32 %v2094, 2
        %vm2096 = vcmp.gt.s32.totalorder 0, %v2095
        %v2097 = vsel %vm2096, 0, %v2095
        %v2098 = vsub.s32 32, %v2097
        %v2099 = vshll.u32 %v2090, %v2097
        %v2100 = vshrl.u32 %v2082, %v2098
        %v2101 = vor.u32 %v2099, %v2100
        %v2102 = vsub.s32 4294967266, %v2097
        %v2103 = vadd.s32 %v2102, 127
        %v2104 = vshll.u32 %v2103, 23
        %v2105 = vor.u32 4788187, %v2104
        %v2106 = vand.u32 2147483647, %v2105
        %v2108 = vcvt.s32.f32 %v2101
        %v2109 = vmul.f32 %v2108, %v2106
        %v2110 = vxor.u32 %v2109, 2147483648
        %v2111 = vsel %vm2028, %v2110, %v2109
        %v2112 = vsub.s32 4, %v2088
        %v2113 = vsel %vm2028, %v2112, %v2088
        %v2114 = vsel %vm2027, %v2004, %v2111
        %v2115 = vsel %vm2027, 0, %v2113
        %v2116 = vcosq.f32.pop %v2114
        %v2117 = vsinq.f32.pop %v2114
        %vm2118 = vweird.f32 %v2004
        %v2119 = vadd.s32 %v2115, 3
        %v2120 = vand.u32 %v2119, 3
        %vm2121 = vcmp.lt.s32.totalorder %v2120, 2
        %vm2122 = vcmp.eq.s32.totalorder %v2120, 0
        %v2123 = vxor.u32 %v2117, 2147483648
        %v2124 = vsel %vm2122, %v2116, %v2123
        %vm2125 = vcmp.eq.s32.totalorder %v2120, 2
        %v2126 = vxor.u32 %v2116, 2147483648
        %v2127 = vsel %vm2125, %v2126, %v2117
        %v2128 = vsel %vm2121, %v2124, %v2127
        %v2129 = vsel %vm2118, nan, %v2128
        %v2130 = vand.u32 2147483647, %v2006
        %vm2131 = vcmp.le.f32.partialorder %v2130, 0.7853982
        %vm2132 = vcmp.lt.s32.totalorder %v2006, 0
        %v2133 = vand.u32 %v2006, 2139095040
        %v2134 = vshrl.u32 %v2133, 23
        %v2135 = vsub.s32 %v2134, 127
        %v2136 = vand.u32 2147483647, %v2006
        %v2137 = vand.u32 %v2136, 8388607
        %v2138 = vor.u32 %v2137, 8388608
        %v2139 = vsub.s32 0, %v2138
        %v2140 = vadd.s32 %v2135, 1
        %vm2141 = vcmp.gt.s32.totalorder %v2140, 0
        %v2142 = vsel %vm2141, %v2140, 0
        %v2143 = vshrl.u32 %v2142, 5
        %v2144 = vand.u32 %v2142, 31
        %v2145 = vsub.s32 32, %v2144
        %v2146 = vshrl.u32 683565275, %v2145
        %v2147 = vshll.u32 683565275, %v2144
        %v2148 = vshrl.u32 2475754826, %v2145
        %v2149 = vor.u32 %v2147, %v2148
        %v2150 = vshll.u32 2475754826, %v2144
        %v2151 = vshrl.u32 2131351028, %v2145
        %v2152 = vor.u32 %v2150, %v2151
        %v2153 = vshll.u32 2131351028, %v2144
        %v2154 = vshrl.u32 2102212464, %v2145
        %v2155 = vor.u32 %v2153, %v2154
        %v2156 = vshll.u32 2102212464, %v2144
        %v2157 = vshrl.u32 920167782, %v2145
        %v2158 = vor.u32 %v2156, %v2157
        %v2159 = vshll.u32 920167782, %v2144
        %v2160 = vshrl.u32 1326507024, %v2145
        %v2161 = vor.u32 %v2159, %v2160
        %vm2162 = vcmp.lt.s32.totalorder %v2143, 1
        %vm2163 = vcmp.lt.s32.totalorder %v2143, 2
        %vm2164 = vcmp.lt.s32.totalorder %v2143, 3
        %vm2165 = vcmp.lt.s32.totalorder %v2143, 4
        %v2166 = vsel %vm2162, %v2146, %v2149
        %v2167 = vsel %vm2165, %v2155, 2102212464
        %v2168 = vsel %vm2164, %v2152, %v2167
        %v2169 = vsel %vm2163, %v2166, %v2168
        %v2170 = vsel %vm2162, %v2149, %v2152
        %v2171 = vsel %vm2165, %v2158, 920167782
        %v2172 = vsel %vm2164, %v2155, %v2171
        %v2173 = vsel %vm2163, %v2170, %v2172
        %v2174 = vsel %vm2162, %v2152, %v2155
        %v2175 = vsel %vm2165, %v2161, 1326507024
        %v2176 = vsel %vm2164, %v2158, %v2175
        %v2177 = vsel %vm2163, %v2174, %v2176
        %v2178 = vshll.u32 %v2138, 8
        %v2179 = vmul.u32.u64.compose %v2178, %v2177
        %v2180 = vextract.low.u32 %v2179
        %v2181 = vextract.high.u32 %v2179
        %v2182 = vmul.u32.u64.compose %v2178, %v2173
        %v2183 = vextract.low.u32 %v2182
        %v2184 = vextract.high.u32 %v2182
        %v2185 = vmul.u32 %v2178, %v2169
        %v2186 = vadd.s32 %v2181, %v2183
        %vm2187 = vc.u32 %v2181, %v2183
        %v2188 = vadd.s32 %v2184, 1
        %v2189 = vsel %vm2187, %v2188, %v2184
        %v2190 = vadd.s32 %v2185, %v2189
        %v2191 = vadd.s32 %v2190, 536870912
        %v2192 = vshrl.u32 %v2191, 30
        %v2193 = vshll.u32 %v2192, 30
        %v2194 = vsub.s32 %v2190, %v2193
        %vm2195 = vcmp.lt.s32.totalorder %v2194, 0
        %v2196 = vsub.s32 0, %v2194
        %v2197 = vsel %vm2195, %v2196, %v2194
        %v2198 = vclz %v2197
        %v2199 = vsub.s32 %v2198, 2
        %vm2200 = vcmp.gt.s32.totalorder 0, %v2199
        %v2201 = vsel %vm2200, 0, %v2199
        %v2202 = vsub.s32 32, %v2201
        %v2203 = vshll.u32 %v2194, %v2201
        %v2204 = vshrl.u32 %v2186, %v2202
        %v2205 = vor.u32 %v2203, %v2204
        %v2206 = vsub.s32 4294967266, %v2201
        %v2207 = vadd.s32 %v2206, 127
        %v2208 = vshll.u32 %v2207, 23
        %v2209 = vor.u32 4788187, %v2208
        %v2210 = vand.u32 2147483647, %v2209
        %v2212 = vcvt.s32.f32 %v2205
        %v2213 = vmul.f32 %v2212, %v2210
        %v2214 = vxor.u32 %v2213, 2147483648
        %v2215 = vsel %vm2132, %v2214, %v2213
        %v2216 = vsub.s32 4, %v2192
        %v2217 = vsel %vm2132, %v2216, %v2192
        %v2218 = vsel %vm2131, %v2006, %v2215
        %v2219 = vsel %vm2131, 0, %v2217
        %v2220 = vcosq.f32.pop %v2218
        %v2221 = vsinq.f32.pop %v2218
        %vm2222 = vweird.f32 %v2006
        %v2223 = vadd.s32 %v2219, 3
        %v2224 = vand.u32 %v2223, 3
        %vm2225 = vcmp.lt.s32.totalorder %v2224, 2
        %vm2226 = vcmp.eq.s32.totalorder %v2224, 0
        %v2227 = vxor.u32 %v2221, 2147483648
        %v2228 = vsel %vm2226, %v2220, %v2227
        %vm2229 = vcmp.eq.s32.totalorder %v2224, 2
        %v2230 = vxor.u32 %v2220, 2147483648
        %v2231 = vsel %vm2229, %v2230, %v2221
        %v2232 = vsel %vm2225, %v2228, %v2231
        %v2233 = vsel %vm2222, nan, %v2232
        %v2234 = vand.u32 2147483647, %v2010
        %vm2235 = vcmp.le.f32.partialorder %v2234, 0.7853982
        %vm2236 = vcmp.lt.s32.totalorder %v2010, 0
        %v2237 = vand.u32 %v2010, 2139095040
        %v2238 = vshrl.u32 %v2237, 23
        %v2239 = vsub.s32 %v2238, 127
        %v2240 = vand.u32 2147483647, %v2010
        %v2241 = vand.u32 %v2240, 8388607
        %v2242 = vor.u32 %v2241, 8388608
        %v2243 = vsub.s32 0, %v2242
        %v2244 = vadd.s32 %v2239, 1
        %vm2245 = vcmp.gt.s32.totalorder %v2244, 0
        %v2246 = vsel %vm2245, %v2244, 0
        %v2247 = vshrl.u32 %v2246, 5
        %v2248 = vand.u32 %v2246, 31
        %v2249 = vsub.s32 32, %v2248
        %v2250 = vshrl.u32 683565275, %v2249
        %v2251 = vshll.u32 683565275, %v2248
        %v2252 = vshrl.u32 2475754826, %v2249
        %v2253 = vor.u32 %v2251, %v2252
        %v2254 = vshll.u32 2475754826, %v2248
        %v2255 = vshrl.u32 2131351028, %v2249
        %v2256 = vor.u32 %v2254, %v2255
        %v2257 = vshll.u32 2131351028, %v2248
        %v2258 = vshrl.u32 2102212464, %v2249
        %v2259 = vor.u32 %v2257, %v2258
        %v2260 = vshll.u32 2102212464, %v2248
        %v2261 = vshrl.u32 920167782, %v2249
        %v2262 = vor.u32 %v2260, %v2261
        %v2263 = vshll.u32 920167782, %v2248
        %v2264 = vshrl.u32 1326507024, %v2249
        %v2265 = vor.u32 %v2263, %v2264
        %vm2266 = vcmp.lt.s32.totalorder %v2247, 1
        %vm2267 = vcmp.lt.s32.totalorder %v2247, 2
        %vm2268 = vcmp.lt.s32.totalorder %v2247, 3
        %vm2269 = vcmp.lt.s32.totalorder %v2247, 4
        %v2270 = vsel %vm2266, %v2250, %v2253
        %v2271 = vsel %vm2269, %v2259, 2102212464
        %v2272 = vsel %vm2268, %v2256, %v2271
        %v2273 = vsel %vm2267, %v2270, %v2272
        %v2274 = vsel %vm2266, %v2253, %v2256
        %v2275 = vsel %vm2269, %v2262, 920167782
        %v2276 = vsel %vm2268, %v2259, %v2275
        %v2277 = vsel %vm2267, %v2274, %v2276
        %v2278 = vsel %vm2266, %v2256, %v2259
        %v2279 = vsel %vm2269, %v2265, 1326507024
        %v2280 = vsel %vm2268, %v2262, %v2279
        %v2281 = vsel %vm2267, %v2278, %v2280
        %v2282 = vshll.u32 %v2242, 8
        %v2283 = vmul.u32.u64.compose %v2282, %v2281
        %v2284 = vextract.low.u32 %v2283
        %v2285 = vextract.high.u32 %v2283
        %v2286 = vmul.u32.u64.compose %v2282, %v2277
        %v2287 = vextract.low.u32 %v2286
        %v2288 = vextract.high.u32 %v2286
        %v2289 = vmul.u32 %v2282, %v2273
        %v2290 = vadd.s32 %v2285, %v2287
        %vm2291 = vc.u32 %v2285, %v2287
        %v2292 = vadd.s32 %v2288, 1
        %v2293 = vsel %vm2291, %v2292, %v2288
        %v2294 = vadd.s32 %v2289, %v2293
        %v2295 = vadd.s32 %v2294, 536870912
        %v2296 = vshrl.u32 %v2295, 30
        %v2297 = vshll.u32 %v2296, 30
        %v2298 = vsub.s32 %v2294, %v2297
        %vm2299 = vcmp.lt.s32.totalorder %v2298, 0
        %v2300 = vsub.s32 0, %v2298
        %v2301 = vsel %vm2299, %v2300, %v2298
        %v2302 = vclz %v2301
        %v2303 = vsub.s32 %v2302, 2
        %vm2304 = vcmp.gt.s32.totalorder 0, %v2303
        %v2305 = vsel %vm2304, 0, %v2303
        %v2306 = vsub.s32 32, %v2305
        %v2307 = vshll.u32 %v2298, %v2305
        %v2308 = vshrl.u32 %v2290, %v2306
        %v2309 = vor.u32 %v2307, %v2308
        %v2310 = vsub.s32 4294967266, %v2305
        %v2311 = vadd.s32 %v2310, 127
        %v2312 = vshll.u32 %v2311, 23
        %v2313 = vor.u32 4788187, %v2312
        %v2314 = vand.u32 2147483647, %v2313
        %v2316 = vcvt.s32.f32 %v2309
        %v2317 = vmul.f32 %v2316, %v2314
        %v2318 = vxor.u32 %v2317, 2147483648
        %v2319 = vsel %vm2236, %v2318, %v2317
        %v2320 = vsub.s32 4, %v2296
        %v2321 = vsel %vm2236, %v2320, %v2296
        %v2322 = vsel %vm2235, %v2010, %v2319
        %v2323 = vsel %vm2235, 0, %v2321
        %v2324 = vcosq.f32.pop %v2322
        %v2325 = vsinq.f32.pop %v2322
        %vm2326 = vweird.f32 %v2010
        %v2327 = vadd.s32 %v2323, 3
        %v2328 = vand.u32 %v2327, 3
        %vm2329 = vcmp.lt.s32.totalorder %v2328, 2
        %vm2330 = vcmp.eq.s32.totalorder %v2328, 0
        %v2331 = vxor.u32 %v2325, 2147483648
        %v2332 = vsel %vm2330, %v2324, %v2331
        %vm2333 = vcmp.eq.s32.totalorder %v2328, 2
        %v2334 = vxor.u32 %v2324, 2147483648
        %v2335 = vsel %vm2333, %v2334, %v2325
        %v2336 = vsel %vm2329, %v2332, %v2335
        %v2337 = vsel %vm2326, nan, %v2336
        %v2338 = vand.u32 2147483647, %v2012
        %vm2339 = vcmp.le.f32.partialorder %v2338, 0.7853982
        %vm2340 = vcmp.lt.s32.totalorder %v2012, 0
        %v2341 = vand.u32 %v2012, 2139095040
        %v2342 = vshrl.u32 %v2341, 23
        %v2343 = vsub.s32 %v2342, 127
        %v2344 = vand.u32 2147483647, %v2012
        %v2345 = vand.u32 %v2344, 8388607
        %v2346 = vor.u32 %v2345, 8388608
        %v2347 = vsub.s32 0, %v2346
        %v2348 = vadd.s32 %v2343, 1
        %vm2349 = vcmp.gt.s32.totalorder %v2348, 0
        %v2350 = vsel %vm2349, %v2348, 0
        %v2351 = vshrl.u32 %v2350, 5
        %v2352 = vand.u32 %v2350, 31
        %v2353 = vsub.s32 32, %v2352
        %v2354 = vshrl.u32 683565275, %v2353
        %v2355 = vshll.u32 683565275, %v2352
        %v2356 = vshrl.u32 2475754826, %v2353
        %v2357 = vor.u32 %v2355, %v2356
        %v2358 = vshll.u32 2475754826, %v2352
        %v2359 = vshrl.u32 2131351028, %v2353
        %v2360 = vor.u32 %v2358, %v2359
        %v2361 = vshll.u32 2131351028, %v2352
        %v2362 = vshrl.u32 2102212464, %v2353
        %v2363 = vor.u32 %v2361, %v2362
        %v2364 = vshll.u32 2102212464, %v2352
        %v2365 = vshrl.u32 920167782, %v2353
        %v2366 = vor.u32 %v2364, %v2365
        %v2367 = vshll.u32 920167782, %v2352
        %v2368 = vshrl.u32 1326507024, %v2353
        %v2369 = vor.u32 %v2367, %v2368
        %vm2370 = vcmp.lt.s32.totalorder %v2351, 1
        %vm2371 = vcmp.lt.s32.totalorder %v2351, 2
        %vm2372 = vcmp.lt.s32.totalorder %v2351, 3
        %vm2373 = vcmp.lt.s32.totalorder %v2351, 4
        %v2374 = vsel %vm2370, %v2354, %v2357
        %v2375 = vsel %vm2373, %v2363, 2102212464
        %v2376 = vsel %vm2372, %v2360, %v2375
        %v2377 = vsel %vm2371, %v2374, %v2376
        %v2378 = vsel %vm2370, %v2357, %v2360
        %v2379 = vsel %vm2373, %v2366, 920167782
        %v2380 = vsel %vm2372, %v2363, %v2379
        %v2381 = vsel %vm2371, %v2378, %v2380
        %v2382 = vsel %vm2370, %v2360, %v2363
        %v2383 = vsel %vm2373, %v2369, 1326507024
        %v2384 = vsel %vm2372, %v2366, %v2383
        %v2385 = vsel %vm2371, %v2382, %v2384
        %v2386 = vshll.u32 %v2346, 8
        %v2387 = vmul.u32.u64.compose %v2386, %v2385
        %v2388 = vextract.low.u32 %v2387
        %v2389 = vextract.high.u32 %v2387
        %v2390 = vmul.u32.u64.compose %v2386, %v2381
        %v2391 = vextract.low.u32 %v2390
        %v2392 = vextract.high.u32 %v2390
        %v2393 = vmul.u32 %v2386, %v2377
        %v2394 = vadd.s32 %v2389, %v2391
        %vm2395 = vc.u32 %v2389, %v2391
        %v2396 = vadd.s32 %v2392, 1
        %v2397 = vsel %vm2395, %v2396, %v2392
        %v2398 = vadd.s32 %v2393, %v2397
        %v2399 = vadd.s32 %v2398, 536870912
        %v2400 = vshrl.u32 %v2399, 30
        %v2401 = vshll.u32 %v2400, 30
        %v2402 = vsub.s32 %v2398, %v2401
        %vm2403 = vcmp.lt.s32.totalorder %v2402, 0
        %v2404 = vsub.s32 0, %v2402
        %v2405 = vsel %vm2403, %v2404, %v2402
        %v2406 = vclz %v2405
        %v2407 = vsub.s32 %v2406, 2
        %vm2408 = vcmp.gt.s32.totalorder 0, %v2407
        %v2409 = vsel %vm2408, 0, %v2407
        %v2410 = vsub.s32 32, %v2409
        %v2411 = vshll.u32 %v2402, %v2409
        %v2412 = vshrl.u32 %v2394, %v2410
        %v2413 = vor.u32 %v2411, %v2412
        %v2414 = vsub.s32 4294967266, %v2409
        %v2415 = vadd.s32 %v2414, 127
        %v2416 = vshll.u32 %v2415, 23
        %v2417 = vor.u32 4788187, %v2416
        %v2418 = vand.u32 2147483647, %v2417
        %v2420 = vcvt.s32.f32 %v2413
        %v2421 = vmul.f32 %v2420, %v2418
        %v2422 = vxor.u32 %v2421, 2147483648
        %v2423 = vsel %vm2340, %v2422, %v2421
        %v2424 = vsub.s32 4, %v2400
        %v2425 = vsel %vm2340, %v2424, %v2400
        %v2426 = vsel %vm2339, %v2012, %v2423
        %v2427 = vsel %vm2339, 0, %v2425
        %v2428 = vcosq.f32.pop %v2426
        %v2429 = vsinq.f32.pop %v2426
        %vm2430 = vweird.f32 %v2012
        %v2431 = vadd.s32 %v2427, 3
        %v2432 = vand.u32 %v2431, 3
        %vm2433 = vcmp.lt.s32.totalorder %v2432, 2
        %vm2434 = vcmp.eq.s32.totalorder %v2432, 0
        %v2435 = vxor.u32 %v2429, 2147483648
        %v2436 = vsel %vm2434, %v2428, %v2435
        %vm2437 = vcmp.eq.s32.totalorder %v2432, 2
        %v2438 = vxor.u32 %v2428, 2147483648
        %v2439 = vsel %vm2437, %v2438, %v2429
        %v2440 = vsel %vm2433, %v2436, %v2439
        %v2441 = vsel %vm2430, nan, %v2440
        %v2442 = vand.u32 2147483647, %v2016
        %vm2443 = vcmp.le.f32.partialorder %v2442, 0.7853982
        %vm2444 = vcmp.lt.s32.totalorder %v2016, 0
        %v2445 = vand.u32 %v2016, 2139095040
        %v2446 = vshrl.u32 %v2445, 23
        %v2447 = vsub.s32 %v2446, 127
        %v2448 = vand.u32 2147483647, %v2016
        %v2449 = vand.u32 %v2448, 8388607
        %v2450 = vor.u32 %v2449, 8388608
        %v2451 = vsub.s32 0, %v2450
        %v2452 = vadd.s32 %v2447, 1
        %vm2453 = vcmp.gt.s32.totalorder %v2452, 0
        %v2454 = vsel %vm2453, %v2452, 0
        %v2455 = vshrl.u32 %v2454, 5
        %v2456 = vand.u32 %v2454, 31
        %v2457 = vsub.s32 32, %v2456
        %v2458 = vshrl.u32 683565275, %v2457
        %v2459 = vshll.u32 683565275, %v2456
        %v2460 = vshrl.u32 2475754826, %v2457
        %v2461 = vor.u32 %v2459, %v2460
        %v2462 = vshll.u32 2475754826, %v2456
        %v2463 = vshrl.u32 2131351028, %v2457
        %v2464 = vor.u32 %v2462, %v2463
        %v2465 = vshll.u32 2131351028, %v2456
        %v2466 = vshrl.u32 2102212464, %v2457
        %v2467 = vor.u32 %v2465, %v2466
        %v2468 = vshll.u32 2102212464, %v2456
        %v2469 = vshrl.u32 920167782, %v2457
        %v2470 = vor.u32 %v2468, %v2469
        %v2471 = vshll.u32 920167782, %v2456
        %v2472 = vshrl.u32 1326507024, %v2457
        %v2473 = vor.u32 %v2471, %v2472
        %vm2474 = vcmp.lt.s32.totalorder %v2455, 1
        %vm2475 = vcmp.lt.s32.totalorder %v2455, 2
        %vm2476 = vcmp.lt.s32.totalorder %v2455, 3
        %vm2477 = vcmp.lt.s32.totalorder %v2455, 4
        %v2478 = vsel %vm2474, %v2458, %v2461
        %v2479 = vsel %vm2477, %v2467, 2102212464
        %v2480 = vsel %vm2476, %v2464, %v2479
        %v2481 = vsel %vm2475, %v2478, %v2480
        %v2482 = vsel %vm2474, %v2461, %v2464
        %v2483 = vsel %vm2477, %v2470, 920167782
        %v2484 = vsel %vm2476, %v2467, %v2483
        %v2485 = vsel %vm2475, %v2482, %v2484
        %v2486 = vsel %vm2474, %v2464, %v2467
        %v2487 = vsel %vm2477, %v2473, 1326507024
        %v2488 = vsel %vm2476, %v2470, %v2487
        %v2489 = vsel %vm2475, %v2486, %v2488
        %v2490 = vshll.u32 %v2450, 8
        %v2491 = vmul.u32.u64.compose %v2490, %v2489
        %v2492 = vextract.low.u32 %v2491
        %v2493 = vextract.high.u32 %v2491
        %v2494 = vmul.u32.u64.compose %v2490, %v2485
        %v2495 = vextract.low.u32 %v2494
        %v2496 = vextract.high.u32 %v2494
        %v2497 = vmul.u32 %v2490, %v2481
        %v2498 = vadd.s32 %v2493, %v2495
        %vm2499 = vc.u32 %v2493, %v2495
        %v2500 = vadd.s32 %v2496, 1
        %v2501 = vsel %vm2499, %v2500, %v2496
        %v2502 = vadd.s32 %v2497, %v2501
        %v2503 = vadd.s32 %v2502, 536870912
        %v2504 = vshrl.u32 %v2503, 30
        %v2505 = vshll.u32 %v2504, 30
        %v2506 = vsub.s32 %v2502, %v2505
        %vm2507 = vcmp.lt.s32.totalorder %v2506, 0
        %v2508 = vsub.s32 0, %v2506
        %v2509 = vsel %vm2507, %v2508, %v2506
        %v2510 = vclz %v2509
        %v2511 = vsub.s32 %v2510, 2
        %vm2512 = vcmp.gt.s32.totalorder 0, %v2511
        %v2513 = vsel %vm2512, 0, %v2511
        %v2514 = vsub.s32 32, %v2513
        %v2515 = vshll.u32 %v2506, %v2513
        %v2516 = vshrl.u32 %v2498, %v2514
        %v2517 = vor.u32 %v2515, %v2516
        %v2518 = vsub.s32 4294967266, %v2513
        %v2519 = vadd.s32 %v2518, 127
        %v2520 = vshll.u32 %v2519, 23
        %v2521 = vor.u32 4788187, %v2520
        %v2522 = vand.u32 2147483647, %v2521
        %v2524 = vcvt.s32.f32 %v2517
        %v2525 = vmul.f32 %v2524, %v2522
        %v2526 = vxor.u32 %v2525, 2147483648
        %v2527 = vsel %vm2444, %v2526, %v2525
        %v2528 = vsub.s32 4, %v2504
        %v2529 = vsel %vm2444, %v2528, %v2504
        %v2530 = vsel %vm2443, %v2016, %v2527
        %v2531 = vsel %vm2443, 0, %v2529
        %v2532 = vcosq.f32.pop %v2530
        %v2533 = vsinq.f32.pop %v2530
        %vm2534 = vweird.f32 %v2016
        %v2535 = vadd.s32 %v2531, 3
        %v2536 = vand.u32 %v2535, 3
        %vm2537 = vcmp.lt.s32.totalorder %v2536, 2
        %vm2538 = vcmp.eq.s32.totalorder %v2536, 0
        %v2539 = vxor.u32 %v2533, 2147483648
        %v2540 = vsel %vm2538, %v2532, %v2539
        %vm2541 = vcmp.eq.s32.totalorder %v2536, 2
        %v2542 = vxor.u32 %v2532, 2147483648
        %v2543 = vsel %vm2541, %v2542, %v2533
        %v2544 = vsel %vm2537, %v2540, %v2543
        %v2545 = vsel %vm2534, nan, %v2544
        %v2546 = vand.u32 2147483647, %v2018
        %vm2547 = vcmp.le.f32.partialorder %v2546, 0.7853982
        %vm2548 = vcmp.lt.s32.totalorder %v2018, 0
        %v2549 = vand.u32 %v2018, 2139095040
        %v2550 = vshrl.u32 %v2549, 23
        %v2551 = vsub.s32 %v2550, 127
        %v2552 = vand.u32 2147483647, %v2018
        %v2553 = vand.u32 %v2552, 8388607
        %v2554 = vor.u32 %v2553, 8388608
        %v2555 = vsub.s32 0, %v2554
        %v2556 = vadd.s32 %v2551, 1
        %vm2557 = vcmp.gt.s32.totalorder %v2556, 0
        %v2558 = vsel %vm2557, %v2556, 0
        %v2559 = vshrl.u32 %v2558, 5
        %v2560 = vand.u32 %v2558, 31
        %v2561 = vsub.s32 32, %v2560
        %v2562 = vshrl.u32 683565275, %v2561
        %v2563 = vshll.u32 683565275, %v2560
        %v2564 = vshrl.u32 2475754826, %v2561
        %v2565 = vor.u32 %v2563, %v2564
        %v2566 = vshll.u32 2475754826, %v2560
        %v2567 = vshrl.u32 2131351028, %v2561
        %v2568 = vor.u32 %v2566, %v2567
        %v2569 = vshll.u32 2131351028, %v2560
        %v2570 = vshrl.u32 2102212464, %v2561
        %v2571 = vor.u32 %v2569, %v2570
        %v2572 = vshll.u32 2102212464, %v2560
        %v2573 = vshrl.u32 920167782, %v2561
        %v2574 = vor.u32 %v2572, %v2573
        %v2575 = vshll.u32 920167782, %v2560
        %v2576 = vshrl.u32 1326507024, %v2561
        %v2577 = vor.u32 %v2575, %v2576
        %vm2578 = vcmp.lt.s32.totalorder %v2559, 1
        %vm2579 = vcmp.lt.s32.totalorder %v2559, 2
        %vm2580 = vcmp.lt.s32.totalorder %v2559, 3
        %vm2581 = vcmp.lt.s32.totalorder %v2559, 4
        %v2582 = vsel %vm2578, %v2562, %v2565
        %v2583 = vsel %vm2581, %v2571, 2102212464
        %v2584 = vsel %vm2580, %v2568, %v2583
        %v2585 = vsel %vm2579, %v2582, %v2584
        %v2586 = vsel %vm2578, %v2565, %v2568
        %v2587 = vsel %vm2581, %v2574, 920167782
        %v2588 = vsel %vm2580, %v2571, %v2587
        %v2589 = vsel %vm2579, %v2586, %v2588
        %v2590 = vsel %vm2578, %v2568, %v2571
        %v2591 = vsel %vm2581, %v2577, 1326507024
        %v2592 = vsel %vm2580, %v2574, %v2591
        %v2593 = vsel %vm2579, %v2590, %v2592
        %v2594 = vshll.u32 %v2554, 8
        %v2595 = vmul.u32.u64.compose %v2594, %v2593
        %v2596 = vextract.low.u32 %v2595
        %v2597 = vextract.high.u32 %v2595
        %v2598 = vmul.u32.u64.compose %v2594, %v2589
        %v2599 = vextract.low.u32 %v2598
        %v2600 = vextract.high.u32 %v2598
        %v2601 = vmul.u32 %v2594, %v2585
        %v2602 = vadd.s32 %v2597, %v2599
        %vm2603 = vc.u32 %v2597, %v2599
        %v2604 = vadd.s32 %v2600, 1
        %v2605 = vsel %vm2603, %v2604, %v2600
        %v2606 = vadd.s32 %v2601, %v2605
        %v2607 = vadd.s32 %v2606, 536870912
        %v2608 = vshrl.u32 %v2607, 30
        %v2609 = vshll.u32 %v2608, 30
        %v2610 = vsub.s32 %v2606, %v2609
        %vm2611 = vcmp.lt.s32.totalorder %v2610, 0
        %v2612 = vsub.s32 0, %v2610
        %v2613 = vsel %vm2611, %v2612, %v2610
        %v2614 = vclz %v2613
        %v2615 = vsub.s32 %v2614, 2
        %vm2616 = vcmp.gt.s32.totalorder 0, %v2615
        %v2617 = vsel %vm2616, 0, %v2615
        %v2618 = vsub.s32 32, %v2617
        %v2619 = vshll.u32 %v2610, %v2617
        %v2620 = vshrl.u32 %v2602, %v2618
        %v2621 = vor.u32 %v2619, %v2620
        %v2622 = vsub.s32 4294967266, %v2617
        %v2623 = vadd.s32 %v2622, 127
        %v2624 = vshll.u32 %v2623, 23
        %v2625 = vor.u32 4788187, %v2624
        %v2626 = vand.u32 2147483647, %v2625
        %v2628 = vcvt.s32.f32 %v2621
        %v2629 = vmul.f32 %v2628, %v2626
        %v2630 = vxor.u32 %v2629, 2147483648
        %v2631 = vsel %vm2548, %v2630, %v2629
        %v2632 = vsub.s32 4, %v2608
        %v2633 = vsel %vm2548, %v2632, %v2608
        %v2634 = vsel %vm2547, %v2018, %v2631
        %v2635 = vsel %vm2547, 0, %v2633
        %v2636 = vcosq.f32.pop %v2634
        %v2637 = vsinq.f32.pop %v2634
        %vm2638 = vweird.f32 %v2018
        %v2639 = vadd.s32 %v2635, 3
        %v2640 = vand.u32 %v2639, 3
        %vm2641 = vcmp.lt.s32.totalorder %v2640, 2
        %vm2642 = vcmp.eq.s32.totalorder %v2640, 0
        %v2643 = vxor.u32 %v2637, 2147483648
        %v2644 = vsel %vm2642, %v2636, %v2643
        %vm2645 = vcmp.eq.s32.totalorder %v2640, 2
        %v2646 = vxor.u32 %v2636, 2147483648
        %v2647 = vsel %vm2645, %v2646, %v2637
        %v2648 = vsel %vm2641, %v2644, %v2647
        %v2649 = vsel %vm2638, nan, %v2648
        %v2650 = vand.u32 2147483647, %v2022
        %vm2651 = vcmp.le.f32.partialorder %v2650, 0.7853982
        %vm2652 = vcmp.lt.s32.totalorder %v2022, 0
        %v2653 = vand.u32 %v2022, 2139095040
        %v2654 = vshrl.u32 %v2653, 23
        %v2655 = vsub.s32 %v2654, 127
        %v2656 = vand.u32 2147483647, %v2022
        %v2657 = vand.u32 %v2656, 8388607
        %v2658 = vor.u32 %v2657, 8388608
        %v2659 = vsub.s32 0, %v2658
        %v2660 = vadd.s32 %v2655, 1
        %vm2661 = vcmp.gt.s32.totalorder %v2660, 0
        %v2662 = vsel %vm2661, %v2660, 0
        %v2663 = vshrl.u32 %v2662, 5
        %v2664 = vand.u32 %v2662, 31
        %v2665 = vsub.s32 32, %v2664
        %v2666 = vshrl.u32 683565275, %v2665
        %v2667 = vshll.u32 683565275, %v2664
        %v2668 = vshrl.u32 2475754826, %v2665
        %v2669 = vor.u32 %v2667, %v2668
        %v2670 = vshll.u32 2475754826, %v2664
        %v2671 = vshrl.u32 2131351028, %v2665
        %v2672 = vor.u32 %v2670, %v2671
        %v2673 = vshll.u32 2131351028, %v2664
        %v2674 = vshrl.u32 2102212464, %v2665
        %v2675 = vor.u32 %v2673, %v2674
        %v2676 = vshll.u32 2102212464, %v2664
        %v2677 = vshrl.u32 920167782, %v2665
        %v2678 = vor.u32 %v2676, %v2677
        %v2679 = vshll.u32 920167782, %v2664
        %v2680 = vshrl.u32 1326507024, %v2665
        %v2681 = vor.u32 %v2679, %v2680
        %vm2682 = vcmp.lt.s32.totalorder %v2663, 1
        %vm2683 = vcmp.lt.s32.totalorder %v2663, 2
        %vm2684 = vcmp.lt.s32.totalorder %v2663, 3
        %vm2685 = vcmp.lt.s32.totalorder %v2663, 4
        %v2686 = vsel %vm2682, %v2666, %v2669
        %v2687 = vsel %vm2685, %v2675, 2102212464
        %v2688 = vsel %vm2684, %v2672, %v2687
        %v2689 = vsel %vm2683, %v2686, %v2688
        %v2690 = vsel %vm2682, %v2669, %v2672
        %v2691 = vsel %vm2685, %v2678, 920167782
        %v2692 = vsel %vm2684, %v2675, %v2691
        %v2693 = vsel %vm2683, %v2690, %v2692
        %v2694 = vsel %vm2682, %v2672, %v2675
        %v2695 = vsel %vm2685, %v2681, 1326507024
        %v2696 = vsel %vm2684, %v2678, %v2695
        %v2697 = vsel %vm2683, %v2694, %v2696
        %v2698 = vshll.u32 %v2658, 8
        %v2699 = vmul.u32.u64.compose %v2698, %v2697
        %v2700 = vextract.low.u32 %v2699
        %v2701 = vextract.high.u32 %v2699
        %v2702 = vmul.u32.u64.compose %v2698, %v2693
        %v2703 = vextract.low.u32 %v2702
        %v2704 = vextract.high.u32 %v2702
        %v2705 = vmul.u32 %v2698, %v2689
        %v2706 = vadd.s32 %v2701, %v2703
        %vm2707 = vc.u32 %v2701, %v2703
        %v2708 = vadd.s32 %v2704, 1
        %v2709 = vsel %vm2707, %v2708, %v2704
        %v2710 = vadd.s32 %v2705, %v2709
        %v2711 = vadd.s32 %v2710, 536870912
        %v2712 = vshrl.u32 %v2711, 30
        %v2713 = vshll.u32 %v2712, 30
        %v2714 = vsub.s32 %v2710, %v2713
        %vm2715 = vcmp.lt.s32.totalorder %v2714, 0
        %v2716 = vsub.s32 0, %v2714
        %v2717 = vsel %vm2715, %v2716, %v2714
        %v2718 = vclz %v2717
        %v2719 = vsub.s32 %v2718, 2
        %vm2720 = vcmp.gt.s32.totalorder 0, %v2719
        %v2721 = vsel %vm2720, 0, %v2719
        %v2722 = vsub.s32 32, %v2721
        %v2723 = vshll.u32 %v2714, %v2721
        %v2724 = vshrl.u32 %v2706, %v2722
        %v2725 = vor.u32 %v2723, %v2724
        %v2726 = vsub.s32 4294967266, %v2721
        %v2727 = vadd.s32 %v2726, 127
        %v2728 = vshll.u32 %v2727, 23
        %v2729 = vor.u32 4788187, %v2728
        %v2730 = vand.u32 2147483647, %v2729
        %v2732 = vcvt.s32.f32 %v2725
        %v2733 = vmul.f32 %v2732, %v2730
        %v2734 = vxor.u32 %v2733, 2147483648
        %v2735 = vsel %vm2652, %v2734, %v2733
        %v2736 = vsub.s32 4, %v2712
        %v2737 = vsel %vm2652, %v2736, %v2712
        %v2738 = vsel %vm2651, %v2022, %v2735
        %v2739 = vsel %vm2651, 0, %v2737
        %v2740 = vcosq.f32.pop %v2738
        %v2741 = vsinq.f32.pop %v2738
        %vm2742 = vweird.f32 %v2022
        %v2743 = vadd.s32 %v2739, 3
        %v2744 = vand.u32 %v2743, 3
        %vm2745 = vcmp.lt.s32.totalorder %v2744, 2
        %vm2746 = vcmp.eq.s32.totalorder %v2744, 0
        %v2747 = vxor.u32 %v2741, 2147483648
        %v2748 = vsel %vm2746, %v2740, %v2747
        %vm2749 = vcmp.eq.s32.totalorder %v2744, 2
        %v2750 = vxor.u32 %v2740, 2147483648
        %v2751 = vsel %vm2749, %v2750, %v2741
        %v2752 = vsel %vm2745, %v2748, %v2751
        %v2753 = vsel %vm2742, nan, %v2752
        %v2754 = vand.u32 2147483647, %v2024
        %vm2755 = vcmp.le.f32.partialorder %v2754, 0.7853982
        %vm2756 = vcmp.lt.s32.totalorder %v2024, 0
        %v2757 = vand.u32 %v2024, 2139095040
        %v2758 = vshrl.u32 %v2757, 23
        %v2759 = vsub.s32 %v2758, 127
        %v2760 = vand.u32 2147483647, %v2024
        %v2761 = vand.u32 %v2760, 8388607
        %v2762 = vor.u32 %v2761, 8388608
        %v2763 = vsub.s32 0, %v2762
        %v2764 = vadd.s32 %v2759, 1
        %vm2765 = vcmp.gt.s32.totalorder %v2764, 0
        %v2766 = vsel %vm2765, %v2764, 0
        %v2767 = vshrl.u32 %v2766, 5
        %v2768 = vand.u32 %v2766, 31
        %v2769 = vsub.s32 32, %v2768
        %v2770 = vshrl.u32 683565275, %v2769
        %v2771 = vshll.u32 683565275, %v2768
        %v2772 = vshrl.u32 2475754826, %v2769
        %v2773 = vor.u32 %v2771, %v2772
        %v2774 = vshll.u32 2475754826, %v2768
        %v2775 = vshrl.u32 2131351028, %v2769
        %v2776 = vor.u32 %v2774, %v2775
        %v2777 = vshll.u32 2131351028, %v2768
        %v2778 = vshrl.u32 2102212464, %v2769
        %v2779 = vor.u32 %v2777, %v2778
        %v2780 = vshll.u32 2102212464, %v2768
        %v2781 = vshrl.u32 920167782, %v2769
        %v2782 = vor.u32 %v2780, %v2781
        %v2783 = vshll.u32 920167782, %v2768
        %v2784 = vshrl.u32 1326507024, %v2769
        %v2785 = vor.u32 %v2783, %v2784
        %vm2786 = vcmp.lt.s32.totalorder %v2767, 1
        %vm2787 = vcmp.lt.s32.totalorder %v2767, 2
        %vm2788 = vcmp.lt.s32.totalorder %v2767, 3
        %vm2789 = vcmp.lt.s32.totalorder %v2767, 4
        %v2790 = vsel %vm2786, %v2770, %v2773
        %v2791 = vsel %vm2789, %v2779, 2102212464
        %v2792 = vsel %vm2788, %v2776, %v2791
        %v2793 = vsel %vm2787, %v2790, %v2792
        %v2794 = vsel %vm2786, %v2773, %v2776
        %v2795 = vsel %vm2789, %v2782, 920167782
        %v2796 = vsel %vm2788, %v2779, %v2795
        %v2797 = vsel %vm2787, %v2794, %v2796
        %v2798 = vsel %vm2786, %v2776, %v2779
        %v2799 = vsel %vm2789, %v2785, 1326507024
        %v2800 = vsel %vm2788, %v2782, %v2799
        %v2801 = vsel %vm2787, %v2798, %v2800
        %v2802 = vshll.u32 %v2762, 8
        %v2803 = vmul.u32.u64.compose %v2802, %v2801
        %v2804 = vextract.low.u32 %v2803
        %v2805 = vextract.high.u32 %v2803
        %v2806 = vmul.u32.u64.compose %v2802, %v2797
        %v2807 = vextract.low.u32 %v2806
        %v2808 = vextract.high.u32 %v2806
        %v2809 = vmul.u32 %v2802, %v2793
        %v2810 = vadd.s32 %v2805, %v2807
        %vm2811 = vc.u32 %v2805, %v2807
        %v2812 = vadd.s32 %v2808, 1
        %v2813 = vsel %vm2811, %v2812, %v2808
        %v2814 = vadd.s32 %v2809, %v2813
        %v2815 = vadd.s32 %v2814, 536870912
        %v2816 = vshrl.u32 %v2815, 30
        %v2817 = vshll.u32 %v2816, 30
        %v2818 = vsub.s32 %v2814, %v2817
        %vm2819 = vcmp.lt.s32.totalorder %v2818, 0
        %v2820 = vsub.s32 0, %v2818
        %v2821 = vsel %vm2819, %v2820, %v2818
        %v2822 = vclz %v2821
        %v2823 = vsub.s32 %v2822, 2
        %vm2824 = vcmp.gt.s32.totalorder 0, %v2823
        %v2825 = vsel %vm2824, 0, %v2823
        %v2826 = vsub.s32 32, %v2825
        %v2827 = vshll.u32 %v2818, %v2825
        %v2828 = vshrl.u32 %v2810, %v2826
        %v2829 = vor.u32 %v2827, %v2828
        %v2830 = vsub.s32 4294967266, %v2825
        %v2831 = vadd.s32 %v2830, 127
        %v2832 = vshll.u32 %v2831, 23
        %v2833 = vor.u32 4788187, %v2832
        %v2834 = vand.u32 2147483647, %v2833
        %v2836 = vcvt.s32.f32 %v2829
        %v2837 = vmul.f32 %v2836, %v2834
        %v2838 = vxor.u32 %v2837, 2147483648
        %v2839 = vsel %vm2756, %v2838, %v2837
        %v2840 = vsub.s32 4, %v2816
        %v2841 = vsel %vm2756, %v2840, %v2816
        %v2842 = vsel %vm2755, %v2024, %v2839
        %v2843 = vsel %vm2755, 0, %v2841
        %v2844 = vcosq.f32.pop %v2842
        %v2845 = vsinq.f32.pop %v2842
        %vm2846 = vweird.f32 %v2024
        %v2847 = vadd.s32 %v2843, 3
        %v2848 = vand.u32 %v2847, 3
        %vm2849 = vcmp.lt.s32.totalorder %v2848, 2
        %vm2850 = vcmp.eq.s32.totalorder %v2848, 0
        %v2851 = vxor.u32 %v2845, 2147483648
        %v2852 = vsel %vm2850, %v2844, %v2851
        %vm2853 = vcmp.eq.s32.totalorder %v2848, 2
        %v2854 = vxor.u32 %v2844, 2147483648
        %v2855 = vsel %vm2853, %v2854, %v2845
        %v2856 = vsel %vm2849, %v2852, %v2855
        %v2857 = vsel %vm2846, nan, %v2856
        %s2858 = scalar_lea.vmem %s8, 32
        %v2859 = vld [vmem:[%s2858] sm:$0xff]
        %v2860 = vld [vmem:[%s2858 + $0x8] sm:$0xff]
        %v2861 = vld [vmem:[%s2858 + $0x10] sm:$0xff]
        %v2862 = vld [vmem:[%s2858 + $0x18] sm:$0xff]
        %s2863 = scalar_lea.vmem %s9, 64
        %v2864 = vld [vmem:[%s2863] sm:$0xff]
        %v2865 = vld [vmem:[%s2863 + $0x8] sm:$0xff]
        %v2866 = vld [vmem:[%s2863 + $0x10] sm:$0xff]
        %v2867 = vld [vmem:[%s2863 + $0x18] sm:$0xff]
        %2869 = vset.pattern.permute.xlu0 0
        %2870 = vperm.xlu0 %2869, %v2864
        %v2871 = vpop.permute.xlu0 %2870
        %2874 = vset.pattern.permute.xlu0 0
        %2875 = vperm.xlu0 %2874, %v2865
        %v2876 = vpop.permute.xlu0 %2875
        %2879 = vset.pattern.permute.xlu0 0
        %2880 = vperm.xlu0 %2879, %v2866
        %v2881 = vpop.permute.xlu0 %2880
        %2884 = vset.pattern.permute.xlu0 0
        %2885 = vperm.xlu0 %2884, %v2867
        %v2886 = vpop.permute.xlu0 %2885
        %v2889 = vsel %vm1924, %v2859, 0
        %v2892 = vsel %vm1924, %v2860, 0
        %v2895 = vsel %vm1924, %v2861, 0
        %v2898 = vsel %vm1924, %v2862, 0
        %2900 = vmatprep.subr.mxu0 %v2233
        %2901 = vmatpush1.msra.mxu0 %v2129
        %2902 = vmatprep.subr.mxu0 %v2441
        %2903 = vmatpush1.msra.mxu0 %v2337
        %2904 = vmatprep.subr.mxu0 %v2649
        %2905 = vmatpush1.msra.mxu0 %v2545
        %2906 = vmatprep.subr.mxu0 %v2857
        %2907 = vmatpush1.msra.mxu0 %v2753
        %2908 = vmatprep.subr.mxu0 0.0
        %2909 = vmatpush1.msra.mxu0 0.0
        %2910 = vmatprep.subr.mxu0 0.0
        %2911 = vmatpush1.msra.mxu0 0.0
        %2912 = vmatprep.subr.mxu0 0.0
        %2913 = vmatpush1.msra.mxu0 0.0
        %2914 = vmatprep.subr.mxu0 0.0
        %2915 = vmatpush1.msra.mxu0 0.0
        %2916 = vmatprep.subr.mxu0 0.0
        %2917 = vmatpush1.msra.mxu0 0.0
        %2918 = vmatprep.subr.mxu0 0.0
        %2919 = vmatpush1.msra.mxu0 0.0
        %2920 = vmatprep.subr.mxu0 0.0
        %2921 = vmatpush1.msra.mxu0 0.0
        %2922 = vmatprep.subr.mxu0 0.0
        %2923 = vmatpush1.msra.mxu0 0.0
        %2924 = vmatprep.subr.mxu0 0.0
        %2925 = vmatpush1.msra.mxu0 0.0
        %2926 = vmatprep.subr.mxu0 0.0
        %2927 = vmatpush1.msra.mxu0 0.0
        %2928 = vmatprep.subr.mxu0 0.0
        %2929 = vmatpush1.msra.mxu0 0.0
        %2930 = vmatprep.subr.mxu0 0.0
        %2931 = vmatpush1.msra.mxu0 0.0
        %2932 = vmatprep.subr.mxu0 0.0
        %2933 = vmatpush1.msra.mxu0 0.0
        %2934 = vmatprep.subr.mxu0 0.0
        %2935 = vmatpush1.msra.mxu0 0.0
        %2936 = vmatprep.subr.mxu0 0.0
        %2937 = vmatpush1.msra.mxu0 0.0
        %2938 = vmatprep.subr.mxu0 0.0
        %2939 = vmatpush1.msra.mxu0 0.0
        %2940 = vmatprep.subr.mxu0 0.0
        %2941 = vmatpush1.msra.mxu0 0.0
        %2942 = vmatprep.subr.mxu0 0.0
        %2943 = vmatpush1.msra.mxu0 0.0
        %2944 = vmatprep.subr.mxu0 0.0
        %2945 = vmatpush1.msra.mxu0 0.0
        %2946 = vmatprep.subr.mxu0 0.0
        %2947 = vmatpush1.msra.mxu0 0.0
        %2948 = vmatprep.subr.mxu0 0.0
        %2949 = vmatpush1.msra.mxu0 0.0
        %2950 = vmatprep.subr.mxu0 0.0
        %2951 = vmatpush1.msra.mxu0 0.0
        %2952 = vmatprep.subr.mxu0 0.0
        %2953 = vmatpush1.msra.mxu0 0.0
        %2954 = vmatprep.subr.mxu0 0.0
        %2955 = vmatpush1.msra.mxu0 0.0
        %2956 = vmatprep.subr.mxu0 0.0
        %2957 = vmatpush1.msra.mxu0 0.0
        %2958 = vmatprep.subr.mxu0 0.0
        %2959 = vmatpush1.msra.mxu0 0.0
        %2960 = vmatprep.subr.mxu0 0.0
        %2961 = vmatpush1.msra.mxu0 0.0
        %2962 = vmatprep.subr.mxu0 0.0
        %2963 = vmatpush1.msra.mxu0 0.0
        %2964 = vmatprep.mubr.f32.mxu0 0.0
        %2965 = vmatmul.mubr.f32.gmra.mrb[0].mxu0 %v2889
        %v2966 = vpop.f32.mrb[0].mxu0
        %v2967 = vadd.f32 %v2871, %v2966
        %v2968 = vpop.f32.mrb[0].mxu0
        %v2969 = vadd.f32 %v2871, %v2968
        %2970 = vmatprep.mubr.f32.mxu0 0.0
        %2971 = vmatmul.mubr.f32.gmra.mrb[0].mxu0 %v2892
        %v2972 = vpop.f32.mrb[0].mxu0
        %v2973 = vadd.f32 %v2876, %v2972
        %v2974 = vpop.f32.mrb[0].mxu0
        %v2975 = vadd.f32 %v2876, %v2974
        %2976 = vmatprep.mubr.f32.mxu0 0.0
        %2977 = vmatmul.mubr.f32.gmra.mrb[0].mxu0 %v2895
        %v2978 = vpop.f32.mrb[0].mxu0
        %v2979 = vadd.f32 %v2881, %v2978
        %v2980 = vpop.f32.mrb[0].mxu0
        %v2981 = vadd.f32 %v2881, %v2980
        %2982 = vmatprep.mubr.f32.mxu0 0.0
        %2983 = vmatmul.mubr.f32.gmra.mrb[0].mxu0 %v2898
        %v2984 = vpop.f32.mrb[0].mxu0
        %v2985 = vadd.f32 %v2886, %v2984
        %v2986 = vpop.f32.mrb[0].mxu0
        %v2987 = vadd.f32 %v2886, %v2986
        %2988 = vdwg.mxu0
        %v2989 = vand.u32 2147483647, %v2967
        %vm2990 = vcmp.le.f32.partialorder %v2989, 0.7853982
        %vm2991 = vcmp.lt.s32.totalorder %v2967, 0
        %v2992 = vand.u32 %v2967, 2139095040
        %v2993 = vshrl.u32 %v2992, 23
        %v2994 = vsub.s32 %v2993, 127
        %v2995 = vand.u32 2147483647, %v2967
        %v2996 = vand.u32 %v2995, 8388607
        %v2997 = vor.u32 %v2996, 8388608
        %v2998 = vsub.s32 0, %v2997
        %v2999 = vadd.s32 %v2994, 1
        %vm3000 = vcmp.gt.s32.totalorder %v2999, 0
        %v3001 = vsel %vm3000, %v2999, 0
        %v3002 = vshrl.u32 %v3001, 5
        %v3003 = vand.u32 %v3001, 31
        %v3004 = vsub.s32 32, %v3003
        %v3005 = vshrl.u32 683565275, %v3004
        %v3006 = vshll.u32 683565275, %v3003
        %v3007 = vshrl.u32 2475754826, %v3004
        %v3008 = vor.u32 %v3006, %v3007
        %v3009 = vshll.u32 2475754826, %v3003
        %v3010 = vshrl.u32 2131351028, %v3004
        %v3011 = vor.u32 %v3009, %v3010
        %v3012 = vshll.u32 2131351028, %v3003
        %v3013 = vshrl.u32 2102212464, %v3004
        %v3014 = vor.u32 %v3012, %v3013
        %v3015 = vshll.u32 2102212464, %v3003
        %v3016 = vshrl.u32 920167782, %v3004
        %v3017 = vor.u32 %v3015, %v3016
        %v3018 = vshll.u32 920167782, %v3003
        %v3019 = vshrl.u32 1326507024, %v3004
        %v3020 = vor.u32 %v3018, %v3019
        %vm3021 = vcmp.lt.s32.totalorder %v3002, 1
        %vm3022 = vcmp.lt.s32.totalorder %v3002, 2
        %vm3023 = vcmp.lt.s32.totalorder %v3002, 3
        %vm3024 = vcmp.lt.s32.totalorder %v3002, 4
        %v3025 = vsel %vm3021, %v3005, %v3008
        %v3026 = vsel %vm3024, %v3014, 2102212464
        %v3027 = vsel %vm3023, %v3011, %v3026
        %v3028 = vsel %vm3022, %v3025, %v3027
        %v3029 = vsel %vm3021, %v3008, %v3011
        %v3030 = vsel %vm3024, %v3017, 920167782
        %v3031 = vsel %vm3023, %v3014, %v3030
        %v3032 = vsel %vm3022, %v3029, %v3031
        %v3033 = vsel %vm3021, %v3011, %v3014
        %v3034 = vsel %vm3024, %v3020, 1326507024
        %v3035 = vsel %vm3023, %v3017, %v3034
        %v3036 = vsel %vm3022, %v3033, %v3035
        %v3037 = vshll.u32 %v2997, 8
        %v3038 = vmul.u32.u64.compose %v3037, %v3036
        %v3039 = vextract.low.u32 %v3038
        %v3040 = vextract.high.u32 %v3038
        %v3041 = vmul.u32.u64.compose %v3037, %v3032
        %v3042 = vextract.low.u32 %v3041
        %v3043 = vextract.high.u32 %v3041
        %v3044 = vmul.u32 %v3037, %v3028
        %v3045 = vadd.s32 %v3040, %v3042
        %vm3046 = vc.u32 %v3040, %v3042
        %v3047 = vadd.s32 %v3043, 1
        %v3048 = vsel %vm3046, %v3047, %v3043
        %v3049 = vadd.s32 %v3044, %v3048
        %v3050 = vadd.s32 %v3049, 536870912
        %v3051 = vshrl.u32 %v3050, 30
        %v3052 = vshll.u32 %v3051, 30
        %v3053 = vsub.s32 %v3049, %v3052
        %vm3054 = vcmp.lt.s32.totalorder %v3053, 0
        %v3055 = vsub.s32 0, %v3053
        %v3056 = vsel %vm3054, %v3055, %v3053
        %v3057 = vclz %v3056
        %v3058 = vsub.s32 %v3057, 2
        %vm3059 = vcmp.gt.s32.totalorder 0, %v3058
        %v3060 = vsel %vm3059, 0, %v3058
        %v3061 = vsub.s32 32, %v3060
        %v3062 = vshll.u32 %v3053, %v3060
        %v3063 = vshrl.u32 %v3045, %v3061
        %v3064 = vor.u32 %v3062, %v3063
        %v3065 = vsub.s32 4294967266, %v3060
        %v3066 = vadd.s32 %v3065, 127
        %v3067 = vshll.u32 %v3066, 23
        %v3068 = vor.u32 4788187, %v3067
        %v3069 = vand.u32 2147483647, %v3068
        %v3071 = vcvt.s32.f32 %v3064
        %v3072 = vmul.f32 %v3071, %v3069
        %v3073 = vxor.u32 %v3072, 2147483648
        %v3074 = vsel %vm2991, %v3073, %v3072
        %v3075 = vsub.s32 4, %v3051
        %v3076 = vsel %vm2991, %v3075, %v3051
        %v3077 = vsel %vm2990, %v2967, %v3074
        %v3078 = vsel %vm2990, 0, %v3076
        %v3079 = vcosq.f32.pop %v3077
        %v3080 = vsinq.f32.pop %v3077
        %vm3081 = vweird.f32 %v2967
        %v3082 = vadd.s32 %v3078, 3
        %v3083 = vand.u32 %v3082, 3
        %vm3084 = vcmp.lt.s32.totalorder %v3083, 2
        %vm3085 = vcmp.eq.s32.totalorder %v3083, 0
        %v3086 = vxor.u32 %v3080, 2147483648
        %v3087 = vsel %vm3085, %v3079, %v3086
        %vm3088 = vcmp.eq.s32.totalorder %v3083, 2
        %v3089 = vxor.u32 %v3079, 2147483648
        %v3090 = vsel %vm3088, %v3089, %v3080
        %v3091 = vsel %vm3084, %v3087, %v3090
        %v3092 = vsel %vm3081, nan, %v3091
        %v3093 = vand.u32 2147483647, %v2969
        %vm3094 = vcmp.le.f32.partialorder %v3093, 0.7853982
        %vm3095 = vcmp.lt.s32.totalorder %v2969, 0
        %v3096 = vand.u32 %v2969, 2139095040
        %v3097 = vshrl.u32 %v3096, 23
        %v3098 = vsub.s32 %v3097, 127
        %v3099 = vand.u32 2147483647, %v2969
        %v3100 = vand.u32 %v3099, 8388607
        %v3101 = vor.u32 %v3100, 8388608
        %v3102 = vsub.s32 0, %v3101
        %v3103 = vadd.s32 %v3098, 1
        %vm3104 = vcmp.gt.s32.totalorder %v3103, 0
        %v3105 = vsel %vm3104, %v3103, 0
        %v3106 = vshrl.u32 %v3105, 5
        %v3107 = vand.u32 %v3105, 31
        %v3108 = vsub.s32 32, %v3107
        %v3109 = vshrl.u32 683565275, %v3108
        %v3110 = vshll.u32 683565275, %v3107
        %v3111 = vshrl.u32 2475754826, %v3108
        %v3112 = vor.u32 %v3110, %v3111
        %v3113 = vshll.u32 2475754826, %v3107
        %v3114 = vshrl.u32 2131351028, %v3108
        %v3115 = vor.u32 %v3113, %v3114
        %v3116 = vshll.u32 2131351028, %v3107
        %v3117 = vshrl.u32 2102212464, %v3108
        %v3118 = vor.u32 %v3116, %v3117
        %v3119 = vshll.u32 2102212464, %v3107
        %v3120 = vshrl.u32 920167782, %v3108
        %v3121 = vor.u32 %v3119, %v3120
        %v3122 = vshll.u32 920167782, %v3107
        %v3123 = vshrl.u32 1326507024, %v3108
        %v3124 = vor.u32 %v3122, %v3123
        %vm3125 = vcmp.lt.s32.totalorder %v3106, 1
        %vm3126 = vcmp.lt.s32.totalorder %v3106, 2
        %vm3127 = vcmp.lt.s32.totalorder %v3106, 3
        %vm3128 = vcmp.lt.s32.totalorder %v3106, 4
        %v3129 = vsel %vm3125, %v3109, %v3112
        %v3130 = vsel %vm3128, %v3118, 2102212464
        %v3131 = vsel %vm3127, %v3115, %v3130
        %v3132 = vsel %vm3126, %v3129, %v3131
        %v3133 = vsel %vm3125, %v3112, %v3115
        %v3134 = vsel %vm3128, %v3121, 920167782
        %v3135 = vsel %vm3127, %v3118, %v3134
        %v3136 = vsel %vm3126, %v3133, %v3135
        %v3137 = vsel %vm3125, %v3115, %v3118
        %v3138 = vsel %vm3128, %v3124, 1326507024
        %v3139 = vsel %vm3127, %v3121, %v3138
        %v3140 = vsel %vm3126, %v3137, %v3139
        %v3141 = vshll.u32 %v3101, 8
        %v3142 = vmul.u32.u64.compose %v3141, %v3140
        %v3143 = vextract.low.u32 %v3142
        %v3144 = vextract.high.u32 %v3142
        %v3145 = vmul.u32.u64.compose %v3141, %v3136
        %v3146 = vextract.low.u32 %v3145
        %v3147 = vextract.high.u32 %v3145
        %v3148 = vmul.u32 %v3141, %v3132
        %v3149 = vadd.s32 %v3144, %v3146
        %vm3150 = vc.u32 %v3144, %v3146
        %v3151 = vadd.s32 %v3147, 1
        %v3152 = vsel %vm3150, %v3151, %v3147
        %v3153 = vadd.s32 %v3148, %v3152
        %v3154 = vadd.s32 %v3153, 536870912
        %v3155 = vshrl.u32 %v3154, 30
        %v3156 = vshll.u32 %v3155, 30
        %v3157 = vsub.s32 %v3153, %v3156
        %vm3158 = vcmp.lt.s32.totalorder %v3157, 0
        %v3159 = vsub.s32 0, %v3157
        %v3160 = vsel %vm3158, %v3159, %v3157
        %v3161 = vclz %v3160
        %v3162 = vsub.s32 %v3161, 2
        %vm3163 = vcmp.gt.s32.totalorder 0, %v3162
        %v3164 = vsel %vm3163, 0, %v3162
        %v3165 = vsub.s32 32, %v3164
        %v3166 = vshll.u32 %v3157, %v3164
        %v3167 = vshrl.u32 %v3149, %v3165
        %v3168 = vor.u32 %v3166, %v3167
        %v3169 = vsub.s32 4294967266, %v3164
        %v3170 = vadd.s32 %v3169, 127
        %v3171 = vshll.u32 %v3170, 23
        %v3172 = vor.u32 4788187, %v3171
        %v3173 = vand.u32 2147483647, %v3172
        %v3175 = vcvt.s32.f32 %v3168
        %v3176 = vmul.f32 %v3175, %v3173
        %v3177 = vxor.u32 %v3176, 2147483648
        %v3178 = vsel %vm3095, %v3177, %v3176
        %v3179 = vsub.s32 4, %v3155
        %v3180 = vsel %vm3095, %v3179, %v3155
        %v3181 = vsel %vm3094, %v2969, %v3178
        %v3182 = vsel %vm3094, 0, %v3180
        %v3183 = vcosq.f32.pop %v3181
        %v3184 = vsinq.f32.pop %v3181
        %vm3185 = vweird.f32 %v2969
        %v3186 = vadd.s32 %v3182, 3
        %v3187 = vand.u32 %v3186, 3
        %vm3188 = vcmp.lt.s32.totalorder %v3187, 2
        %vm3189 = vcmp.eq.s32.totalorder %v3187, 0
        %v3190 = vxor.u32 %v3184, 2147483648
        %v3191 = vsel %vm3189, %v3183, %v3190
        %vm3192 = vcmp.eq.s32.totalorder %v3187, 2
        %v3193 = vxor.u32 %v3183, 2147483648
        %v3194 = vsel %vm3192, %v3193, %v3184
        %v3195 = vsel %vm3188, %v3191, %v3194
        %v3196 = vsel %vm3185, nan, %v3195
        %v3197 = vand.u32 2147483647, %v2973
        %vm3198 = vcmp.le.f32.partialorder %v3197, 0.7853982
        %vm3199 = vcmp.lt.s32.totalorder %v2973, 0
        %v3200 = vand.u32 %v2973, 2139095040
        %v3201 = vshrl.u32 %v3200, 23
        %v3202 = vsub.s32 %v3201, 127
        %v3203 = vand.u32 2147483647, %v2973
        %v3204 = vand.u32 %v3203, 8388607
        %v3205 = vor.u32 %v3204, 8388608
        %v3206 = vsub.s32 0, %v3205
        %v3207 = vadd.s32 %v3202, 1
        %vm3208 = vcmp.gt.s32.totalorder %v3207, 0
        %v3209 = vsel %vm3208, %v3207, 0
        %v3210 = vshrl.u32 %v3209, 5
        %v3211 = vand.u32 %v3209, 31
        %v3212 = vsub.s32 32, %v3211
        %v3213 = vshrl.u32 683565275, %v3212
        %v3214 = vshll.u32 683565275, %v3211
        %v3215 = vshrl.u32 2475754826, %v3212
        %v3216 = vor.u32 %v3214, %v3215
        %v3217 = vshll.u32 2475754826, %v3211
        %v3218 = vshrl.u32 2131351028, %v3212
        %v3219 = vor.u32 %v3217, %v3218
        %v3220 = vshll.u32 2131351028, %v3211
        %v3221 = vshrl.u32 2102212464, %v3212
        %v3222 = vor.u32 %v3220, %v3221
        %v3223 = vshll.u32 2102212464, %v3211
        %v3224 = vshrl.u32 920167782, %v3212
        %v3225 = vor.u32 %v3223, %v3224
        %v3226 = vshll.u32 920167782, %v3211
        %v3227 = vshrl.u32 1326507024, %v3212
        %v3228 = vor.u32 %v3226, %v3227
        %vm3229 = vcmp.lt.s32.totalorder %v3210, 1
        %vm3230 = vcmp.lt.s32.totalorder %v3210, 2
        %vm3231 = vcmp.lt.s32.totalorder %v3210, 3
        %vm3232 = vcmp.lt.s32.totalorder %v3210, 4
        %v3233 = vsel %vm3229, %v3213, %v3216
        %v3234 = vsel %vm3232, %v3222, 2102212464
        %v3235 = vsel %vm3231, %v3219, %v3234
        %v3236 = vsel %vm3230, %v3233, %v3235
        %v3237 = vsel %vm3229, %v3216, %v3219
        %v3238 = vsel %vm3232, %v3225, 920167782
        %v3239 = vsel %vm3231, %v3222, %v3238
        %v3240 = vsel %vm3230, %v3237, %v3239
        %v3241 = vsel %vm3229, %v3219, %v3222
        %v3242 = vsel %vm3232, %v3228, 1326507024
        %v3243 = vsel %vm3231, %v3225, %v3242
        %v3244 = vsel %vm3230, %v3241, %v3243
        %v3245 = vshll.u32 %v3205, 8
        %v3246 = vmul.u32.u64.compose %v3245, %v3244
        %v3247 = vextract.low.u32 %v3246
        %v3248 = vextract.high.u32 %v3246
        %v3249 = vmul.u32.u64.compose %v3245, %v3240
        %v3250 = vextract.low.u32 %v3249
        %v3251 = vextract.high.u32 %v3249
        %v3252 = vmul.u32 %v3245, %v3236
        %v3253 = vadd.s32 %v3248, %v3250
        %vm3254 = vc.u32 %v3248, %v3250
        %v3255 = vadd.s32 %v3251, 1
        %v3256 = vsel %vm3254, %v3255, %v3251
        %v3257 = vadd.s32 %v3252, %v3256
        %v3258 = vadd.s32 %v3257, 536870912
        %v3259 = vshrl.u32 %v3258, 30
        %v3260 = vshll.u32 %v3259, 30
        %v3261 = vsub.s32 %v3257, %v3260
        %vm3262 = vcmp.lt.s32.totalorder %v3261, 0
        %v3263 = vsub.s32 0, %v3261
        %v3264 = vsel %vm3262, %v3263, %v3261
        %v3265 = vclz %v3264
        %v3266 = vsub.s32 %v3265, 2
        %vm3267 = vcmp.gt.s32.totalorder 0, %v3266
        %v3268 = vsel %vm3267, 0, %v3266
        %v3269 = vsub.s32 32, %v3268
        %v3270 = vshll.u32 %v3261, %v3268
        %v3271 = vshrl.u32 %v3253, %v3269
        %v3272 = vor.u32 %v3270, %v3271
        %v3273 = vsub.s32 4294967266, %v3268
        %v3274 = vadd.s32 %v3273, 127
        %v3275 = vshll.u32 %v3274, 23
        %v3276 = vor.u32 4788187, %v3275
        %v3277 = vand.u32 2147483647, %v3276
        %v3279 = vcvt.s32.f32 %v3272
        %v3280 = vmul.f32 %v3279, %v3277
        %v3281 = vxor.u32 %v3280, 2147483648
        %v3282 = vsel %vm3199, %v3281, %v3280
        %v3283 = vsub.s32 4, %v3259
        %v3284 = vsel %vm3199, %v3283, %v3259
        %v3285 = vsel %vm3198, %v2973, %v3282
        %v3286 = vsel %vm3198, 0, %v3284
        %v3287 = vcosq.f32.pop %v3285
        %v3288 = vsinq.f32.pop %v3285
        %vm3289 = vweird.f32 %v2973
        %v3290 = vadd.s32 %v3286, 3
        %v3291 = vand.u32 %v3290, 3
        %vm3292 = vcmp.lt.s32.totalorder %v3291, 2
        %vm3293 = vcmp.eq.s32.totalorder %v3291, 0
        %v3294 = vxor.u32 %v3288, 2147483648
        %v3295 = vsel %vm3293, %v3287, %v3294
        %vm3296 = vcmp.eq.s32.totalorder %v3291, 2
        %v3297 = vxor.u32 %v3287, 2147483648
        %v3298 = vsel %vm3296, %v3297, %v3288
        %v3299 = vsel %vm3292, %v3295, %v3298
        %v3300 = vsel %vm3289, nan, %v3299
        %v3301 = vand.u32 2147483647, %v2975
        %vm3302 = vcmp.le.f32.partialorder %v3301, 0.7853982
        %vm3303 = vcmp.lt.s32.totalorder %v2975, 0
        %v3304 = vand.u32 %v2975, 2139095040
        %v3305 = vshrl.u32 %v3304, 23
        %v3306 = vsub.s32 %v3305, 127
        %v3307 = vand.u32 2147483647, %v2975
        %v3308 = vand.u32 %v3307, 8388607
        %v3309 = vor.u32 %v3308, 8388608
        %v3310 = vsub.s32 0, %v3309
        %v3311 = vadd.s32 %v3306, 1
        %vm3312 = vcmp.gt.s32.totalorder %v3311, 0
        %v3313 = vsel %vm3312, %v3311, 0
        %v3314 = vshrl.u32 %v3313, 5
        %v3315 = vand.u32 %v3313, 31
        %v3316 = vsub.s32 32, %v3315
        %v3317 = vshrl.u32 683565275, %v3316
        %v3318 = vshll.u32 683565275, %v3315
        %v3319 = vshrl.u32 2475754826, %v3316
        %v3320 = vor.u32 %v3318, %v3319
        %v3321 = vshll.u32 2475754826, %v3315
        %v3322 = vshrl.u32 2131351028, %v3316
        %v3323 = vor.u32 %v3321, %v3322
        %v3324 = vshll.u32 2131351028, %v3315
        %v3325 = vshrl.u32 2102212464, %v3316
        %v3326 = vor.u32 %v3324, %v3325
        %v3327 = vshll.u32 2102212464, %v3315
        %v3328 = vshrl.u32 920167782, %v3316
        %v3329 = vor.u32 %v3327, %v3328
        %v3330 = vshll.u32 920167782, %v3315
        %v3331 = vshrl.u32 1326507024, %v3316
        %v3332 = vor.u32 %v3330, %v3331
        %vm3333 = vcmp.lt.s32.totalorder %v3314, 1
        %vm3334 = vcmp.lt.s32.totalorder %v3314, 2
        %vm3335 = vcmp.lt.s32.totalorder %v3314, 3
        %vm3336 = vcmp.lt.s32.totalorder %v3314, 4
        %v3337 = vsel %vm3333, %v3317, %v3320
        %v3338 = vsel %vm3336, %v3326, 2102212464
        %v3339 = vsel %vm3335, %v3323, %v3338
        %v3340 = vsel %vm3334, %v3337, %v3339
        %v3341 = vsel %vm3333, %v3320, %v3323
        %v3342 = vsel %vm3336, %v3329, 920167782
        %v3343 = vsel %vm3335, %v3326, %v3342
        %v3344 = vsel %vm3334, %v3341, %v3343
        %v3345 = vsel %vm3333, %v3323, %v3326
        %v3346 = vsel %vm3336, %v3332, 1326507024
        %v3347 = vsel %vm3335, %v3329, %v3346
        %v3348 = vsel %vm3334, %v3345, %v3347
        %v3349 = vshll.u32 %v3309, 8
        %v3350 = vmul.u32.u64.compose %v3349, %v3348
        %v3351 = vextract.low.u32 %v3350
        %v3352 = vextract.high.u32 %v3350
        %v3353 = vmul.u32.u64.compose %v3349, %v3344
        %v3354 = vextract.low.u32 %v3353
        %v3355 = vextract.high.u32 %v3353
        %v3356 = vmul.u32 %v3349, %v3340
        %v3357 = vadd.s32 %v3352, %v3354
        %vm3358 = vc.u32 %v3352, %v3354
        %v3359 = vadd.s32 %v3355, 1
        %v3360 = vsel %vm3358, %v3359, %v3355
        %v3361 = vadd.s32 %v3356, %v3360
        %v3362 = vadd.s32 %v3361, 536870912
        %v3363 = vshrl.u32 %v3362, 30
        %v3364 = vshll.u32 %v3363, 30
        %v3365 = vsub.s32 %v3361, %v3364
        %vm3366 = vcmp.lt.s32.totalorder %v3365, 0
        %v3367 = vsub.s32 0, %v3365
        %v3368 = vsel %vm3366, %v3367, %v3365
        %v3369 = vclz %v3368
        %v3370 = vsub.s32 %v3369, 2
        %vm3371 = vcmp.gt.s32.totalorder 0, %v3370
        %v3372 = vsel %vm3371, 0, %v3370
        %v3373 = vsub.s32 32, %v3372
        %v3374 = vshll.u32 %v3365, %v3372
        %v3375 = vshrl.u32 %v3357, %v3373
        %v3376 = vor.u32 %v3374, %v3375
        %v3377 = vsub.s32 4294967266, %v3372
        %v3378 = vadd.s32 %v3377, 127
        %v3379 = vshll.u32 %v3378, 23
        %v3380 = vor.u32 4788187, %v3379
        %v3381 = vand.u32 2147483647, %v3380
        %v3383 = vcvt.s32.f32 %v3376
        %v3384 = vmul.f32 %v3383, %v3381
        %v3385 = vxor.u32 %v3384, 2147483648
        %v3386 = vsel %vm3303, %v3385, %v3384
        %v3387 = vsub.s32 4, %v3363
        %v3388 = vsel %vm3303, %v3387, %v3363
        %v3389 = vsel %vm3302, %v2975, %v3386
        %v3390 = vsel %vm3302, 0, %v3388
        %v3391 = vcosq.f32.pop %v3389
        %v3392 = vsinq.f32.pop %v3389
        %vm3393 = vweird.f32 %v2975
        %v3394 = vadd.s32 %v3390, 3
        %v3395 = vand.u32 %v3394, 3
        %vm3396 = vcmp.lt.s32.totalorder %v3395, 2
        %vm3397 = vcmp.eq.s32.totalorder %v3395, 0
        %v3398 = vxor.u32 %v3392, 2147483648
        %v3399 = vsel %vm3397, %v3391, %v3398
        %vm3400 = vcmp.eq.s32.totalorder %v3395, 2
        %v3401 = vxor.u32 %v3391, 2147483648
        %v3402 = vsel %vm3400, %v3401, %v3392
        %v3403 = vsel %vm3396, %v3399, %v3402
        %v3404 = vsel %vm3393, nan, %v3403
        %v3405 = vand.u32 2147483647, %v2979
        %vm3406 = vcmp.le.f32.partialorder %v3405, 0.7853982
        %vm3407 = vcmp.lt.s32.totalorder %v2979, 0
        %v3408 = vand.u32 %v2979, 2139095040
        %v3409 = vshrl.u32 %v3408, 23
        %v3410 = vsub.s32 %v3409, 127
        %v3411 = vand.u32 2147483647, %v2979
        %v3412 = vand.u32 %v3411, 8388607
        %v3413 = vor.u32 %v3412, 8388608
        %v3414 = vsub.s32 0, %v3413
        %v3415 = vadd.s32 %v3410, 1
        %vm3416 = vcmp.gt.s32.totalorder %v3415, 0
        %v3417 = vsel %vm3416, %v3415, 0
        %v3418 = vshrl.u32 %v3417, 5
        %v3419 = vand.u32 %v3417, 31
        %v3420 = vsub.s32 32, %v3419
        %v3421 = vshrl.u32 683565275, %v3420
        %v3422 = vshll.u32 683565275, %v3419
        %v3423 = vshrl.u32 2475754826, %v3420
        %v3424 = vor.u32 %v3422, %v3423
        %v3425 = vshll.u32 2475754826, %v3419
        %v3426 = vshrl.u32 2131351028, %v3420
        %v3427 = vor.u32 %v3425, %v3426
        %v3428 = vshll.u32 2131351028, %v3419
        %v3429 = vshrl.u32 2102212464, %v3420
        %v3430 = vor.u32 %v3428, %v3429
        %v3431 = vshll.u32 2102212464, %v3419
        %v3432 = vshrl.u32 920167782, %v3420
        %v3433 = vor.u32 %v3431, %v3432
        %v3434 = vshll.u32 920167782, %v3419
        %v3435 = vshrl.u32 1326507024, %v3420
        %v3436 = vor.u32 %v3434, %v3435
        %vm3437 = vcmp.lt.s32.totalorder %v3418, 1
        %vm3438 = vcmp.lt.s32.totalorder %v3418, 2
        %vm3439 = vcmp.lt.s32.totalorder %v3418, 3
        %vm3440 = vcmp.lt.s32.totalorder %v3418, 4
        %v3441 = vsel %vm3437, %v3421, %v3424
        %v3442 = vsel %vm3440, %v3430, 2102212464
        %v3443 = vsel %vm3439, %v3427, %v3442
        %v3444 = vsel %vm3438, %v3441, %v3443
        %v3445 = vsel %vm3437, %v3424, %v3427
        %v3446 = vsel %vm3440, %v3433, 920167782
        %v3447 = vsel %vm3439, %v3430, %v3446
        %v3448 = vsel %vm3438, %v3445, %v3447
        %v3449 = vsel %vm3437, %v3427, %v3430
        %v3450 = vsel %vm3440, %v3436, 1326507024
        %v3451 = vsel %vm3439, %v3433, %v3450
        %v3452 = vsel %vm3438, %v3449, %v3451
        %v3453 = vshll.u32 %v3413, 8
        %v3454 = vmul.u32.u64.compose %v3453, %v3452
        %v3455 = vextract.low.u32 %v3454
        %v3456 = vextract.high.u32 %v3454
        %v3457 = vmul.u32.u64.compose %v3453, %v3448
        %v3458 = vextract.low.u32 %v3457
        %v3459 = vextract.high.u32 %v3457
        %v3460 = vmul.u32 %v3453, %v3444
        %v3461 = vadd.s32 %v3456, %v3458
        %vm3462 = vc.u32 %v3456, %v3458
        %v3463 = vadd.s32 %v3459, 1
        %v3464 = vsel %vm3462, %v3463, %v3459
        %v3465 = vadd.s32 %v3460, %v3464
        %v3466 = vadd.s32 %v3465, 536870912
        %v3467 = vshrl.u32 %v3466, 30
        %v3468 = vshll.u32 %v3467, 30
        %v3469 = vsub.s32 %v3465, %v3468
        %vm3470 = vcmp.lt.s32.totalorder %v3469, 0
        %v3471 = vsub.s32 0, %v3469
        %v3472 = vsel %vm3470, %v3471, %v3469
        %v3473 = vclz %v3472
        %v3474 = vsub.s32 %v3473, 2
        %vm3475 = vcmp.gt.s32.totalorder 0, %v3474
        %v3476 = vsel %vm3475, 0, %v3474
        %v3477 = vsub.s32 32, %v3476
        %v3478 = vshll.u32 %v3469, %v3476
        %v3479 = vshrl.u32 %v3461, %v3477
        %v3480 = vor.u32 %v3478, %v3479
        %v3481 = vsub.s32 4294967266, %v3476
        %v3482 = vadd.s32 %v3481, 127
        %v3483 = vshll.u32 %v3482, 23
        %v3484 = vor.u32 4788187, %v3483
        %v3485 = vand.u32 2147483647, %v3484
        %v3487 = vcvt.s32.f32 %v3480
        %v3488 = vmul.f32 %v3487, %v3485
        %v3489 = vxor.u32 %v3488, 2147483648
        %v3490 = vsel %vm3407, %v3489, %v3488
        %v3491 = vsub.s32 4, %v3467
        %v3492 = vsel %vm3407, %v3491, %v3467
        %v3493 = vsel %vm3406, %v2979, %v3490
        %v3494 = vsel %vm3406, 0, %v3492
        %v3495 = vcosq.f32.pop %v3493
        %v3496 = vsinq.f32.pop %v3493
        %vm3497 = vweird.f32 %v2979
        %v3498 = vadd.s32 %v3494, 3
        %v3499 = vand.u32 %v3498, 3
        %vm3500 = vcmp.lt.s32.totalorder %v3499, 2
        %vm3501 = vcmp.eq.s32.totalorder %v3499, 0
        %v3502 = vxor.u32 %v3496, 2147483648
        %v3503 = vsel %vm3501, %v3495, %v3502
        %vm3504 = vcmp.eq.s32.totalorder %v3499, 2
        %v3505 = vxor.u32 %v3495, 2147483648
        %v3506 = vsel %vm3504, %v3505, %v3496
        %v3507 = vsel %vm3500, %v3503, %v3506
        %v3508 = vsel %vm3497, nan, %v3507
        %v3509 = vand.u32 2147483647, %v2981
        %vm3510 = vcmp.le.f32.partialorder %v3509, 0.7853982
        %vm3511 = vcmp.lt.s32.totalorder %v2981, 0
        %v3512 = vand.u32 %v2981, 2139095040
        %v3513 = vshrl.u32 %v3512, 23
        %v3514 = vsub.s32 %v3513, 127
        %v3515 = vand.u32 2147483647, %v2981
        %v3516 = vand.u32 %v3515, 8388607
        %v3517 = vor.u32 %v3516, 8388608
        %v3518 = vsub.s32 0, %v3517
        %v3519 = vadd.s32 %v3514, 1
        %vm3520 = vcmp.gt.s32.totalorder %v3519, 0
        %v3521 = vsel %vm3520, %v3519, 0
        %v3522 = vshrl.u32 %v3521, 5
        %v3523 = vand.u32 %v3521, 31
        %v3524 = vsub.s32 32, %v3523
        %v3525 = vshrl.u32 683565275, %v3524
        %v3526 = vshll.u32 683565275, %v3523
        %v3527 = vshrl.u32 2475754826, %v3524
        %v3528 = vor.u32 %v3526, %v3527
        %v3529 = vshll.u32 2475754826, %v3523
        %v3530 = vshrl.u32 2131351028, %v3524
        %v3531 = vor.u32 %v3529, %v3530
        %v3532 = vshll.u32 2131351028, %v3523
        %v3533 = vshrl.u32 2102212464, %v3524
        %v3534 = vor.u32 %v3532, %v3533
        %v3535 = vshll.u32 2102212464, %v3523
        %v3536 = vshrl.u32 920167782, %v3524
        %v3537 = vor.u32 %v3535, %v3536
        %v3538 = vshll.u32 920167782, %v3523
        %v3539 = vshrl.u32 1326507024, %v3524
        %v3540 = vor.u32 %v3538, %v3539
        %vm3541 = vcmp.lt.s32.totalorder %v3522, 1
        %vm3542 = vcmp.lt.s32.totalorder %v3522, 2
        %vm3543 = vcmp.lt.s32.totalorder %v3522, 3
        %vm3544 = vcmp.lt.s32.totalorder %v3522, 4
        %v3545 = vsel %vm3541, %v3525, %v3528
        %v3546 = vsel %vm3544, %v3534, 2102212464
        %v3547 = vsel %vm3543, %v3531, %v3546
        %v3548 = vsel %vm3542, %v3545, %v3547
        %v3549 = vsel %vm3541, %v3528, %v3531
        %v3550 = vsel %vm3544, %v3537, 920167782
        %v3551 = vsel %vm3543, %v3534, %v3550
        %v3552 = vsel %vm3542, %v3549, %v3551
        %v3553 = vsel %vm3541, %v3531, %v3534
        %v3554 = vsel %vm3544, %v3540, 1326507024
        %v3555 = vsel %vm3543, %v3537, %v3554
        %v3556 = vsel %vm3542, %v3553, %v3555
        %v3557 = vshll.u32 %v3517, 8
        %v3558 = vmul.u32.u64.compose %v3557, %v3556
        %v3559 = vextract.low.u32 %v3558
        %v3560 = vextract.high.u32 %v3558
        %v3561 = vmul.u32.u64.compose %v3557, %v3552
        %v3562 = vextract.low.u32 %v3561
        %v3563 = vextract.high.u32 %v3561
        %v3564 = vmul.u32 %v3557, %v3548
        %v3565 = vadd.s32 %v3560, %v3562
        %vm3566 = vc.u32 %v3560, %v3562
        %v3567 = vadd.s32 %v3563, 1
        %v3568 = vsel %vm3566, %v3567, %v3563
        %v3569 = vadd.s32 %v3564, %v3568
        %v3570 = vadd.s32 %v3569, 536870912
        %v3571 = vshrl.u32 %v3570, 30
        %v3572 = vshll.u32 %v3571, 30
        %v3573 = vsub.s32 %v3569, %v3572
        %vm3574 = vcmp.lt.s32.totalorder %v3573, 0
        %v3575 = vsub.s32 0, %v3573
        %v3576 = vsel %vm3574, %v3575, %v3573
        %v3577 = vclz %v3576
        %v3578 = vsub.s32 %v3577, 2
        %vm3579 = vcmp.gt.s32.totalorder 0, %v3578
        %v3580 = vsel %vm3579, 0, %v3578
        %v3581 = vsub.s32 32, %v3580
        %v3582 = vshll.u32 %v3573, %v3580
        %v3583 = vshrl.u32 %v3565, %v3581
        %v3584 = vor.u32 %v3582, %v3583
        %v3585 = vsub.s32 4294967266, %v3580
        %v3586 = vadd.s32 %v3585, 127
        %v3587 = vshll.u32 %v3586, 23
        %v3588 = vor.u32 4788187, %v3587
        %v3589 = vand.u32 2147483647, %v3588
        %v3591 = vcvt.s32.f32 %v3584
        %v3592 = vmul.f32 %v3591, %v3589
        %v3593 = vxor.u32 %v3592, 2147483648
        %v3594 = vsel %vm3511, %v3593, %v3592
        %v3595 = vsub.s32 4, %v3571
        %v3596 = vsel %vm3511, %v3595, %v3571
        %v3597 = vsel %vm3510, %v2981, %v3594
        %v3598 = vsel %vm3510, 0, %v3596
        %v3599 = vcosq.f32.pop %v3597
        %v3600 = vsinq.f32.pop %v3597
        %vm3601 = vweird.f32 %v2981
        %v3602 = vadd.s32 %v3598, 3
        %v3603 = vand.u32 %v3602, 3
        %vm3604 = vcmp.lt.s32.totalorder %v3603, 2
        %vm3605 = vcmp.eq.s32.totalorder %v3603, 0
        %v3606 = vxor.u32 %v3600, 2147483648
        %v3607 = vsel %vm3605, %v3599, %v3606
        %vm3608 = vcmp.eq.s32.totalorder %v3603, 2
        %v3609 = vxor.u32 %v3599, 2147483648
        %v3610 = vsel %vm3608, %v3609, %v3600
        %v3611 = vsel %vm3604, %v3607, %v3610
        %v3612 = vsel %vm3601, nan, %v3611
        %v3613 = vand.u32 2147483647, %v2985
        %vm3614 = vcmp.le.f32.partialorder %v3613, 0.7853982
        %vm3615 = vcmp.lt.s32.totalorder %v2985, 0
        %v3616 = vand.u32 %v2985, 2139095040
        %v3617 = vshrl.u32 %v3616, 23
        %v3618 = vsub.s32 %v3617, 127
        %v3619 = vand.u32 2147483647, %v2985
        %v3620 = vand.u32 %v3619, 8388607
        %v3621 = vor.u32 %v3620, 8388608
        %v3622 = vsub.s32 0, %v3621
        %v3623 = vadd.s32 %v3618, 1
        %vm3624 = vcmp.gt.s32.totalorder %v3623, 0
        %v3625 = vsel %vm3624, %v3623, 0
        %v3626 = vshrl.u32 %v3625, 5
        %v3627 = vand.u32 %v3625, 31
        %v3628 = vsub.s32 32, %v3627
        %v3629 = vshrl.u32 683565275, %v3628
        %v3630 = vshll.u32 683565275, %v3627
        %v3631 = vshrl.u32 2475754826, %v3628
        %v3632 = vor.u32 %v3630, %v3631
        %v3633 = vshll.u32 2475754826, %v3627
        %v3634 = vshrl.u32 2131351028, %v3628
        %v3635 = vor.u32 %v3633, %v3634
        %v3636 = vshll.u32 2131351028, %v3627
        %v3637 = vshrl.u32 2102212464, %v3628
        %v3638 = vor.u32 %v3636, %v3637
        %v3639 = vshll.u32 2102212464, %v3627
        %v3640 = vshrl.u32 920167782, %v3628
        %v3641 = vor.u32 %v3639, %v3640
        %v3642 = vshll.u32 920167782, %v3627
        %v3643 = vshrl.u32 1326507024, %v3628
        %v3644 = vor.u32 %v3642, %v3643
        %vm3645 = vcmp.lt.s32.totalorder %v3626, 1
        %vm3646 = vcmp.lt.s32.totalorder %v3626, 2
        %vm3647 = vcmp.lt.s32.totalorder %v3626, 3
        %vm3648 = vcmp.lt.s32.totalorder %v3626, 4
        %v3649 = vsel %vm3645, %v3629, %v3632
        %v3650 = vsel %vm3648, %v3638, 2102212464
        %v3651 = vsel %vm3647, %v3635, %v3650
        %v3652 = vsel %vm3646, %v3649, %v3651
        %v3653 = vsel %vm3645, %v3632, %v3635
        %v3654 = vsel %vm3648, %v3641, 920167782
        %v3655 = vsel %vm3647, %v3638, %v3654
        %v3656 = vsel %vm3646, %v3653, %v3655
        %v3657 = vsel %vm3645, %v3635, %v3638
        %v3658 = vsel %vm3648, %v3644, 1326507024
        %v3659 = vsel %vm3647, %v3641, %v3658
        %v3660 = vsel %vm3646, %v3657, %v3659
        %v3661 = vshll.u32 %v3621, 8
        %v3662 = vmul.u32.u64.compose %v3661, %v3660
        %v3663 = vextract.low.u32 %v3662
        %v3664 = vextract.high.u32 %v3662
        %v3665 = vmul.u32.u64.compose %v3661, %v3656
        %v3666 = vextract.low.u32 %v3665
        %v3667 = vextract.high.u32 %v3665
        %v3668 = vmul.u32 %v3661, %v3652
        %v3669 = vadd.s32 %v3664, %v3666
        %vm3670 = vc.u32 %v3664, %v3666
        %v3671 = vadd.s32 %v3667, 1
        %v3672 = vsel %vm3670, %v3671, %v3667
        %v3673 = vadd.s32 %v3668, %v3672
        %v3674 = vadd.s32 %v3673, 536870912
        %v3675 = vshrl.u32 %v3674, 30
        %v3676 = vshll.u32 %v3675, 30
        %v3677 = vsub.s32 %v3673, %v3676
        %vm3678 = vcmp.lt.s32.totalorder %v3677, 0
        %v3679 = vsub.s32 0, %v3677
        %v3680 = vsel %vm3678, %v3679, %v3677
        %v3681 = vclz %v3680
        %v3682 = vsub.s32 %v3681, 2
        %vm3683 = vcmp.gt.s32.totalorder 0, %v3682
        %v3684 = vsel %vm3683, 0, %v3682
        %v3685 = vsub.s32 32, %v3684
        %v3686 = vshll.u32 %v3677, %v3684
        %v3687 = vshrl.u32 %v3669, %v3685
        %v3688 = vor.u32 %v3686, %v3687
        %v3689 = vsub.s32 4294967266, %v3684
        %v3690 = vadd.s32 %v3689, 127
        %v3691 = vshll.u32 %v3690, 23
        %v3692 = vor.u32 4788187, %v3691
        %v3693 = vand.u32 2147483647, %v3692
        %v3695 = vcvt.s32.f32 %v3688
        %v3696 = vmul.f32 %v3695, %v3693
        %v3697 = vxor.u32 %v3696, 2147483648
        %v3698 = vsel %vm3615, %v3697, %v3696
        %v3699 = vsub.s32 4, %v3675
        %v3700 = vsel %vm3615, %v3699, %v3675
        %v3701 = vsel %vm3614, %v2985, %v3698
        %v3702 = vsel %vm3614, 0, %v3700
        %v3703 = vcosq.f32.pop %v3701
        %v3704 = vsinq.f32.pop %v3701
        %vm3705 = vweird.f32 %v2985
        %v3706 = vadd.s32 %v3702, 3
        %v3707 = vand.u32 %v3706, 3
        %vm3708 = vcmp.lt.s32.totalorder %v3707, 2
        %vm3709 = vcmp.eq.s32.totalorder %v3707, 0
        %v3710 = vxor.u32 %v3704, 2147483648
        %v3711 = vsel %vm3709, %v3703, %v3710
        %vm3712 = vcmp.eq.s32.totalorder %v3707, 2
        %v3713 = vxor.u32 %v3703, 2147483648
        %v3714 = vsel %vm3712, %v3713, %v3704
        %v3715 = vsel %vm3708, %v3711, %v3714
        %v3716 = vsel %vm3705, nan, %v3715
        %v3717 = vand.u32 2147483647, %v2987
        %vm3718 = vcmp.le.f32.partialorder %v3717, 0.7853982
        %vm3719 = vcmp.lt.s32.totalorder %v2987, 0
        %v3720 = vand.u32 %v2987, 2139095040
        %v3721 = vshrl.u32 %v3720, 23
        %v3722 = vsub.s32 %v3721, 127
        %v3723 = vand.u32 2147483647, %v2987
        %v3724 = vand.u32 %v3723, 8388607
        %v3725 = vor.u32 %v3724, 8388608
        %v3726 = vsub.s32 0, %v3725
        %v3727 = vadd.s32 %v3722, 1
        %vm3728 = vcmp.gt.s32.totalorder %v3727, 0
        %v3729 = vsel %vm3728, %v3727, 0
        %v3730 = vshrl.u32 %v3729, 5
        %v3731 = vand.u32 %v3729, 31
        %v3732 = vsub.s32 32, %v3731
        %v3733 = vshrl.u32 683565275, %v3732
        %v3734 = vshll.u32 683565275, %v3731
        %v3735 = vshrl.u32 2475754826, %v3732
        %v3736 = vor.u32 %v3734, %v3735
        %v3737 = vshll.u32 2475754826, %v3731
        %v3738 = vshrl.u32 2131351028, %v3732
        %v3739 = vor.u32 %v3737, %v3738
        %v3740 = vshll.u32 2131351028, %v3731
        %v3741 = vshrl.u32 2102212464, %v3732
        %v3742 = vor.u32 %v3740, %v3741
        %v3743 = vshll.u32 2102212464, %v3731
        %v3744 = vshrl.u32 920167782, %v3732
        %v3745 = vor.u32 %v3743, %v3744
        %v3746 = vshll.u32 920167782, %v3731
        %v3747 = vshrl.u32 1326507024, %v3732
        %v3748 = vor.u32 %v3746, %v3747
        %vm3749 = vcmp.lt.s32.totalorder %v3730, 1
        %vm3750 = vcmp.lt.s32.totalorder %v3730, 2
        %vm3751 = vcmp.lt.s32.totalorder %v3730, 3
        %vm3752 = vcmp.lt.s32.totalorder %v3730, 4
        %v3753 = vsel %vm3749, %v3733, %v3736
        %v3754 = vsel %vm3752, %v3742, 2102212464
        %v3755 = vsel %vm3751, %v3739, %v3754
        %v3756 = vsel %vm3750, %v3753, %v3755
        %v3757 = vsel %vm3749, %v3736, %v3739
        %v3758 = vsel %vm3752, %v3745, 920167782
        %v3759 = vsel %vm3751, %v3742, %v3758
        %v3760 = vsel %vm3750, %v3757, %v3759
        %v3761 = vsel %vm3749, %v3739, %v3742
        %v3762 = vsel %vm3752, %v3748, 1326507024
        %v3763 = vsel %vm3751, %v3745, %v3762
        %v3764 = vsel %vm3750, %v3761, %v3763
        %v3765 = vshll.u32 %v3725, 8
        %v3766 = vmul.u32.u64.compose %v3765, %v3764
        %v3767 = vextract.low.u32 %v3766
        %v3768 = vextract.high.u32 %v3766
        %v3769 = vmul.u32.u64.compose %v3765, %v3760
        %v3770 = vextract.low.u32 %v3769
        %v3771 = vextract.high.u32 %v3769
        %v3772 = vmul.u32 %v3765, %v3756
        %v3773 = vadd.s32 %v3768, %v3770
        %vm3774 = vc.u32 %v3768, %v3770
        %v3775 = vadd.s32 %v3771, 1
        %v3776 = vsel %vm3774, %v3775, %v3771
        %v3777 = vadd.s32 %v3772, %v3776
        %v3778 = vadd.s32 %v3777, 536870912
        %v3779 = vshrl.u32 %v3778, 30
        %v3780 = vshll.u32 %v3779, 30
        %v3781 = vsub.s32 %v3777, %v3780
        %vm3782 = vcmp.lt.s32.totalorder %v3781, 0
        %v3783 = vsub.s32 0, %v3781
        %v3784 = vsel %vm3782, %v3783, %v3781
        %v3785 = vclz %v3784
        %v3786 = vsub.s32 %v3785, 2
        %vm3787 = vcmp.gt.s32.totalorder 0, %v3786
        %v3788 = vsel %vm3787, 0, %v3786
        %v3789 = vsub.s32 32, %v3788
        %v3790 = vshll.u32 %v3781, %v3788
        %v3791 = vshrl.u32 %v3773, %v3789
        %v3792 = vor.u32 %v3790, %v3791
        %v3793 = vsub.s32 4294967266, %v3788
        %v3794 = vadd.s32 %v3793, 127
        %v3795 = vshll.u32 %v3794, 23
        %v3796 = vor.u32 4788187, %v3795
        %v3797 = vand.u32 2147483647, %v3796
        %v3799 = vcvt.s32.f32 %v3792
        %v3800 = vmul.f32 %v3799, %v3797
        %v3801 = vxor.u32 %v3800, 2147483648
        %v3802 = vsel %vm3719, %v3801, %v3800
        %v3803 = vsub.s32 4, %v3779
        %v3804 = vsel %vm3719, %v3803, %v3779
        %v3805 = vsel %vm3718, %v2987, %v3802
        %v3806 = vsel %vm3718, 0, %v3804
        %v3807 = vcosq.f32.pop %v3805
        %v3808 = vsinq.f32.pop %v3805
        %vm3809 = vweird.f32 %v2987
        %v3810 = vadd.s32 %v3806, 3
        %v3811 = vand.u32 %v3810, 3
        %vm3812 = vcmp.lt.s32.totalorder %v3811, 2
        %vm3813 = vcmp.eq.s32.totalorder %v3811, 0
        %v3814 = vxor.u32 %v3808, 2147483648
        %v3815 = vsel %vm3813, %v3807, %v3814
        %vm3816 = vcmp.eq.s32.totalorder %v3811, 2
        %v3817 = vxor.u32 %v3807, 2147483648
        %v3818 = vsel %vm3816, %v3817, %v3808
        %v3819 = vsel %vm3812, %v3815, %v3818
        %v3820 = vsel %vm3809, nan, %v3819
        %v3821 = vld [vmem:[%s10] sm:$0x1]
        %v3822 = vld [vmem:[#allocation2] sm:$0x1]
        %3824 = vset.pattern.permute.xlu0 0
        %3825 = vperm.xlu0 %3824, %v3822
        %v3826 = vpop.permute.xlu0 %3825
        %v3828 = vlaneseq
        %v3829 = vshrl.u32 %v3828, 7
        %v3830 = vsub.s32 0, %v3829
        %v3831 = vrot.slane %v3826, %v3830
        %v3833 = vsel %vm1924, %v3821, 0
        %3835 = vmatprep.subr.mxu0 %v3196
        %3836 = vmatpush1.msra.mxu0 %v3092
        %3837 = vmatprep.subr.mxu0 %v3404
        %3838 = vmatpush1.msra.mxu0 %v3300
        %3839 = vmatprep.subr.mxu0 %v3612
        %3840 = vmatpush1.msra.mxu0 %v3508
        %3841 = vmatprep.subr.mxu0 %v3820
        %3842 = vmatpush1.msra.mxu0 %v3716
        %3843 = vmatprep.subr.mxu0 0.0
        %3844 = vmatpush1.msra.mxu0 0.0
        %3845 = vmatprep.subr.mxu0 0.0
        %3846 = vmatpush1.msra.mxu0 0.0
        %3847 = vmatprep.subr.mxu0 0.0
        %3848 = vmatpush1.msra.mxu0 0.0
        %3849 = vmatprep.subr.mxu0 0.0
        %3850 = vmatpush1.msra.mxu0 0.0
        %3851 = vmatprep.subr.mxu0 0.0
        %3852 = vmatpush1.msra.mxu0 0.0
        %3853 = vmatprep.subr.mxu0 0.0
        %3854 = vmatpush1.msra.mxu0 0.0
        %3855 = vmatprep.subr.mxu0 0.0
        %3856 = vmatpush1.msra.mxu0 0.0
        %3857 = vmatprep.subr.mxu0 0.0
        %3858 = vmatpush1.msra.mxu0 0.0
        %3859 = vmatprep.subr.mxu0 0.0
        %3860 = vmatpush1.msra.mxu0 0.0
        %3861 = vmatprep.subr.mxu0 0.0
        %3862 = vmatpush1.msra.mxu0 0.0
        %3863 = vmatprep.subr.mxu0 0.0
        %3864 = vmatpush1.msra.mxu0 0.0
        %3865 = vmatprep.subr.mxu0 0.0
        %3866 = vmatpush1.msra.mxu0 0.0
        %3867 = vmatprep.subr.mxu0 0.0
        %3868 = vmatpush1.msra.mxu0 0.0
        %3869 = vmatprep.subr.mxu0 0.0
        %3870 = vmatpush1.msra.mxu0 0.0
        %3871 = vmatprep.subr.mxu0 0.0
        %3872 = vmatpush1.msra.mxu0 0.0
        %3873 = vmatprep.subr.mxu0 0.0
        %3874 = vmatpush1.msra.mxu0 0.0
        %3875 = vmatprep.subr.mxu0 0.0
        %3876 = vmatpush1.msra.mxu0 0.0
        %3877 = vmatprep.subr.mxu0 0.0
        %3878 = vmatpush1.msra.mxu0 0.0
        %3879 = vmatprep.subr.mxu0 0.0
        %3880 = vmatpush1.msra.mxu0 0.0
        %3881 = vmatprep.subr.mxu0 0.0
        %3882 = vmatpush1.msra.mxu0 0.0
        %3883 = vmatprep.subr.mxu0 0.0
        %3884 = vmatpush1.msra.mxu0 0.0
        %3885 = vmatprep.subr.mxu0 0.0
        %3886 = vmatpush1.msra.mxu0 0.0
        %3887 = vmatprep.subr.mxu0 0.0
        %3888 = vmatpush1.msra.mxu0 0.0
        %3889 = vmatprep.subr.mxu0 0.0
        %3890 = vmatpush1.msra.mxu0 0.0
        %3891 = vmatprep.subr.mxu0 0.0
        %3892 = vmatpush1.msra.mxu0 0.0
        %3893 = vmatprep.subr.mxu0 0.0
        %3894 = vmatpush1.msra.mxu0 0.0
        %3895 = vmatprep.subr.mxu0 0.0
        %3896 = vmatpush1.msra.mxu0 0.0
        %3897 = vmatprep.subr.mxu0 0.0
        %3898 = vmatpush1.msra.mxu0 0.0
        %3899 = vmatprep.mubr.f32.mxu0 0.0
        %3900 = vmatmul.mubr.f32.gmra.mrb[0].mxu0 %v3833
        %v3901 = vpop.f32.mrb[0].mxu0
        %v3902 = vadd.f32 %v3831, %v3901
        %v3903 = vpop.f32.mrb[0].mxu0
        %v3904 = vadd.f32 %v3831, %v3903
        %3905 = vdwg.mxu0
        %v3906 = vand.u32 2147483647, %v3902
        %vm3907 = vcmp.le.f32.partialorder %v3906, 0.7853982
        %vm3908 = vcmp.lt.s32.totalorder %v3902, 0
        %v3909 = vand.u32 %v3902, 2139095040
        %v3910 = vshrl.u32 %v3909, 23
        %v3911 = vsub.s32 %v3910, 127
        %v3912 = vand.u32 2147483647, %v3902
        %v3913 = vand.u32 %v3912, 8388607
        %v3914 = vor.u32 %v3913, 8388608
        %v3915 = vsub.s32 0, %v3914
        %v3916 = vadd.s32 %v3911, 1
        %vm3917 = vcmp.gt.s32.totalorder %v3916, 0
        %v3918 = vsel %vm3917, %v3916, 0
        %v3919 = vshrl.u32 %v3918, 5
        %v3920 = vand.u32 %v3918, 31
        %v3921 = vsub.s32 32, %v3920
        %v3922 = vshrl.u32 683565275, %v3921
        %v3923 = vshll.u32 683565275, %v3920
        %v3924 = vshrl.u32 2475754826, %v3921
        %v3925 = vor.u32 %v3923, %v3924
        %v3926 = vshll.u32 2475754826, %v3920
        %v3927 = vshrl.u32 2131351028, %v3921
        %v3928 = vor.u32 %v3926, %v3927
        %v3929 = vshll.u32 2131351028, %v3920
        %v3930 = vshrl.u32 2102212464, %v3921
        %v3931 = vor.u32 %v3929, %v3930
        %v3932 = vshll.u32 2102212464, %v3920
        %v3933 = vshrl.u32 920167782, %v3921
        %v3934 = vor.u32 %v3932, %v3933
        %v3935 = vshll.u32 920167782, %v3920
        %v3936 = vshrl.u32 1326507024, %v3921
        %v3937 = vor.u32 %v3935, %v3936
        %vm3938 = vcmp.lt.s32.totalorder %v3919, 1
        %vm3939 = vcmp.lt.s32.totalorder %v3919, 2
        %vm3940 = vcmp.lt.s32.totalorder %v3919, 3
        %vm3941 = vcmp.lt.s32.totalorder %v3919, 4
        %v3942 = vsel %vm3938, %v3922, %v3925
        %v3943 = vsel %vm3941, %v3931, 2102212464
        %v3944 = vsel %vm3940, %v3928, %v3943
        %v3945 = vsel %vm3939, %v3942, %v3944
        %v3946 = vsel %vm3938, %v3925, %v3928
        %v3947 = vsel %vm3941, %v3934, 920167782
        %v3948 = vsel %vm3940, %v3931, %v3947
        %v3949 = vsel %vm3939, %v3946, %v3948
        %v3950 = vsel %vm3938, %v3928, %v3931
        %v3951 = vsel %vm3941, %v3937, 1326507024
        %v3952 = vsel %vm3940, %v3934, %v3951
        %v3953 = vsel %vm3939, %v3950, %v3952
        %v3954 = vshll.u32 %v3914, 8
        %v3955 = vmul.u32.u64.compose %v3954, %v3953
        %v3956 = vextract.low.u32 %v3955
        %v3957 = vextract.high.u32 %v3955
        %v3958 = vmul.u32.u64.compose %v3954, %v3949
        %v3959 = vextract.low.u32 %v3958
        %v3960 = vextract.high.u32 %v3958
        %v3961 = vmul.u32 %v3954, %v3945
        %v3962 = vadd.s32 %v3957, %v3959
        %vm3963 = vc.u32 %v3957, %v3959
        %v3964 = vadd.s32 %v3960, 1
        %v3965 = vsel %vm3963, %v3964, %v3960
        %v3966 = vadd.s32 %v3961, %v3965
        %v3967 = vadd.s32 %v3966, 536870912
        %v3968 = vshrl.u32 %v3967, 30
        %v3969 = vshll.u32 %v3968, 30
        %v3970 = vsub.s32 %v3966, %v3969
        %vm3971 = vcmp.lt.s32.totalorder %v3970, 0
        %v3972 = vsub.s32 0, %v3970
        %v3973 = vsel %vm3971, %v3972, %v3970
        %v3974 = vclz %v3973
        %v3975 = vsub.s32 %v3974, 2
        %vm3976 = vcmp.gt.s32.totalorder 0, %v3975
        %v3977 = vsel %vm3976, 0, %v3975
        %v3978 = vsub.s32 32, %v3977
        %v3979 = vshll.u32 %v3970, %v3977
        %v3980 = vshrl.u32 %v3962, %v3978
        %v3981 = vor.u32 %v3979, %v3980
        %v3982 = vsub.s32 4294967266, %v3977
        %v3983 = vadd.s32 %v3982, 127
        %v3984 = vshll.u32 %v3983, 23
        %v3985 = vor.u32 4788187, %v3984
        %v3986 = vand.u32 2147483647, %v3985
        %v3988 = vcvt.s32.f32 %v3981
        %v3989 = vmul.f32 %v3988, %v3986
        %v3990 = vxor.u32 %v3989, 2147483648
        %v3991 = vsel %vm3908, %v3990, %v3989
        %v3992 = vsub.s32 4, %v3968
        %v3993 = vsel %vm3908, %v3992, %v3968
        %v3994 = vsel %vm3907, %v3902, %v3991
        %v3995 = vsel %vm3907, 0, %v3993
        %v3996 = vcosq.f32.pop %v3994
        %v3997 = vsinq.f32.pop %v3994
        %vm3998 = vweird.f32 %v3902
        %v3999 = vadd.s32 %v3995, 3
        %v4000 = vand.u32 %v3999, 3
        %vm4001 = vcmp.lt.s32.totalorder %v4000, 2
        %vm4002 = vcmp.eq.s32.totalorder %v4000, 0
        %v4003 = vxor.u32 %v3997, 2147483648
        %v4004 = vsel %vm4002, %v3996, %v4003
        %vm4005 = vcmp.eq.s32.totalorder %v4000, 2
        %v4006 = vxor.u32 %v3996, 2147483648
        %v4007 = vsel %vm4005, %v4006, %v3997
        %v4008 = vsel %vm4001, %v4004, %v4007
        %v4009 = vsel %vm3998, nan, %v4008
        %v4010 = vand.u32 2147483647, %v3904
        %vm4011 = vcmp.le.f32.partialorder %v4010, 0.7853982
        %vm4012 = vcmp.lt.s32.totalorder %v3904, 0
        %v4013 = vand.u32 %v3904, 2139095040
        %v4014 = vshrl.u32 %v4013, 23
        %v4015 = vsub.s32 %v4014, 127
        %v4016 = vand.u32 2147483647, %v3904
        %v4017 = vand.u32 %v4016, 8388607
        %v4018 = vor.u32 %v4017, 8388608
        %v4019 = vsub.s32 0, %v4018
        %v4020 = vadd.s32 %v4015, 1
        %vm4021 = vcmp.gt.s32.totalorder %v4020, 0
        %v4022 = vsel %vm4021, %v4020, 0
        %v4023 = vshrl.u32 %v4022, 5
        %v4024 = vand.u32 %v4022, 31
        %v4025 = vsub.s32 32, %v4024
        %v4026 = vshrl.u32 683565275, %v4025
        %v4027 = vshll.u32 683565275, %v4024
        %v4028 = vshrl.u32 2475754826, %v4025
        %v4029 = vor.u32 %v4027, %v4028
        %v4030 = vshll.u32 2475754826, %v4024
        %v4031 = vshrl.u32 2131351028, %v4025
        %v4032 = vor.u32 %v4030, %v4031
        %v4033 = vshll.u32 2131351028, %v4024
        %v4034 = vshrl.u32 2102212464, %v4025
        %v4035 = vor.u32 %v4033, %v4034
        %v4036 = vshll.u32 2102212464, %v4024
        %v4037 = vshrl.u32 920167782, %v4025
        %v4038 = vor.u32 %v4036, %v4037
        %v4039 = vshll.u32 920167782, %v4024
        %v4040 = vshrl.u32 1326507024, %v4025
        %v4041 = vor.u32 %v4039, %v4040
        %vm4042 = vcmp.lt.s32.totalorder %v4023, 1
        %vm4043 = vcmp.lt.s32.totalorder %v4023, 2
        %vm4044 = vcmp.lt.s32.totalorder %v4023, 3
        %vm4045 = vcmp.lt.s32.totalorder %v4023, 4
        %v4046 = vsel %vm4042, %v4026, %v4029
        %v4047 = vsel %vm4045, %v4035, 2102212464
        %v4048 = vsel %vm4044, %v4032, %v4047
        %v4049 = vsel %vm4043, %v4046, %v4048
        %v4050 = vsel %vm4042, %v4029, %v4032
        %v4051 = vsel %vm4045, %v4038, 920167782
        %v4052 = vsel %vm4044, %v4035, %v4051
        %v4053 = vsel %vm4043, %v4050, %v4052
        %v4054 = vsel %vm4042, %v4032, %v4035
        %v4055 = vsel %vm4045, %v4041, 1326507024
        %v4056 = vsel %vm4044, %v4038, %v4055
        %v4057 = vsel %vm4043, %v4054, %v4056
        %v4058 = vshll.u32 %v4018, 8
        %v4059 = vmul.u32.u64.compose %v4058, %v4057
        %v4060 = vextract.low.u32 %v4059
        %v4061 = vextract.high.u32 %v4059
        %v4062 = vmul.u32.u64.compose %v4058, %v4053
        %v4063 = vextract.low.u32 %v4062
        %v4064 = vextract.high.u32 %v4062
        %v4065 = vmul.u32 %v4058, %v4049
        %v4066 = vadd.s32 %v4061, %v4063
        %vm4067 = vc.u32 %v4061, %v4063
        %v4068 = vadd.s32 %v4064, 1
        %v4069 = vsel %vm4067, %v4068, %v4064
        %v4070 = vadd.s32 %v4065, %v4069
        %v4071 = vadd.s32 %v4070, 536870912
        %v4072 = vshrl.u32 %v4071, 30
        %v4073 = vshll.u32 %v4072, 30
        %v4074 = vsub.s32 %v4070, %v4073
        %vm4075 = vcmp.lt.s32.totalorder %v4074, 0
        %v4076 = vsub.s32 0, %v4074
        %v4077 = vsel %vm4075, %v4076, %v4074
        %v4078 = vclz %v4077
        %v4079 = vsub.s32 %v4078, 2
        %vm4080 = vcmp.gt.s32.totalorder 0, %v4079
        %v4081 = vsel %vm4080, 0, %v4079
        %v4082 = vsub.s32 32, %v4081
        %v4083 = vshll.u32 %v4074, %v4081
        %v4084 = vshrl.u32 %v4066, %v4082
        %v4085 = vor.u32 %v4083, %v4084
        %v4086 = vsub.s32 4294967266, %v4081
        %v4087 = vadd.s32 %v4086, 127
        %v4088 = vshll.u32 %v4087, 23
        %v4089 = vor.u32 4788187, %v4088
        %v4090 = vand.u32 2147483647, %v4089
        %v4092 = vcvt.s32.f32 %v4085
        %v4093 = vmul.f32 %v4092, %v4090
        %v4094 = vxor.u32 %v4093, 2147483648
        %v4095 = vsel %vm4012, %v4094, %v4093
        %v4096 = vsub.s32 4, %v4072
        %v4097 = vsel %vm4012, %v4096, %v4072
        %v4098 = vsel %vm4011, %v3904, %v4095
        %v4099 = vsel %vm4011, 0, %v4097
        %v4100 = vcosq.f32.pop %v4098
        %v4101 = vsinq.f32.pop %v4098
        %vm4102 = vweird.f32 %v3904
        %v4103 = vadd.s32 %v4099, 3
        %v4104 = vand.u32 %v4103, 3
        %vm4105 = vcmp.lt.s32.totalorder %v4104, 2
        %vm4106 = vcmp.eq.s32.totalorder %v4104, 0
        %v4107 = vxor.u32 %v4101, 2147483648
        %v4108 = vsel %vm4106, %v4100, %v4107
        %vm4109 = vcmp.eq.s32.totalorder %v4104, 2
        %v4110 = vxor.u32 %v4100, 2147483648
        %v4111 = vsel %vm4109, %v4110, %v4101
        %v4112 = vsel %vm4105, %v4108, %v4111
        %v4113 = vsel %vm4102, nan, %v4112
        %v4114 = vmul.f32 %v4009, 2.0
        %v4115 = vmul.f32 %v4113, 2.0
        %v4118 = vcombine.low %v4114, %v4115
        %v4120 = vunpack.c.l.s4 1966171168
        %v4121 = vunpack.c.0.s8 %v4120
        %v4122 = vlaneseq
        %v4123 = vshrl.u32 %v4122, 7
        %v4124 = vsub.s32 %v4121, %v4123
        %v4125 = vrot.slane %v4118, %v4124
        %v4127 = vunpack.c.l.s4 1966171168
        %v4128 = vunpack.c.0.s8 %v4127
        %v4129 = vlaneseq
        %v4130 = vshrl.u32 %v4129, 7
        %v4131 = vsub.s32 %v4128, %v4130
        %v4132 = vrot.slane %v4125, %v4131
        %v4134 = vlaneseq
        %vm4135 = vcmp.ge.s32.totalorder %v4134, 0
        %vm4136 = vcmp.lt.s32.totalorder %v4134, 256
        %vm4137 = vmand %vm4135, %vm4136
        %4138 = vst.msk [vmem:[%s630] sm:$0x3] %vm4137, %v4132
        %v4139 = vld [vmem:[%s12] sm:$0x7]
        %v4140 = vld [vmem:[%s13] sm:$0x7]
        %4142 = vset.pattern.permute.xlu0 0
        %4143 = vperm.xlu0 %4142, %v4140
        %v4144 = vpop.permute.xlu0 %4143
        %v4147 = vsel %vm1924, %v4139, 0
        %4149 = vmatprep.subr.mxu0 %v3196
        %4150 = vmatpush1.msra.mxu0 %v3092
        %4151 = vmatprep.subr.mxu0 %v3404
        %4152 = vmatpush1.msra.mxu0 %v3300
        %4153 = vmatprep.subr.mxu0 %v3612
        %4154 = vmatpush1.msra.mxu0 %v3508
        %4155 = vmatprep.subr.mxu0 %v3820
        %4156 = vmatpush1.msra.mxu0 %v3716
        %4157 = vmatprep.subr.mxu0 0.0
        %4158 = vmatpush1.msra.mxu0 0.0
        %4159 = vmatprep.subr.mxu0 0.0
        %4160 = vmatpush1.msra.mxu0 0.0
        %4161 = vmatprep.subr.mxu0 0.0
        %4162 = vmatpush1.msra.mxu0 0.0
        %4163 = vmatprep.subr.mxu0 0.0
        %4164 = vmatpush1.msra.mxu0 0.0
        %4165 = vmatprep.subr.mxu0 0.0
        %4166 = vmatpush1.msra.mxu0 0.0
        %4167 = vmatprep.subr.mxu0 0.0
        %4168 = vmatpush1.msra.mxu0 0.0
        %4169 = vmatprep.subr.mxu0 0.0
        %4170 = vmatpush1.msra.mxu0 0.0
        %4171 = vmatprep.subr.mxu0 0.0
        %4172 = vmatpush1.msra.mxu0 0.0
        %4173 = vmatprep.subr.mxu0 0.0
        %4174 = vmatpush1.msra.mxu0 0.0
        %4175 = vmatprep.subr.mxu0 0.0
        %4176 = vmatpush1.msra.mxu0 0.0
        %4177 = vmatprep.subr.mxu0 0.0
        %4178 = vmatpush1.msra.mxu0 0.0
        %4179 = vmatprep.subr.mxu0 0.0
        %4180 = vmatpush1.msra.mxu0 0.0
        %4181 = vmatprep.subr.mxu0 0.0
        %4182 = vmatpush1.msra.mxu0 0.0
        %4183 = vmatprep.subr.mxu0 0.0
        %4184 = vmatpush1.msra.mxu0 0.0
        %4185 = vmatprep.subr.mxu0 0.0
        %4186 = vmatpush1.msra.mxu0 0.0
        %4187 = vmatprep.subr.mxu0 0.0
        %4188 = vmatpush1.msra.mxu0 0.0
        %4189 = vmatprep.subr.mxu0 0.0
        %4190 = vmatpush1.msra.mxu0 0.0
        %4191 = vmatprep.subr.mxu0 0.0
        %4192 = vmatpush1.msra.mxu0 0.0
        %4193 = vmatprep.subr.mxu0 0.0
        %4194 = vmatpush1.msra.mxu0 0.0
        %4195 = vmatprep.subr.mxu0 0.0
        %4196 = vmatpush1.msra.mxu0 0.0
        %4197 = vmatprep.subr.mxu0 0.0
        %4198 = vmatpush1.msra.mxu0 0.0
        %4199 = vmatprep.subr.mxu0 0.0
        %4200 = vmatpush1.msra.mxu0 0.0
        %4201 = vmatprep.subr.mxu0 0.0
        %4202 = vmatpush1.msra.mxu0 0.0
        %4203 = vmatprep.subr.mxu0 0.0
        %4204 = vmatpush1.msra.mxu0 0.0
        %4205 = vmatprep.subr.mxu0 0.0
        %4206 = vmatpush1.msra.mxu0 0.0
        %4207 = vmatprep.subr.mxu0 0.0
        %4208 = vmatpush1.msra.mxu0 0.0
        %4209 = vmatprep.subr.mxu0 0.0
        %4210 = vmatpush1.msra.mxu0 0.0
        %4211 = vmatprep.subr.mxu0 0.0
        %4212 = vmatpush1.msra.mxu0 0.0
        %4213 = vmatprep.mubr.f32.mxu0 0.0
        %4214 = vmatmul.mubr.f32.gmra.mrb[0].mxu0 %v4147
        %v4215 = vpop.f32.mrb[0].mxu0
        %v4216 = vadd.f32 %v4144, %v4215
        %v4217 = vpop.f32.mrb[0].mxu0
        %v4218 = vadd.f32 %v4144, %v4217
        %4219 = vdwg.mxu0
        %v4220 = vand.u32 2147483647, %v4216
        %vm4221 = vcmp.le.f32.partialorder %v4220, 0.7853982
        %vm4222 = vcmp.lt.s32.totalorder %v4216, 0
        %v4223 = vand.u32 %v4216, 2139095040
        %v4224 = vshrl.u32 %v4223, 23
        %v4225 = vsub.s32 %v4224, 127
        %v4226 = vand.u32 2147483647, %v4216
        %v4227 = vand.u32 %v4226, 8388607
        %v4228 = vor.u32 %v4227, 8388608
        %v4229 = vsub.s32 0, %v4228
        %v4230 = vadd.s32 %v4225, 1
        %vm4231 = vcmp.gt.s32.totalorder %v4230, 0
        %v4232 = vsel %vm4231, %v4230, 0
        %v4233 = vshrl.u32 %v4232, 5
        %v4234 = vand.u32 %v4232, 31
        %v4235 = vsub.s32 32, %v4234
        %v4236 = vshrl.u32 683565275, %v4235
        %v4237 = vshll.u32 683565275, %v4234
        %v4238 = vshrl.u32 2475754826, %v4235
        %v4239 = vor.u32 %v4237, %v4238
        %v4240 = vshll.u32 2475754826, %v4234
        %v4241 = vshrl.u32 2131351028, %v4235
        %v4242 = vor.u32 %v4240, %v4241
        %v4243 = vshll.u32 2131351028, %v4234
        %v4244 = vshrl.u32 2102212464, %v4235
        %v4245 = vor.u32 %v4243, %v4244
        %v4246 = vshll.u32 2102212464, %v4234
        %v4247 = vshrl.u32 920167782, %v4235
        %v4248 = vor.u32 %v4246, %v4247
        %v4249 = vshll.u32 920167782, %v4234
        %v4250 = vshrl.u32 1326507024, %v4235
        %v4251 = vor.u32 %v4249, %v4250
        %vm4252 = vcmp.lt.s32.totalorder %v4233, 1
        %vm4253 = vcmp.lt.s32.totalorder %v4233, 2
        %vm4254 = vcmp.lt.s32.totalorder %v4233, 3
        %vm4255 = vcmp.lt.s32.totalorder %v4233, 4
        %v4256 = vsel %vm4252, %v4236, %v4239
        %v4257 = vsel %vm4255, %v4245, 2102212464
        %v4258 = vsel %vm4254, %v4242, %v4257
        %v4259 = vsel %vm4253, %v4256, %v4258
        %v4260 = vsel %vm4252, %v4239, %v4242
        %v4261 = vsel %vm4255, %v4248, 920167782
        %v4262 = vsel %vm4254, %v4245, %v4261
        %v4263 = vsel %vm4253, %v4260, %v4262
        %v4264 = vsel %vm4252, %v4242, %v4245
        %v4265 = vsel %vm4255, %v4251, 1326507024
        %v4266 = vsel %vm4254, %v4248, %v4265
        %v4267 = vsel %vm4253, %v4264, %v4266
        %v4268 = vshll.u32 %v4228, 8
        %v4269 = vmul.u32.u64.compose %v4268, %v4267
        %v4270 = vextract.low.u32 %v4269
        %v4271 = vextract.high.u32 %v4269
        %v4272 = vmul.u32.u64.compose %v4268, %v4263
        %v4273 = vextract.low.u32 %v4272
        %v4274 = vextract.high.u32 %v4272
        %v4275 = vmul.u32 %v4268, %v4259
        %v4276 = vadd.s32 %v4271, %v4273
        %vm4277 = vc.u32 %v4271, %v4273
        %v4278 = vadd.s32 %v4274, 1
        %v4279 = vsel %vm4277, %v4278, %v4274
        %v4280 = vadd.s32 %v4275, %v4279
        %v4281 = vadd.s32 %v4280, 536870912
        %v4282 = vshrl.u32 %v4281, 30
        %v4283 = vshll.u32 %v4282, 30
        %v4284 = vsub.s32 %v4280, %v4283
        %vm4285 = vcmp.lt.s32.totalorder %v4284, 0
        %v4286 = vsub.s32 0, %v4284
        %v4287 = vsel %vm4285, %v4286, %v4284
        %v4288 = vclz %v4287
        %v4289 = vsub.s32 %v4288, 2
        %vm4290 = vcmp.gt.s32.totalorder 0, %v4289
        %v4291 = vsel %vm4290, 0, %v4289
        %v4292 = vsub.s32 32, %v4291
        %v4293 = vshll.u32 %v4284, %v4291
        %v4294 = vshrl.u32 %v4276, %v4292
        %v4295 = vor.u32 %v4293, %v4294
        %v4296 = vsub.s32 4294967266, %v4291
        %v4297 = vadd.s32 %v4296, 127
        %v4298 = vshll.u32 %v4297, 23
        %v4299 = vor.u32 4788187, %v4298
        %v4300 = vand.u32 2147483647, %v4299
        %v4302 = vcvt.s32.f32 %v4295
        %v4303 = vmul.f32 %v4302, %v4300
        %v4304 = vxor.u32 %v4303, 2147483648
        %v4305 = vsel %vm4222, %v4304, %v4303
        %v4306 = vsub.s32 4, %v4282
        %v4307 = vsel %vm4222, %v4306, %v4282
        %v4308 = vsel %vm4221, %v4216, %v4305
        %v4309 = vsel %vm4221, 0, %v4307
        %v4310 = vcosq.f32.pop %v4308
        %v4311 = vsinq.f32.pop %v4308
        %vm4312 = vweird.f32 %v4216
        %v4313 = vadd.s32 %v4309, 3
        %v4314 = vand.u32 %v4313, 3
        %vm4315 = vcmp.lt.s32.totalorder %v4314, 2
        %vm4316 = vcmp.eq.s32.totalorder %v4314, 0
        %v4317 = vxor.u32 %v4311, 2147483648
        %v4318 = vsel %vm4316, %v4310, %v4317
        %vm4319 = vcmp.eq.s32.totalorder %v4314, 2
        %v4320 = vxor.u32 %v4310, 2147483648
        %v4321 = vsel %vm4319, %v4320, %v4311
        %v4322 = vsel %vm4315, %v4318, %v4321
        %v4323 = vsel %vm4312, nan, %v4322
        %v4324 = vand.u32 2147483647, %v4218
        %vm4325 = vcmp.le.f32.partialorder %v4324, 0.7853982
        %vm4326 = vcmp.lt.s32.totalorder %v4218, 0
        %v4327 = vand.u32 %v4218, 2139095040
        %v4328 = vshrl.u32 %v4327, 23
        %v4329 = vsub.s32 %v4328, 127
        %v4330 = vand.u32 2147483647, %v4218
        %v4331 = vand.u32 %v4330, 8388607
        %v4332 = vor.u32 %v4331, 8388608
        %v4333 = vsub.s32 0, %v4332
        %v4334 = vadd.s32 %v4329, 1
        %vm4335 = vcmp.gt.s32.totalorder %v4334, 0
        %v4336 = vsel %vm4335, %v4334, 0
        %v4337 = vshrl.u32 %v4336, 5
        %v4338 = vand.u32 %v4336, 31
        %v4339 = vsub.s32 32, %v4338
        %v4340 = vshrl.u32 683565275, %v4339
        %v4341 = vshll.u32 683565275, %v4338
        %v4342 = vshrl.u32 2475754826, %v4339
        %v4343 = vor.u32 %v4341, %v4342
        %v4344 = vshll.u32 2475754826, %v4338
        %v4345 = vshrl.u32 2131351028, %v4339
        %v4346 = vor.u32 %v4344, %v4345
        %v4347 = vshll.u32 2131351028, %v4338
        %v4348 = vshrl.u32 2102212464, %v4339
        %v4349 = vor.u32 %v4347, %v4348
        %v4350 = vshll.u32 2102212464, %v4338
        %v4351 = vshrl.u32 920167782, %v4339
        %v4352 = vor.u32 %v4350, %v4351
        %v4353 = vshll.u32 920167782, %v4338
        %v4354 = vshrl.u32 1326507024, %v4339
        %v4355 = vor.u32 %v4353, %v4354
        %vm4356 = vcmp.lt.s32.totalorder %v4337, 1
        %vm4357 = vcmp.lt.s32.totalorder %v4337, 2
        %vm4358 = vcmp.lt.s32.totalorder %v4337, 3
        %vm4359 = vcmp.lt.s32.totalorder %v4337, 4
        %v4360 = vsel %vm4356, %v4340, %v4343
        %v4361 = vsel %vm4359, %v4349, 2102212464
        %v4362 = vsel %vm4358, %v4346, %v4361
        %v4363 = vsel %vm4357, %v4360, %v4362
        %v4364 = vsel %vm4356, %v4343, %v4346
        %v4365 = vsel %vm4359, %v4352, 920167782
        %v4366 = vsel %vm4358, %v4349, %v4365
        %v4367 = vsel %vm4357, %v4364, %v4366
        %v4368 = vsel %vm4356, %v4346, %v4349
        %v4369 = vsel %vm4359, %v4355, 1326507024
        %v4370 = vsel %vm4358, %v4352, %v4369
        %v4371 = vsel %vm4357, %v4368, %v4370
        %v4372 = vshll.u32 %v4332, 8
        %v4373 = vmul.u32.u64.compose %v4372, %v4371
        %v4374 = vextract.low.u32 %v4373
        %v4375 = vextract.high.u32 %v4373
        %v4376 = vmul.u32.u64.compose %v4372, %v4367
        %v4377 = vextract.low.u32 %v4376
        %v4378 = vextract.high.u32 %v4376
        %v4379 = vmul.u32 %v4372, %v4363
        %v4380 = vadd.s32 %v4375, %v4377
        %vm4381 = vc.u32 %v4375, %v4377
        %v4382 = vadd.s32 %v4378, 1
        %v4383 = vsel %vm4381, %v4382, %v4378
        %v4384 = vadd.s32 %v4379, %v4383
        %v4385 = vadd.s32 %v4384, 536870912
        %v4386 = vshrl.u32 %v4385, 30
        %v4387 = vshll.u32 %v4386, 30
        %v4388 = vsub.s32 %v4384, %v4387
        %vm4389 = vcmp.lt.s32.totalorder %v4388, 0
        %v4390 = vsub.s32 0, %v4388
        %v4391 = vsel %vm4389, %v4390, %v4388
        %v4392 = vclz %v4391
        %v4393 = vsub.s32 %v4392, 2
        %vm4394 = vcmp.gt.s32.totalorder 0, %v4393
        %v4395 = vsel %vm4394, 0, %v4393
        %v4396 = vsub.s32 32, %v4395
        %v4397 = vshll.u32 %v4388, %v4395
        %v4398 = vshrl.u32 %v4380, %v4396
        %v4399 = vor.u32 %v4397, %v4398
        %v4400 = vsub.s32 4294967266, %v4395
        %v4401 = vadd.s32 %v4400, 127
        %v4402 = vshll.u32 %v4401, 23
        %v4403 = vor.u32 4788187, %v4402
        %v4404 = vand.u32 2147483647, %v4403
        %v4406 = vcvt.s32.f32 %v4399
        %v4407 = vmul.f32 %v4406, %v4404
        %v4408 = vxor.u32 %v4407, 2147483648
        %v4409 = vsel %vm4326, %v4408, %v4407
        %v4410 = vsub.s32 4, %v4386
        %v4411 = vsel %vm4326, %v4410, %v4386
        %v4412 = vsel %vm4325, %v4218, %v4409
        %v4413 = vsel %vm4325, 0, %v4411
        %v4414 = vcosq.f32.pop %v4412
        %v4415 = vsinq.f32.pop %v4412
        %vm4416 = vweird.f32 %v4218
        %v4417 = vadd.s32 %v4413, 3
        %v4418 = vand.u32 %v4417, 3
        %vm4419 = vcmp.lt.s32.totalorder %v4418, 2
        %vm4420 = vcmp.eq.s32.totalorder %v4418, 0
        %v4421 = vxor.u32 %v4415, 2147483648
        %v4422 = vsel %vm4420, %v4414, %v4421
        %vm4423 = vcmp.eq.s32.totalorder %v4418, 2
        %v4424 = vxor.u32 %v4414, 2147483648
        %v4425 = vsel %vm4423, %v4424, %v4415
        %v4426 = vsel %vm4419, %v4422, %v4425
        %v4427 = vsel %vm4416, nan, %v4426
        %v4428 = vmul.f32 %v4323, 0.5
        %v4429 = vmul.f32 %v4427, 0.5
        %v4432 = vcombine.low %v4428, %v4429
        %4434 = vst [vmem:[%s681] sm:$0x77] %v4432
        %s4435 = sand.u32 %s376, 1
        %s4436 = scalar_lea.sflag [#allocation5], %s4435
        %s4437 = sand.u32 %s376, 1
        %s4438 = smul.addr %s4437, 2
        %s4439 = scalar_lea.vmem [#allocation4], %s4438
        %s4440 = smul.u32 2, %s37
        %p4441 = scmp.lt.s32.totalorder %s36, 1
        %s4442 = scalar_select %p4441, %s36, 1
        %p4443 = scmp.lt.s32.totalorder %s4440, 3
        %s4444 = scalar_select %p4443, %s4440, 3
        %s4445 = smul.addr %s4442, 4
        %s4446 = sadd.s32 %s4444, %s4445
        %s4447 = smul.addr %s4446, 4
        %s4448 = scalar_lea.vmem %s15, %s4447
        // Predicated region
        $region115: #{tpu_custom_call.1} parent=109 // pred_check
          %p4449 = pneg %p386
        $region116: #{tpu_custom_call.1} parent=109 // pred_check_branch
          %4451 = sbr.rel (%p4449) target = $region118
        $region117: #{tpu_custom_call.1} parent=109 // pred_region
          %s4452 = smul.u32 2, %s37
          %s4454 = ssub.s32 32, 32
          %4455 = vsyncadd %s4436, %s4454
          %s4456 = smul.addr %s36, 4
          %s4457 = sadd.s32 %s4452, %s4456
          %s4458 = smul.addr %s4457, 16
          %s4459 = scalar_lea.hbm %s14, %s4458
          %s4461 = sshll.u32 %s4439, 4
          %s4462 = int_to_ptr.vmem [resolvable:$true] %s4461
          %4464 = dma.vmem_to_hbm [thread:$0]  %s4462, 32, %s4459, %s4436
        $region118: #{tpu_custom_call.1} parent=109 // pred_fallthru
          _
        // Predicated region
        $region119: #{tpu_custom_call.1} parent=109 // pred_check
          %p4465 = pneg %p414
        $region120: #{tpu_custom_call.1} parent=109 // pred_check_branch
          %4467 = sbr.rel (%p4465) target = $region122
        $region121: #{tpu_custom_call.1} parent=109 // pred_region
          %s4468 = smul.u32 2, %s37
        $region122: #{tpu_custom_call.1} parent=109 // pred_fallthru
          _
      $region110: #{tpu_custom_call.1} parent=5 // pred_fallthru
        _
      %p4469 = scmp.le.s32.totalorder 2, %s27
      // Predicated region
      $region123: #{tpu_custom_call.1} parent=5 // pred_check
        %p4470 = pneg %p4469
      $region124: #{tpu_custom_call.1} parent=5 // pred_check_branch
        %4472 = sbr.rel (%p4470) target = $region126
      $region125: #{tpu_custom_call.1} parent=5 // pred_region
        %s4473 = ssub.s32 %s27, 2
        // Predicated region
        $region127: #{tpu_custom_call.1} parent=125 // pred_check
          %p4474 = pneg %p392
        $region128: #{tpu_custom_call.1} parent=125 // pred_check_branch
          %4476 = sbr.rel (%p4474) target = $region130
        $region129: #{tpu_custom_call.1} parent=125 // pred_region
          %s4477 = sand.u32 %s377, 1
          %s4478 = scalar_lea.sflag [#allocation5], %s4477
          %s4479 = sand.u32 %s377, 1
          %s4480 = smul.addr %s4479, 2
          %s4481 = scalar_lea.vmem [#allocation4], %s4480
          %4482 = dma.done %s4478, 32
        $region130: #{tpu_custom_call.1} parent=125 // pred_fallthru
          _
        // Predicated region
        $region131: #{tpu_custom_call.1} parent=125 // pred_check
          %p4483 = pneg %p420
        $region132: #{tpu_custom_call.1} parent=125 // pred_check_branch
          %4485 = sbr.rel (%p4483) target = $region134
        $region133: #{tpu_custom_call.1} parent=125 // pred_region
          %s4486 = smul.u32 2, %s39
          %p4487 = scmp.lt.s32.totalorder %s38, 1
          %s4488 = scalar_select %p4487, %s38, 1
          %p4489 = scmp.lt.s32.totalorder %s4486, 3
          %s4490 = scalar_select %p4489, %s4486, 3
          %s4491 = smul.addr %s4488, 4
          %s4492 = sadd.s32 %s4490, %s4491
          %s4493 = smul.addr %s4492, 4
          %s4494 = scalar_lea.vmem %s15, %s4493
        $region134: #{tpu_custom_call.1} parent=125 // pred_fallthru
          _
      $region126: #{tpu_custom_call.1} parent=5 // pred_fallthru
        _
    $region6: #{tpu_custom_call.1} parent=1 // loop_footer
      %s31 = sadd.s32 1, %s27
    $region7: #{tpu_custom_call.1} parent=1 // loop_footer_branch
      %26 = sbr.rel target = $region3
    $region8: #{tpu_custom_call.1} parent=1 // loop_exit
      _
    %4495 = vsyncpa [#allocation5], 1
    %s4496 = scalar_lea.sflag [#allocation5], 1
    %4497 = vsyncpa %s4496, 1

</llo_original>
